<compile_context>
chip_gen: v7x
topology: tpu7x:2x2x1
jax: 0.10.0
libtpu: 0.0.40
codegen_flags: <defaults>
</compile_context>

<pallas_src>
import functools

import jax
import jax.numpy as jnp
from jax import lax
from jax.experimental import pallas as pl
from jax.experimental.pallas import tpu as pltpu


PROB = 0.8  # BlockA keep_prob; eval path (multFlag=True): identity + 0.3 * prob * out


# ----------------------------------------------------------------------------
# helpers
# ----------------------------------------------------------------------------
def _shift_matrix(h, w, ox, dtype=jnp.float32):
    """(h*w, h*w) 0/1 matrix S with S[i, j] = 1 iff j == i + ox within the same image row."""
    n = h * w
    i = jnp.arange(n)
    row = i // w
    return ((row[:, None] == row[None, :]) &
            ((i[None, :] - i[:, None]) == ox)).astype(dtype)


# ----------------------------------------------------------------------------
# fused BlockA kernel (one grid step == one image, M = H*W rows)
# ----------------------------------------------------------------------------
def _block_a_kernel(x_ref, w1_ref, b1_ref, sm1_ref, sp1_ref,
                    wa_ref, ba_ref, wb_ref, bb_ref, wc_ref, bc_ref,
                    ws0_ref, ws1_ref, ws2_ref, bstem_ref,
                    o_ref, pad_a, pad_b, *, H, W):
    f32 = jnp.float32
    bf16 = jnp.bfloat16
    HW = H * W

    xb = x_ref[...].astype(bf16)                      # (HW, 384) bf16 for the MXU

    # ---- merged first 1x1 convs of branch0/1/2 (384 -> 96), BN scale folded, bias+ReLU (f32)
    h96 = jnp.dot(xb, w1_ref[...], preferred_element_type=f32) + b1_ref[...]
    h96 = jnp.maximum(h96, 0.0)                       # (HW, 96) f32

    sm1 = sm1_ref[...]                                # (HW, HW) f32, shift x -> x-1
    sp1 = sp1_ref[...]                                # (HW, HW) f32, shift x -> x+1

    def fill_pad(pad_ref, val):
        c = pad_ref.shape[-1]
        zrow = jnp.zeros((W, c), f32)
        pad_ref[pl.ds(0, W), :] = zrow                # padded row y = -1
        pad_ref[pl.ds(W + HW, W), :] = zrow           # padded row y = H
        pad_ref[pl.ds(W, HW), :] = val                # interior, y-major flattened

    def conv3x3(pad_ref, w_ref, b_ref):
        # pad_ref: ((H+2)*W, Cin) f32 H-padded activation; w_ref: (9, Cin, Cout) bf16
        cout = w_ref.shape[-1]
        taps = [pad_ref[pl.ds(ky * W, HW), :].astype(bf16) for ky in range(3)]
        acc = jnp.zeros((HW, cout), f32)
        for kx, shift in ((0, sm1), (1, None), (2, sp1)):
            m = jnp.zeros((HW, cout), f32)
            for ky in range(3):
                m = m + jnp.dot(taps[ky], w_ref[ky * 3 + kx],
                                preferred_element_type=f32)
            acc = acc + (m if shift is None else
                         jnp.dot(shift, m, preferred_element_type=f32))
        return jnp.maximum(acc + b_ref[...], 0.0)     # bias + ReLU, f32 epilogue

    # ---- branch0 conv2 (32->48) and branch1 conv2 (32->32): both read h96 through
    #      zero-embedded Cin rows, sharing a single padded buffer.
    fill_pad(pad_a, h96)
    t48 = conv3x3(pad_a, wa_ref, ba_ref)              # (HW, 48)  branch0 intermediate
    x1 = conv3x3(pad_a, wb_ref, bb_ref)               # (HW, 32)  branch1 output

    # ---- branch0 conv3 (48->64)
    fill_pad(pad_b, t48)
    x0 = conv3x3(pad_b, wc_ref, bc_ref)               # (HW, 64)  branch0 output

    # ---- stem 1x1 (concat(x0,x1,x2)=128 -> 384) + BN, no ReLU.  The concat is folded into
    #      three weight slabs; x2 = branch2 output lives in h96[:, 64:96] via zero-embedding.
    out = jnp.dot(x0.astype(bf16), ws0_ref[...], preferred_element_type=f32)
    out = out + jnp.dot(x1.astype(bf16), ws1_ref[...], preferred_element_type=f32)
    out = out + jnp.dot(h96.astype(bf16), ws2_ref[...], preferred_element_type=f32)
    out = out + bstem_ref[...]

    # ---- BlockA eval-mode residual + final ReLU (f32, lane-dense 384-wide store)
    o_ref[...] = jnp.maximum(x_ref[...] + (0.3 * PROB) * out, 0.0)


# ----------------------------------------------------------------------------
# wrapper: parameter folding (BN scale -> weights, bf16 cast, zero-embedding) + pallas_call
# ----------------------------------------------------------------------------
def _prepare_operands(p, h, w):
    f32 = jnp.float32
    bf16 = jnp.bfloat16

    def fold(wt, s):
        return (wt * s).astype(f32)

    # merged 1x1 convs: (384, 96) = [branch0 | branch1 | branch2]
    w1 = jnp.concatenate([fold(p["w_b0_0"], p["s_b0_0"]),
                          fold(p["w_b1_0"], p["s_b1_0"]),
                          fold(p["w_b2_0"], p["s_b2_0"])], axis=1).astype(bf16)
    b1 = jnp.concatenate([p["b_b0_0"], p["b_b1_0"], p["b_b2_0"]]).reshape(1, 96)

    sm1 = _shift_matrix(h, w, -1)
    sp1 = _shift_matrix(h, w, +1)

    # branch0 conv2: 32->48, its input channels are h96[:, 0:32]  -> zero-embed Cin rows
    wa = jnp.zeros((9, 96, 48), f32).at[:, 0:32, :].set(
        fold(p["w_b0_1"], p["s_b0_1"]).reshape(9, 32, 48)).astype(bf16)
    ba = p["b_b0_1"].reshape(1, 48)

    # branch1 conv2: 32->32, its input channels are h96[:, 32:64]
    wb = jnp.zeros((9, 96, 32), f32).at[:, 32:64, :].set(
        fold(p["w_b1_1"], p["s_b1_1"]).reshape(9, 32, 32)).astype(bf16)
    bb = p["b_b1_1"].reshape(1, 32)

    # branch0 conv3: 48->64
    wc = fold(p["w_b0_2"], p["s_b0_2"]).reshape(9, 48, 64).astype(bf16)
    bc = p["b_b0_2"].reshape(1, 64)

    # stem 1x1 (128->384), BN folded; split along the concat order [x0:64 | x1:32 | x2:32]
    wstem = fold(p["w_stem"], p["s_stem"])            # (128, 384)
    ws0 = wstem[0:64, :].astype(bf16)                 # consumes x0 (64 ch)
    ws1 = wstem[64:96, :].astype(bf16)                # consumes x1 (32 ch)
    ws2 = jnp.zeros((96, 384), f32).at[64:96, :].set(
        wstem[96:128, :]).astype(bf16)                # consumes x2 = h96[:, 64:96]
    bstem = p["b_stem"].reshape(1, 384)

    return [w1, b1, sm1, sp1, wa, ba, wb, bb, wc, bc, ws0, ws1, ws2, bstem]


def _full_spec(a):
    zeros = (0,) * a.ndim
    return pl.BlockSpec(a.shape, lambda i: zeros)


def block_a_forward(x_nhwc, params):
    """Eval-mode BlockA forward.  x_nhwc: (N, H, W, 384) float32 -> (N, H, W, 384) float32."""
    n, h, w, cin = x_nhwc.shape
    assert cin == 384, "BlockA expects 384 input channels"
    # keeps every in-kernel row offset sublane (8)-aligned
    assert w % 8 == 0 and (h * w) % 8 == 0
    hw = h * w

    operands = _prepare_operands(params, h, w)
    x2d = x_nhwc.reshape(n * hw, cin)

    in_specs = [pl.BlockSpec((hw, cin), lambda i: (i, 0))] + [_full_spec(a) for a in operands]

    # advisory cost estimate (MXU macs x2; shift matmuls included)
    macs_per_row = (384 * 96
                    + 9 * 96 * 48 + 2 * hw * 48
                    + 9 * 96 * 32 + 2 * hw * 32
                    + 9 * 48 * 64 + 2 * hw * 64
                    + 64 * 384 + 32 * 384 + 96 * 384)
    flops = 2 * hw * macs_per_row * n
    bytes_accessed = (x2d.size * 4 + n * hw * 384 * 4
                      + sum(int(a.size) * a.dtype.itemsize for a in operands))

    out2d = pl.pallas_call(
        functools.partial(_block_a_kernel, H=h, W=w),
        out_shape=jax.ShapeDtypeStruct((n * hw, 384), jnp.float32),
        grid_spec=pltpu.PrefetchScalarGridSpec(
            num_scalar_prefetch=0,
            grid=(n,),
            in_specs=in_specs,
            out_specs=pl.BlockSpec((hw, 384), lambda i: (i, 0)),
            scratch_shapes=[
                pltpu.VMEM(((h + 2) * w, 96), jnp.float32),   # H-padded h96 (shared by 2 convs)
                pltpu.VMEM(((h + 2) * w, 48), jnp.float32),   # H-padded branch0 intermediate
            ],
        ),
        compiler_params=pltpu.CompilerParams(dimension_semantics=("parallel",)),
        cost_estimate=pl.CostEstimate(flops=flops, transcendentals=0,
                                      bytes_accessed=bytes_accessed),
    )(x2d, *operands)
    return out2d.reshape(n, h, w, 384)


# ----------------------------------------------------------------------------
# pure-JAX reference (same bf16 operand quantization, f32 accumulation)
# ----------------------------------------------------------------------------
def block_a_ref(x, p):
    bf16 = jnp.bfloat16

    def conv(x_, w4, s, b, relu, pad):
        wf = (w4 * s).astype(bf16)
        y = lax.conv_general_dilated(
            x_.astype(bf16), wf, window_strides=(1, 1),
            padding=[(pad, pad), (pad, pad)],
            dimension_numbers=("NHWC", "HWIO", "NHWC"),
            preferred_element_type=jnp.float32)
        y = y + b
        return jnp.maximum(y, 0.0) if relu else y

    def c1(x_, w, s, b, relu=True):
        return conv(x_, w.reshape(1, 1, *w.shape), s, b, relu, 0)

    def c3(x_, w, s, b):
        return conv(x_, w, s, b, True, 1)

    t = c1(x, p["w_b0_0"], p["s_b0_0"], p["b_b0_0"])
    t = c3(t, p["w_b0_1"], p["s_b0_1"], p["b_b0_1"])
    x0 = c3(t, p["w_b0_2"], p["s_b0_2"], p["b_b0_2"])
    t = c1(x, p["w_b1_0"], p["s_b1_0"], p["b_b1_0"])
    x1 = c3(t, p["w_b1_1"], p["s_b1_1"], p["b_b1_1"])
    x2 = c1(x, p["w_b2_0"], p["s_b2_0"], p["b_b2_0"])
    cat = jnp.concatenate([x0, x1, x2], axis=-1)
    out = c1(cat, p["w_stem"], p["s_stem"], p["b_stem"], relu=False)
    return jnp.maximum(x + 0.3 * PROB * out, 0.0)


# ----------------------------------------------------------------------------
# deterministic synthetic parameters (eval-mode BN folded to scale/bias)
# ----------------------------------------------------------------------------
def init_params(key):
    keys = iter(jax.random.split(key, 64))
    eps = 1e-10  # matches APolynet's bn_eps

    def conv_w(shape):
        fan_in = 1
        for d in shape[:-1]:
            fan_in *= d
        return jax.random.normal(next(keys), shape, jnp.float32) / jnp.sqrt(
            jnp.float32(fan_in))

    def bn(c):
        gamma = 1.0 + 0.1 * jax.random.normal(next(keys), (c,), jnp.float32)
        beta = 0.1 * jax.random.normal(next(keys), (c,), jnp.float32)
        mean = 0.1 * jax.random.normal(next(keys), (c,), jnp.float32)
        var = jnp.abs(jax.random.normal(next(keys), (c,), jnp.float32)) + 0.5
        scale = gamma / jnp.sqrt(var + eps)
        bias = beta - mean * scale
        return scale, bias

    p = {}
    # branch0: 1x1(384->32) -> 3x3(32->48) -> 3x3(48->64)
    p["w_b0_0"] = conv_w((384, 32));      p["s_b0_0"], p["b_b0_0"] = bn(32)
    p["w_b0_1"] = conv_w((3, 3, 32, 48)); p["s_b0_1"], p["b_b0_1"] = bn(48)
    p["w_b0_2"] = conv_w((3, 3, 48, 64)); p["s_b0_2"], p["b_b0_2"] = bn(64)
    # branch1: 1x1(384->32) -> 3x3(32->32)
    p["w_b1_0"] = conv_w((384, 32));      p["s_b1_0"], p["b_b1_0"] = bn(32)
    p["w_b1_1"] = conv_w((3, 3, 32, 32)); p["s_b1_1"], p["b_b1_1"] = bn(32)
    # branch2: 1x1(384->32)
    p["w_b2_0"] = conv_w((384, 32));      p["s_b2_0"], p["b_b2_0"] = bn(32)
    # stem: 1x1(128->384) + BN, no ReLU
    p["w_stem"] = conv_w((128, 384));     p["s_stem"], p["b_stem"] = bn(384)
    return p


# ----------------------------------------------------------------------------
if __name__ == "__main__":
    key = jax.random.PRNGKey(0)
    k_x, k_p = jax.random.split(key)

    # Small shapes consistent with the module: BlockA requires 384 input channels.
    N, C, H, W = 2, 384, 8, 8
    x_nchw = jax.random.normal(k_x, (N, C, H, W), jnp.float32)
    x_nhwc = jnp.transpose(x_nchw, (0, 2, 3, 1))      # NHWC for the kernel

    params = init_params(k_p)

    out = block_a_forward(x_nhwc, params)             # (N, H, W, 384)
    out = jax.block_until_ready(out)
    assert out.shape == (N, H, W, 384)

    ref = jax.block_until_ready(block_a_ref(x_nhwc, params))
    max_err = float(jnp.max(jnp.abs(out - ref)))
    assert jnp.allclose(out, ref, rtol=1e-2, atol=1e-2), max_err

    print("KERNEL_OK")
</pallas_src>

<mosaic_0001>
module attributes {stable_mosaic.version = 11 : i64} {
  func.func @_block_a_kernel(%arg0: i32, %arg1: memref<64x384xf32, #tpu.memory_space<vmem>>, %arg2: memref<384x96xbf16, #tpu.memory_space<vmem>>, %arg3: memref<1x96xf32, #tpu.memory_space<vmem>>, %arg4: memref<64x64xf32, #tpu.memory_space<vmem>>, %arg5: memref<64x64xf32, #tpu.memory_space<vmem>>, %arg6: memref<9x96x48xbf16, #tpu.memory_space<vmem>>, %arg7: memref<1x48xf32, #tpu.memory_space<vmem>>, %arg8: memref<9x96x32xbf16, #tpu.memory_space<vmem>>, %arg9: memref<1x32xf32, #tpu.memory_space<vmem>>, %arg10: memref<9x48x64xbf16, #tpu.memory_space<vmem>>, %arg11: memref<1x64xf32, #tpu.memory_space<vmem>>, %arg12: memref<64x384xbf16, #tpu.memory_space<vmem>>, %arg13: memref<32x384xbf16, #tpu.memory_space<vmem>>, %arg14: memref<96x384xbf16, #tpu.memory_space<vmem>>, %arg15: memref<1x384xf32, #tpu.memory_space<vmem>>, %arg16: memref<64x384xf32, #tpu.memory_space<vmem>>, %arg17: memref<80x96xf32, #tpu.memory_space<vmem>>, %arg18: memref<80x48xf32, #tpu.memory_space<vmem>>) attributes {dimension_semantics = [#tpu.dimension_semantics<parallel>], iteration_bounds = array<i64: 2>, scalar_prefetch = 0 : i64, scratch_operands = 2 : i64, tpu.core_type = #tpu.core_type<tc>, window_params = [{transform_indices = @transform_0, window_bounds = array<i64: 64, 384>}, {pipeline_mode = #tpu.pipeline_mode<synchronous>, transform_indices = @transform_1, window_bounds = array<i64: 384, 96>}, {pipeline_mode = #tpu.pipeline_mode<synchronous>, transform_indices = @transform_2, window_bounds = array<i64: 1, 96>}, {pipeline_mode = #tpu.pipeline_mode<synchronous>, transform_indices = @transform_3, window_bounds = array<i64: 64, 64>}, {pipeline_mode = #tpu.pipeline_mode<synchronous>, transform_indices = @transform_4, window_bounds = array<i64: 64, 64>}, {pipeline_mode = #tpu.pipeline_mode<synchronous>, transform_indices = @transform_5, window_bounds = array<i64: 9, 96, 48>}, {pipeline_mode = #tpu.pipeline_mode<synchronous>, transform_indices = @transform_6, window_bounds = array<i64: 1, 48>}, {pipeline_mode = #tpu.pipeline_mode<synchronous>, transform_indices = @transform_7, window_bounds = array<i64: 9, 96, 32>}, {pipeline_mode = #tpu.pipeline_mode<synchronous>, transform_indices = @transform_8, window_bounds = array<i64: 1, 32>}, {pipeline_mode = #tpu.pipeline_mode<synchronous>, transform_indices = @transform_9, window_bounds = array<i64: 9, 48, 64>}, {pipeline_mode = #tpu.pipeline_mode<synchronous>, transform_indices = @transform_10, window_bounds = array<i64: 1, 64>}, {pipeline_mode = #tpu.pipeline_mode<synchronous>, transform_indices = @transform_11, window_bounds = array<i64: 64, 384>}, {pipeline_mode = #tpu.pipeline_mode<synchronous>, transform_indices = @transform_12, window_bounds = array<i64: 32, 384>}, {pipeline_mode = #tpu.pipeline_mode<synchronous>, transform_indices = @transform_13, window_bounds = array<i64: 96, 384>}, {pipeline_mode = #tpu.pipeline_mode<synchronous>, transform_indices = @transform_14, window_bounds = array<i64: 1, 384>}, {transform_indices = @transform_15, window_bounds = array<i64: 64, 384>}]} {
    %c0 = arith.constant 0 : index
    %c0_0 = arith.constant 0 : index
    %0 = vector.load %arg1[%c0, %c0_0] : memref<64x384xf32, #tpu.memory_space<vmem>>, vector<64x384xf32>
    %1 = arith.truncf %0 : vector<64x384xf32> to vector<64x384xbf16>
    %c0_1 = arith.constant 0 : index
    %c0_2 = arith.constant 0 : index
    %2 = vector.load %arg2[%c0_1, %c0_2] : memref<384x96xbf16, #tpu.memory_space<vmem>>, vector<384x96xbf16>
    %cst = arith.constant dense<0.000000e+00> : vector<64x96xf32>
    %3 = tpu.matmul %1, %2, %cst {dimension_numbers = #tpu.dot_dimension_numbers<[1], [0], [0], [1], [0, 0, 1, 1], [], []>} : vector<64x384xbf16>, vector<384x96xbf16>, vector<64x96xf32> -> vector<64x96xf32>
    %c0_3 = arith.constant 0 : index
    %c0_4 = arith.constant 0 : index
    %4 = vector.load %arg3[%c0_3, %c0_4] : memref<1x96xf32, #tpu.memory_space<vmem>>, vector<1x96xf32>
    %5 = vector.broadcast %4 : vector<1x96xf32> to vector<64x96xf32>
    %6 = arith.addf %3, %5 : vector<64x96xf32>
    %cst_5 = arith.constant 0.000000e+00 : f32
    %7 = vector.broadcast %cst_5 : f32 to vector<64x96xf32>
    %8 = arith.maximumf %6, %7 : vector<64x96xf32>
    %c0_6 = arith.constant 0 : index
    %c0_7 = arith.constant 0 : index
    %9 = vector.load %arg4[%c0_6, %c0_7] : memref<64x64xf32, #tpu.memory_space<vmem>>, vector<64x64xf32>
    %c0_8 = arith.constant 0 : index
    %c0_9 = arith.constant 0 : index
    %10 = vector.load %arg5[%c0_8, %c0_9] : memref<64x64xf32, #tpu.memory_space<vmem>>, vector<64x64xf32>
    %cst_10 = arith.constant 0.000000e+00 : f32
    %11 = vector.broadcast %cst_10 : f32 to vector<8x96xf32>
    %c0_11 = arith.constant 0 : index
    %c0_12 = arith.constant 0 : index
    %12 = vector.load %arg17[%c0_11, %c0_12] : memref<80x96xf32, #tpu.memory_space<vmem>>, vector<8x96xf32>
    tpu.vector_store %arg17[%c0_11, %c0_12], %11 {strides = array<i32>} : memref<80x96xf32, #tpu.memory_space<vmem>>, vector<8x96xf32>,
    %c72 = arith.constant 72 : index
    %c0_13 = arith.constant 0 : index
    %13 = vector.load %arg17[%c72, %c0_13] : memref<80x96xf32, #tpu.memory_space<vmem>>, vector<8x96xf32>
    tpu.vector_store %arg17[%c72, %c0_13], %11 {strides = array<i32>} : memref<80x96xf32, #tpu.memory_space<vmem>>, vector<8x96xf32>,
    %c8 = arith.constant 8 : index
    %c0_14 = arith.constant 0 : index
    %14 = vector.load %arg17[%c8, %c0_14] : memref<80x96xf32, #tpu.memory_space<vmem>>, vector<64x96xf32>
    tpu.vector_store %arg17[%c8, %c0_14], %8 {strides = array<i32>} : memref<80x96xf32, #tpu.memory_space<vmem>>, vector<64x96xf32>,
    %c0_15 = arith.constant 0 : index
    %c0_16 = arith.constant 0 : index
    %15 = vector.load %arg17[%c0_15, %c0_16] : memref<80x96xf32, #tpu.memory_space<vmem>>, vector<64x96xf32>
    %16 = arith.truncf %15 : vector<64x96xf32> to vector<64x96xbf16>
    %c8_17 = arith.constant 8 : index
    %c0_18 = arith.constant 0 : index
    %17 = vector.load %arg17[%c8_17, %c0_18] : memref<80x96xf32, #tpu.memory_space<vmem>>, vector<64x96xf32>
    %18 = arith.truncf %17 : vector<64x96xf32> to vector<64x96xbf16>
    %c16 = arith.constant 16 : index
    %c0_19 = arith.constant 0 : index
    %19 = vector.load %arg17[%c16, %c0_19] : memref<80x96xf32, #tpu.memory_space<vmem>>, vector<64x96xf32>
    %20 = arith.truncf %19 : vector<64x96xf32> to vector<64x96xbf16>
    %cst_20 = arith.constant 0.000000e+00 : f32
    %21 = vector.broadcast %cst_20 : f32 to vector<64x48xf32>
    %cst_21 = arith.constant 0.000000e+00 : f32
    %22 = vector.broadcast %cst_21 : f32 to vector<64x48xf32>
    %c0_22 = arith.constant 0 : index
    %c0_23 = arith.constant 0 : index
    %c0_24 = arith.constant 0 : index
    %23 = vector.load %arg6[%c0_22, %c0_23, %c0_24] : memref<9x96x48xbf16, #tpu.memory_space<vmem>>, vector<1x96x48xbf16>
    %24 = vector.shape_cast %23 : vector<1x96x48xbf16> to vector<96x48xbf16>
    %cst_25 = arith.constant dense<0.000000e+00> : vector<64x48xf32>
    %25 = tpu.matmul %16, %24, %cst_25 {dimension_numbers = #tpu.dot_dimension_numbers<[1], [0], [0], [1], [0, 0, 1, 1], [], []>} : vector<64x96xbf16>, vector<96x48xbf16>, vector<64x48xf32> -> vector<64x48xf32>
    %26 = arith.addf %22, %25 : vector<64x48xf32>
    %c3 = arith.constant 3 : index
    %c0_26 = arith.constant 0 : index
    %c0_27 = arith.constant 0 : index
    %27 = vector.load %arg6[%c3, %c0_26, %c0_27] : memref<9x96x48xbf16, #tpu.memory_space<vmem>>, vector<1x96x48xbf16>
    %28 = vector.shape_cast %27 : vector<1x96x48xbf16> to vector<96x48xbf16>
    %cst_28 = arith.constant dense<0.000000e+00> : vector<64x48xf32>
    %29 = tpu.matmul %18, %28, %cst_28 {dimension_numbers = #tpu.dot_dimension_numbers<[1], [0], [0], [1], [0, 0, 1, 1], [], []>} : vector<64x96xbf16>, vector<96x48xbf16>, vector<64x48xf32> -> vector<64x48xf32>
    %30 = arith.addf %26, %29 : vector<64x48xf32>
    %c6 = arith.constant 6 : index
    %c0_29 = arith.constant 0 : index
    %c0_30 = arith.constant 0 : index
    %31 = vector.load %arg6[%c6, %c0_29, %c0_30] : memref<9x96x48xbf16, #tpu.memory_space<vmem>>, vector<1x96x48xbf16>
    %32 = vector.shape_cast %31 : vector<1x96x48xbf16> to vector<96x48xbf16>
    %cst_31 = arith.constant dense<0.000000e+00> : vector<64x48xf32>
    %33 = tpu.matmul %20, %32, %cst_31 {dimension_numbers = #tpu.dot_dimension_numbers<[1], [0], [0], [1], [0, 0, 1, 1], [], []>} : vector<64x96xbf16>, vector<96x48xbf16>, vector<64x48xf32> -> vector<64x48xf32>
    %34 = arith.addf %30, %33 : vector<64x48xf32>
    %cst_32 = arith.constant dense<0.000000e+00> : vector<64x48xf32>
    %35 = tpu.matmul %9, %34, %cst_32 {dimension_numbers = #tpu.dot_dimension_numbers<[1], [0], [0], [1], [0, 0, 1, 1], [], []>} : vector<64x64xf32>, vector<64x48xf32>, vector<64x48xf32> -> vector<64x48xf32>
    %36 = arith.addf %21, %35 : vector<64x48xf32>
    %cst_33 = arith.constant 0.000000e+00 : f32
    %37 = vector.broadcast %cst_33 : f32 to vector<64x48xf32>
    %c1 = arith.constant 1 : index
    %c0_34 = arith.constant 0 : index
    %c0_35 = arith.constant 0 : index
    %38 = vector.load %arg6[%c1, %c0_34, %c0_35] : memref<9x96x48xbf16, #tpu.memory_space<vmem>>, vector<1x96x48xbf16>
    %39 = vector.shape_cast %38 : vector<1x96x48xbf16> to vector<96x48xbf16>
    %cst_36 = arith.constant dense<0.000000e+00> : vector<64x48xf32>
    %40 = tpu.matmul %16, %39, %cst_36 {dimension_numbers = #tpu.dot_dimension_numbers<[1], [0], [0], [1], [0, 0, 1, 1], [], []>} : vector<64x96xbf16>, vector<96x48xbf16>, vector<64x48xf32> -> vector<64x48xf32>
    %41 = arith.addf %37, %40 : vector<64x48xf32>
    %c4 = arith.constant 4 : index
    %c0_37 = arith.constant 0 : index
    %c0_38 = arith.constant 0 : index
    %42 = vector.load %arg6[%c4, %c0_37, %c0_38] : memref<9x96x48xbf16, #tpu.memory_space<vmem>>, vector<1x96x48xbf16>
    %43 = vector.shape_cast %42 : vector<1x96x48xbf16> to vector<96x48xbf16>
    %cst_39 = arith.constant dense<0.000000e+00> : vector<64x48xf32>
    %44 = tpu.matmul %18, %43, %cst_39 {dimension_numbers = #tpu.dot_dimension_numbers<[1], [0], [0], [1], [0, 0, 1, 1], [], []>} : vector<64x96xbf16>, vector<96x48xbf16>, vector<64x48xf32> -> vector<64x48xf32>
    %45 = arith.addf %41, %44 : vector<64x48xf32>
    %c7 = arith.constant 7 : index
    %c0_40 = arith.constant 0 : index
    %c0_41 = arith.constant 0 : index
    %46 = vector.load %arg6[%c7, %c0_40, %c0_41] : memref<9x96x48xbf16, #tpu.memory_space<vmem>>, vector<1x96x48xbf16>
    %47 = vector.shape_cast %46 : vector<1x96x48xbf16> to vector<96x48xbf16>
    %cst_42 = arith.constant dense<0.000000e+00> : vector<64x48xf32>
    %48 = tpu.matmul %20, %47, %cst_42 {dimension_numbers = #tpu.dot_dimension_numbers<[1], [0], [0], [1], [0, 0, 1, 1], [], []>} : vector<64x96xbf16>, vector<96x48xbf16>, vector<64x48xf32> -> vector<64x48xf32>
    %49 = arith.addf %45, %48 : vector<64x48xf32>
    %50 = arith.addf %36, %49 : vector<64x48xf32>
    %cst_43 = arith.constant 0.000000e+00 : f32
    %51 = vector.broadcast %cst_43 : f32 to vector<64x48xf32>
    %c2 = arith.constant 2 : index
    %c0_44 = arith.constant 0 : index
    %c0_45 = arith.constant 0 : index
    %52 = vector.load %arg6[%c2, %c0_44, %c0_45] : memref<9x96x48xbf16, #tpu.memory_space<vmem>>, vector<1x96x48xbf16>
    %53 = vector.shape_cast %52 : vector<1x96x48xbf16> to vector<96x48xbf16>
    %cst_46 = arith.constant dense<0.000000e+00> : vector<64x48xf32>
    %54 = tpu.matmul %16, %53, %cst_46 {dimension_numbers = #tpu.dot_dimension_numbers<[1], [0], [0], [1], [0, 0, 1, 1], [], []>} : vector<64x96xbf16>, vector<96x48xbf16>, vector<64x48xf32> -> vector<64x48xf32>
    %55 = arith.addf %51, %54 : vector<64x48xf32>
    %c5 = arith.constant 5 : index
    %c0_47 = arith.constant 0 : index
    %c0_48 = arith.constant 0 : index
    %56 = vector.load %arg6[%c5, %c0_47, %c0_48] : memref<9x96x48xbf16, #tpu.memory_space<vmem>>, vector<1x96x48xbf16>
    %57 = vector.shape_cast %56 : vector<1x96x48xbf16> to vector<96x48xbf16>
    %cst_49 = arith.constant dense<0.000000e+00> : vector<64x48xf32>
    %58 = tpu.matmul %18, %57, %cst_49 {dimension_numbers = #tpu.dot_dimension_numbers<[1], [0], [0], [1], [0, 0, 1, 1], [], []>} : vector<64x96xbf16>, vector<96x48xbf16>, vector<64x48xf32> -> vector<64x48xf32>
    %59 = arith.addf %55, %58 : vector<64x48xf32>
    %c8_50 = arith.constant 8 : index
    %c0_51 = arith.constant 0 : index
    %c0_52 = arith.constant 0 : index
    %60 = vector.load %arg6[%c8_50, %c0_51, %c0_52] : memref<9x96x48xbf16, #tpu.memory_space<vmem>>, vector<1x96x48xbf16>
    %61 = vector.shape_cast %60 : vector<1x96x48xbf16> to vector<96x48xbf16>
    %cst_53 = arith.constant dense<0.000000e+00> : vector<64x48xf32>
    %62 = tpu.matmul %20, %61, %cst_53 {dimension_numbers = #tpu.dot_dimension_numbers<[1], [0], [0], [1], [0, 0, 1, 1], [], []>} : vector<64x96xbf16>, vector<96x48xbf16>, vector<64x48xf32> -> vector<64x48xf32>
    %63 = arith.addf %59, %62 : vector<64x48xf32>
    %cst_54 = arith.constant dense<0.000000e+00> : vector<64x48xf32>
    %64 = tpu.matmul %10, %63, %cst_54 {dimension_numbers = #tpu.dot_dimension_numbers<[1], [0], [0], [1], [0, 0, 1, 1], [], []>} : vector<64x64xf32>, vector<64x48xf32>, vector<64x48xf32> -> vector<64x48xf32>
    %65 = arith.addf %50, %64 : vector<64x48xf32>
    %c0_55 = arith.constant 0 : index
    %c0_56 = arith.constant 0 : index
    %66 = vector.load %arg7[%c0_55, %c0_56] : memref<1x48xf32, #tpu.memory_space<vmem>>, vector<1x48xf32>
    %67 = vector.broadcast %66 : vector<1x48xf32> to vector<64x48xf32>
    %68 = arith.addf %65, %67 : vector<64x48xf32>
    %cst_57 = arith.constant 0.000000e+00 : f32
    %69 = vector.broadcast %cst_57 : f32 to vector<64x48xf32>
    %70 = arith.maximumf %68, %69 : vector<64x48xf32>
    %c0_58 = arith.constant 0 : index
    %c0_59 = arith.constant 0 : index
    %71 = vector.load %arg17[%c0_58, %c0_59] : memref<80x96xf32, #tpu.memory_space<vmem>>, vector<64x96xf32>
    %72 = arith.truncf %71 : vector<64x96xf32> to vector<64x96xbf16>
    %c8_60 = arith.constant 8 : index
    %c0_61 = arith.constant 0 : index
    %73 = vector.load %arg17[%c8_60, %c0_61] : memref<80x96xf32, #tpu.memory_space<vmem>>, vector<64x96xf32>
    %74 = arith.truncf %73 : vector<64x96xf32> to vector<64x96xbf16>
    %c16_62 = arith.constant 16 : index
    %c0_63 = arith.constant 0 : index
    %75 = vector.load %arg17[%c16_62, %c0_63] : memref<80x96xf32, #tpu.memory_space<vmem>>, vector<64x96xf32>
    %76 = arith.truncf %75 : vector<64x96xf32> to vector<64x96xbf16>
    %cst_64 = arith.constant 0.000000e+00 : f32
    %77 = vector.broadcast %cst_64 : f32 to vector<64x32xf32>
    %cst_65 = arith.constant 0.000000e+00 : f32
    %78 = vector.broadcast %cst_65 : f32 to vector<64x32xf32>
    %c0_66 = arith.constant 0 : index
    %c0_67 = arith.constant 0 : index
    %c0_68 = arith.constant 0 : index
    %79 = vector.load %arg8[%c0_66, %c0_67, %c0_68] : memref<9x96x32xbf16, #tpu.memory_space<vmem>>, vector<1x96x32xbf16>
    %80 = vector.shape_cast %79 : vector<1x96x32xbf16> to vector<96x32xbf16>
    %cst_69 = arith.constant dense<0.000000e+00> : vector<64x32xf32>
    %81 = tpu.matmul %72, %80, %cst_69 {dimension_numbers = #tpu.dot_dimension_numbers<[1], [0], [0], [1], [0, 0, 1, 1], [], []>} : vector<64x96xbf16>, vector<96x32xbf16>, vector<64x32xf32> -> vector<64x32xf32>
    %82 = arith.addf %78, %81 : vector<64x32xf32>
    %c3_70 = arith.constant 3 : index
    %c0_71 = arith.constant 0 : index
    %c0_72 = arith.constant 0 : index
    %83 = vector.load %arg8[%c3_70, %c0_71, %c0_72] : memref<9x96x32xbf16, #tpu.memory_space<vmem>>, vector<1x96x32xbf16>
    %84 = vector.shape_cast %83 : vector<1x96x32xbf16> to vector<96x32xbf16>
    %cst_73 = arith.constant dense<0.000000e+00> : vector<64x32xf32>
    %85 = tpu.matmul %74, %84, %cst_73 {dimension_numbers = #tpu.dot_dimension_numbers<[1], [0], [0], [1], [0, 0, 1, 1], [], []>} : vector<64x96xbf16>, vector<96x32xbf16>, vector<64x32xf32> -> vector<64x32xf32>
    %86 = arith.addf %82, %85 : vector<64x32xf32>
    %c6_74 = arith.constant 6 : index
    %c0_75 = arith.constant 0 : index
    %c0_76 = arith.constant 0 : index
    %87 = vector.load %arg8[%c6_74, %c0_75, %c0_76] : memref<9x96x32xbf16, #tpu.memory_space<vmem>>, vector<1x96x32xbf16>
    %88 = vector.shape_cast %87 : vector<1x96x32xbf16> to vector<96x32xbf16>
    %cst_77 = arith.constant dense<0.000000e+00> : vector<64x32xf32>
    %89 = tpu.matmul %76, %88, %cst_77 {dimension_numbers = #tpu.dot_dimension_numbers<[1], [0], [0], [1], [0, 0, 1, 1], [], []>} : vector<64x96xbf16>, vector<96x32xbf16>, vector<64x32xf32> -> vector<64x32xf32>
    %90 = arith.addf %86, %89 : vector<64x32xf32>
    %cst_78 = arith.constant dense<0.000000e+00> : vector<64x32xf32>
    %91 = tpu.matmul %9, %90, %cst_78 {dimension_numbers = #tpu.dot_dimension_numbers<[1], [0], [0], [1], [0, 0, 1, 1], [], []>} : vector<64x64xf32>, vector<64x32xf32>, vector<64x32xf32> -> vector<64x32xf32>
    %92 = arith.addf %77, %91 : vector<64x32xf32>
    %cst_79 = arith.constant 0.000000e+00 : f32
    %93 = vector.broadcast %cst_79 : f32 to vector<64x32xf32>
    %c1_80 = arith.constant 1 : index
    %c0_81 = arith.constant 0 : index
    %c0_82 = arith.constant 0 : index
    %94 = vector.load %arg8[%c1_80, %c0_81, %c0_82] : memref<9x96x32xbf16, #tpu.memory_space<vmem>>, vector<1x96x32xbf16>
    %95 = vector.shape_cast %94 : vector<1x96x32xbf16> to vector<96x32xbf16>
    %cst_83 = arith.constant dense<0.000000e+00> : vector<64x32xf32>
    %96 = tpu.matmul %72, %95, %cst_83 {dimension_numbers = #tpu.dot_dimension_numbers<[1], [0], [0], [1], [0, 0, 1, 1], [], []>} : vector<64x96xbf16>, vector<96x32xbf16>, vector<64x32xf32> -> vector<64x32xf32>
    %97 = arith.addf %93, %96 : vector<64x32xf32>
    %c4_84 = arith.constant 4 : index
    %c0_85 = arith.constant 0 : index
    %c0_86 = arith.constant 0 : index
    %98 = vector.load %arg8[%c4_84, %c0_85, %c0_86] : memref<9x96x32xbf16, #tpu.memory_space<vmem>>, vector<1x96x32xbf16>
    %99 = vector.shape_cast %98 : vector<1x96x32xbf16> to vector<96x32xbf16>
    %cst_87 = arith.constant dense<0.000000e+00> : vector<64x32xf32>
    %100 = tpu.matmul %74, %99, %cst_87 {dimension_numbers = #tpu.dot_dimension_numbers<[1], [0], [0], [1], [0, 0, 1, 1], [], []>} : vector<64x96xbf16>, vector<96x32xbf16>, vector<64x32xf32> -> vector<64x32xf32>
    %101 = arith.addf %97, %100 : vector<64x32xf32>
    %c7_88 = arith.constant 7 : index
    %c0_89 = arith.constant 0 : index
    %c0_90 = arith.constant 0 : index
    %102 = vector.load %arg8[%c7_88, %c0_89, %c0_90] : memref<9x96x32xbf16, #tpu.memory_space<vmem>>, vector<1x96x32xbf16>
    %103 = vector.shape_cast %102 : vector<1x96x32xbf16> to vector<96x32xbf16>
    %cst_91 = arith.constant dense<0.000000e+00> : vector<64x32xf32>
    %104 = tpu.matmul %76, %103, %cst_91 {dimension_numbers = #tpu.dot_dimension_numbers<[1], [0], [0], [1], [0, 0, 1, 1], [], []>} : vector<64x96xbf16>, vector<96x32xbf16>, vector<64x32xf32> -> vector<64x32xf32>
    %105 = arith.addf %101, %104 : vector<64x32xf32>
    %106 = arith.addf %92, %105 : vector<64x32xf32>
    %cst_92 = arith.constant 0.000000e+00 : f32
    %107 = vector.broadcast %cst_92 : f32 to vector<64x32xf32>
    %c2_93 = arith.constant 2 : index
    %c0_94 = arith.constant 0 : index
    %c0_95 = arith.constant 0 : index
    %108 = vector.load %arg8[%c2_93, %c0_94, %c0_95] : memref<9x96x32xbf16, #tpu.memory_space<vmem>>, vector<1x96x32xbf16>
    %109 = vector.shape_cast %108 : vector<1x96x32xbf16> to vector<96x32xbf16>
    %cst_96 = arith.constant dense<0.000000e+00> : vector<64x32xf32>
    %110 = tpu.matmul %72, %109, %cst_96 {dimension_numbers = #tpu.dot_dimension_numbers<[1], [0], [0], [1], [0, 0, 1, 1], [], []>} : vector<64x96xbf16>, vector<96x32xbf16>, vector<64x32xf32> -> vector<64x32xf32>
    %111 = arith.addf %107, %110 : vector<64x32xf32>
    %c5_97 = arith.constant 5 : index
    %c0_98 = arith.constant 0 : index
    %c0_99 = arith.constant 0 : index
    %112 = vector.load %arg8[%c5_97, %c0_98, %c0_99] : memref<9x96x32xbf16, #tpu.memory_space<vmem>>, vector<1x96x32xbf16>
    %113 = vector.shape_cast %112 : vector<1x96x32xbf16> to vector<96x32xbf16>
    %cst_100 = arith.constant dense<0.000000e+00> : vector<64x32xf32>
    %114 = tpu.matmul %74, %113, %cst_100 {dimension_numbers = #tpu.dot_dimension_numbers<[1], [0], [0], [1], [0, 0, 1, 1], [], []>} : vector<64x96xbf16>, vector<96x32xbf16>, vector<64x32xf32> -> vector<64x32xf32>
    %115 = arith.addf %111, %114 : vector<64x32xf32>
    %c8_101 = arith.constant 8 : index
    %c0_102 = arith.constant 0 : index
    %c0_103 = arith.constant 0 : index
    %116 = vector.load %arg8[%c8_101, %c0_102, %c0_103] : memref<9x96x32xbf16, #tpu.memory_space<vmem>>, vector<1x96x32xbf16>
    %117 = vector.shape_cast %116 : vector<1x96x32xbf16> to vector<96x32xbf16>
    %cst_104 = arith.constant dense<0.000000e+00> : vector<64x32xf32>
    %118 = tpu.matmul %76, %117, %cst_104 {dimension_numbers = #tpu.dot_dimension_numbers<[1], [0], [0], [1], [0, 0, 1, 1], [], []>} : vector<64x96xbf16>, vector<96x32xbf16>, vector<64x32xf32> -> vector<64x32xf32>
    %119 = arith.addf %115, %118 : vector<64x32xf32>
    %cst_105 = arith.constant dense<0.000000e+00> : vector<64x32xf32>
    %120 = tpu.matmul %10, %119, %cst_105 {dimension_numbers = #tpu.dot_dimension_numbers<[1], [0], [0], [1], [0, 0, 1, 1], [], []>} : vector<64x64xf32>, vector<64x32xf32>, vector<64x32xf32> -> vector<64x32xf32>
    %121 = arith.addf %106, %120 : vector<64x32xf32>
    %c0_106 = arith.constant 0 : index
    %c0_107 = arith.constant 0 : index
    %122 = vector.load %arg9[%c0_106, %c0_107] : memref<1x32xf32, #tpu.memory_space<vmem>>, vector<1x32xf32>
    %123 = vector.broadcast %122 : vector<1x32xf32> to vector<64x32xf32>
    %124 = arith.addf %121, %123 : vector<64x32xf32>
    %cst_108 = arith.constant 0.000000e+00 : f32
    %125 = vector.broadcast %cst_108 : f32 to vector<64x32xf32>
    %126 = arith.maximumf %124, %125 : vector<64x32xf32>
    %cst_109 = arith.constant 0.000000e+00 : f32
    %127 = vector.broadcast %cst_109 : f32 to vector<8x48xf32>
    %c0_110 = arith.constant 0 : index
    %c0_111 = arith.constant 0 : index
    %128 = vector.load %arg18[%c0_110, %c0_111] : memref<80x48xf32, #tpu.memory_space<vmem>>, vector<8x48xf32>
    tpu.vector_store %arg18[%c0_110, %c0_111], %127 {strides = array<i32>} : memref<80x48xf32, #tpu.memory_space<vmem>>, vector<8x48xf32>,
    %c72_112 = arith.constant 72 : index
    %c0_113 = arith.constant 0 : index
    %129 = vector.load %arg18[%c72_112, %c0_113] : memref<80x48xf32, #tpu.memory_space<vmem>>, vector<8x48xf32>
    tpu.vector_store %arg18[%c72_112, %c0_113], %127 {strides = array<i32>} : memref<80x48xf32, #tpu.memory_space<vmem>>, vector<8x48xf32>,
    %c8_114 = arith.constant 8 : index
    %c0_115 = arith.constant 0 : index
    %130 = vector.load %arg18[%c8_114, %c0_115] : memref<80x48xf32, #tpu.memory_space<vmem>>, vector<64x48xf32>
    tpu.vector_store %arg18[%c8_114, %c0_115], %70 {strides = array<i32>} : memref<80x48xf32, #tpu.memory_space<vmem>>, vector<64x48xf32>,
    %c0_116 = arith.constant 0 : index
    %c0_117 = arith.constant 0 : index
    %131 = vector.load %arg18[%c0_116, %c0_117] : memref<80x48xf32, #tpu.memory_space<vmem>>, vector<64x48xf32>
    %132 = arith.truncf %131 : vector<64x48xf32> to vector<64x48xbf16>
    %c8_118 = arith.constant 8 : index
    %c0_119 = arith.constant 0 : index
    %133 = vector.load %arg18[%c8_118, %c0_119] : memref<80x48xf32, #tpu.memory_space<vmem>>, vector<64x48xf32>
    %134 = arith.truncf %133 : vector<64x48xf32> to vector<64x48xbf16>
    %c16_120 = arith.constant 16 : index
    %c0_121 = arith.constant 0 : index
    %135 = vector.load %arg18[%c16_120, %c0_121] : memref<80x48xf32, #tpu.memory_space<vmem>>, vector<64x48xf32>
    %136 = arith.truncf %135 : vector<64x48xf32> to vector<64x48xbf16>
    %cst_122 = arith.constant 0.000000e+00 : f32
    %137 = vector.broadcast %cst_122 : f32 to vector<64x64xf32>
    %cst_123 = arith.constant 0.000000e+00 : f32
    %138 = vector.broadcast %cst_123 : f32 to vector<64x64xf32>
    %c0_124 = arith.constant 0 : index
    %c0_125 = arith.constant 0 : index
    %c0_126 = arith.constant 0 : index
    %139 = vector.load %arg10[%c0_124, %c0_125, %c0_126] : memref<9x48x64xbf16, #tpu.memory_space<vmem>>, vector<1x48x64xbf16>
    %140 = vector.shape_cast %139 : vector<1x48x64xbf16> to vector<48x64xbf16>
    %cst_127 = arith.constant dense<0.000000e+00> : vector<64x64xf32>
    %141 = tpu.matmul %132, %140, %cst_127 {dimension_numbers = #tpu.dot_dimension_numbers<[1], [0], [0], [1], [0, 0, 1, 1], [], []>} : vector<64x48xbf16>, vector<48x64xbf16>, vector<64x64xf32> -> vector<64x64xf32>
    %142 = arith.addf %138, %141 : vector<64x64xf32>
    %c3_128 = arith.constant 3 : index
    %c0_129 = arith.constant 0 : index
    %c0_130 = arith.constant 0 : index
    %143 = vector.load %arg10[%c3_128, %c0_129, %c0_130] : memref<9x48x64xbf16, #tpu.memory_space<vmem>>, vector<1x48x64xbf16>
    %144 = vector.shape_cast %143 : vector<1x48x64xbf16> to vector<48x64xbf16>
    %cst_131 = arith.constant dense<0.000000e+00> : vector<64x64xf32>
    %145 = tpu.matmul %134, %144, %cst_131 {dimension_numbers = #tpu.dot_dimension_numbers<[1], [0], [0], [1], [0, 0, 1, 1], [], []>} : vector<64x48xbf16>, vector<48x64xbf16>, vector<64x64xf32> -> vector<64x64xf32>
    %146 = arith.addf %142, %145 : vector<64x64xf32>
    %c6_132 = arith.constant 6 : index
    %c0_133 = arith.constant 0 : index
    %c0_134 = arith.constant 0 : index
    %147 = vector.load %arg10[%c6_132, %c0_133, %c0_134] : memref<9x48x64xbf16, #tpu.memory_space<vmem>>, vector<1x48x64xbf16>
    %148 = vector.shape_cast %147 : vector<1x48x64xbf16> to vector<48x64xbf16>
    %cst_135 = arith.constant dense<0.000000e+00> : vector<64x64xf32>
    %149 = tpu.matmul %136, %148, %cst_135 {dimension_numbers = #tpu.dot_dimension_numbers<[1], [0], [0], [1], [0, 0, 1, 1], [], []>} : vector<64x48xbf16>, vector<48x64xbf16>, vector<64x64xf32> -> vector<64x64xf32>
    %150 = arith.addf %146, %149 : vector<64x64xf32>
    %cst_136 = arith.constant dense<0.000000e+00> : vector<64x64xf32>
    %151 = tpu.matmul %9, %150, %cst_136 {dimension_numbers = #tpu.dot_dimension_numbers<[1], [0], [0], [1], [0, 0, 1, 1], [], []>} : vector<64x64xf32>, vector<64x64xf32>, vector<64x64xf32> -> vector<64x64xf32>
    %152 = arith.addf %137, %151 : vector<64x64xf32>
    %cst_137 = arith.constant 0.000000e+00 : f32
    %153 = vector.broadcast %cst_137 : f32 to vector<64x64xf32>
    %c1_138 = arith.constant 1 : index
    %c0_139 = arith.constant 0 : index
    %c0_140 = arith.constant 0 : index
    %154 = vector.load %arg10[%c1_138, %c0_139, %c0_140] : memref<9x48x64xbf16, #tpu.memory_space<vmem>>, vector<1x48x64xbf16>
    %155 = vector.shape_cast %154 : vector<1x48x64xbf16> to vector<48x64xbf16>
    %cst_141 = arith.constant dense<0.000000e+00> : vector<64x64xf32>
    %156 = tpu.matmul %132, %155, %cst_141 {dimension_numbers = #tpu.dot_dimension_numbers<[1], [0], [0], [1], [0, 0, 1, 1], [], []>} : vector<64x48xbf16>, vector<48x64xbf16>, vector<64x64xf32> -> vector<64x64xf32>
    %157 = arith.addf %153, %156 : vector<64x64xf32>
    %c4_142 = arith.constant 4 : index
    %c0_143 = arith.constant 0 : index
    %c0_144 = arith.constant 0 : index
    %158 = vector.load %arg10[%c4_142, %c0_143, %c0_144] : memref<9x48x64xbf16, #tpu.memory_space<vmem>>, vector<1x48x64xbf16>
    %159 = vector.shape_cast %158 : vector<1x48x64xbf16> to vector<48x64xbf16>
    %cst_145 = arith.constant dense<0.000000e+00> : vector<64x64xf32>
    %160 = tpu.matmul %134, %159, %cst_145 {dimension_numbers = #tpu.dot_dimension_numbers<[1], [0], [0], [1], [0, 0, 1, 1], [], []>} : vector<64x48xbf16>, vector<48x64xbf16>, vector<64x64xf32> -> vector<64x64xf32>
    %161 = arith.addf %157, %160 : vector<64x64xf32>
    %c7_146 = arith.constant 7 : index
    %c0_147 = arith.constant 0 : index
    %c0_148 = arith.constant 0 : index
    %162 = vector.load %arg10[%c7_146, %c0_147, %c0_148] : memref<9x48x64xbf16, #tpu.memory_space<vmem>>, vector<1x48x64xbf16>
    %163 = vector.shape_cast %162 : vector<1x48x64xbf16> to vector<48x64xbf16>
    %cst_149 = arith.constant dense<0.000000e+00> : vector<64x64xf32>
    %164 = tpu.matmul %136, %163, %cst_149 {dimension_numbers = #tpu.dot_dimension_numbers<[1], [0], [0], [1], [0, 0, 1, 1], [], []>} : vector<64x48xbf16>, vector<48x64xbf16>, vector<64x64xf32> -> vector<64x64xf32>
    %165 = arith.addf %161, %164 : vector<64x64xf32>
    %166 = arith.addf %152, %165 : vector<64x64xf32>
    %cst_150 = arith.constant 0.000000e+00 : f32
    %167 = vector.broadcast %cst_150 : f32 to vector<64x64xf32>
    %c2_151 = arith.constant 2 : index
    %c0_152 = arith.constant 0 : index
    %c0_153 = arith.constant 0 : index
    %168 = vector.load %arg10[%c2_151, %c0_152, %c0_153] : memref<9x48x64xbf16, #tpu.memory_space<vmem>>, vector<1x48x64xbf16>
    %169 = vector.shape_cast %168 : vector<1x48x64xbf16> to vector<48x64xbf16>
    %cst_154 = arith.constant dense<0.000000e+00> : vector<64x64xf32>
    %170 = tpu.matmul %132, %169, %cst_154 {dimension_numbers = #tpu.dot_dimension_numbers<[1], [0], [0], [1], [0, 0, 1, 1], [], []>} : vector<64x48xbf16>, vector<48x64xbf16>, vector<64x64xf32> -> vector<64x64xf32>
    %171 = arith.addf %167, %170 : vector<64x64xf32>
    %c5_155 = arith.constant 5 : index
    %c0_156 = arith.constant 0 : index
    %c0_157 = arith.constant 0 : index
    %172 = vector.load %arg10[%c5_155, %c0_156, %c0_157] : memref<9x48x64xbf16, #tpu.memory_space<vmem>>, vector<1x48x64xbf16>
    %173 = vector.shape_cast %172 : vector<1x48x64xbf16> to vector<48x64xbf16>
    %cst_158 = arith.constant dense<0.000000e+00> : vector<64x64xf32>
    %174 = tpu.matmul %134, %173, %cst_158 {dimension_numbers = #tpu.dot_dimension_numbers<[1], [0], [0], [1], [0, 0, 1, 1], [], []>} : vector<64x48xbf16>, vector<48x64xbf16>, vector<64x64xf32> -> vector<64x64xf32>
    %175 = arith.addf %171, %174 : vector<64x64xf32>
    %c8_159 = arith.constant 8 : index
    %c0_160 = arith.constant 0 : index
    %c0_161 = arith.constant 0 : index
    %176 = vector.load %arg10[%c8_159, %c0_160, %c0_161] : memref<9x48x64xbf16, #tpu.memory_space<vmem>>, vector<1x48x64xbf16>
    %177 = vector.shape_cast %176 : vector<1x48x64xbf16> to vector<48x64xbf16>
    %cst_162 = arith.constant dense<0.000000e+00> : vector<64x64xf32>
    %178 = tpu.matmul %136, %177, %cst_162 {dimension_numbers = #tpu.dot_dimension_numbers<[1], [0], [0], [1], [0, 0, 1, 1], [], []>} : vector<64x48xbf16>, vector<48x64xbf16>, vector<64x64xf32> -> vector<64x64xf32>
    %179 = arith.addf %175, %178 : vector<64x64xf32>
    %cst_163 = arith.constant dense<0.000000e+00> : vector<64x64xf32>
    %180 = tpu.matmul %10, %179, %cst_163 {dimension_numbers = #tpu.dot_dimension_numbers<[1], [0], [0], [1], [0, 0, 1, 1], [], []>} : vector<64x64xf32>, vector<64x64xf32>, vector<64x64xf32> -> vector<64x64xf32>
    %181 = arith.addf %166, %180 : vector<64x64xf32>
    %c0_164 = arith.constant 0 : index
    %c0_165 = arith.constant 0 : index
    %182 = vector.load %arg11[%c0_164, %c0_165] : memref<1x64xf32, #tpu.memory_space<vmem>>, vector<1x64xf32>
    %183 = vector.broadcast %182 : vector<1x64xf32> to vector<64x64xf32>
    %184 = arith.addf %181, %183 : vector<64x64xf32>
    %cst_166 = arith.constant 0.000000e+00 : f32
    %185 = vector.broadcast %cst_166 : f32 to vector<64x64xf32>
    %186 = arith.maximumf %184, %185 : vector<64x64xf32>
    %187 = arith.truncf %186 : vector<64x64xf32> to vector<64x64xbf16>
    %c0_167 = arith.constant 0 : index
    %c0_168 = arith.constant 0 : index
    %188 = vector.load %arg12[%c0_167, %c0_168] : memref<64x384xbf16, #tpu.memory_space<vmem>>, vector<64x384xbf16>
    %cst_169 = arith.constant dense<0.000000e+00> : vector<64x384xf32>
    %189 = tpu.matmul %187, %188, %cst_169 {dimension_numbers = #tpu.dot_dimension_numbers<[1], [0], [0], [1], [0, 0, 1, 1], [], []>} : vector<64x64xbf16>, vector<64x384xbf16>, vector<64x384xf32> -> vector<64x384xf32>
    %190 = arith.truncf %126 : vector<64x32xf32> to vector<64x32xbf16>
    %c0_170 = arith.constant 0 : index
    %c0_171 = arith.constant 0 : index
    %191 = vector.load %arg13[%c0_170, %c0_171] : memref<32x384xbf16, #tpu.memory_space<vmem>>, vector<32x384xbf16>
    %cst_172 = arith.constant dense<0.000000e+00> : vector<64x384xf32>
    %192 = tpu.matmul %190, %191, %cst_172 {dimension_numbers = #tpu.dot_dimension_numbers<[1], [0], [0], [1], [0, 0, 1, 1], [], []>} : vector<64x32xbf16>, vector<32x384xbf16>, vector<64x384xf32> -> vector<64x384xf32>
    %193 = arith.addf %189, %192 : vector<64x384xf32>
    %194 = arith.truncf %8 : vector<64x96xf32> to vector<64x96xbf16>
    %c0_173 = arith.constant 0 : index
    %c0_174 = arith.constant 0 : index
    %195 = vector.load %arg14[%c0_173, %c0_174] : memref<96x384xbf16, #tpu.memory_space<vmem>>, vector<96x384xbf16>
    %cst_175 = arith.constant dense<0.000000e+00> : vector<64x384xf32>
    %196 = tpu.matmul %194, %195, %cst_175 {dimension_numbers = #tpu.dot_dimension_numbers<[1], [0], [0], [1], [0, 0, 1, 1], [], []>} : vector<64x96xbf16>, vector<96x384xbf16>, vector<64x384xf32> -> vector<64x384xf32>
    %197 = arith.addf %193, %196 : vector<64x384xf32>
    %c0_176 = arith.constant 0 : index
    %c0_177 = arith.constant 0 : index
    %198 = vector.load %arg15[%c0_176, %c0_177] : memref<1x384xf32, #tpu.memory_space<vmem>>, vector<1x384xf32>
    %199 = vector.broadcast %198 : vector<1x384xf32> to vector<64x384xf32>
    %200 = arith.addf %197, %199 : vector<64x384xf32>
    %c0_178 = arith.constant 0 : index
    %c0_179 = arith.constant 0 : index
    %201 = vector.load %arg1[%c0_178, %c0_179] : memref<64x384xf32, #tpu.memory_space<vmem>>, vector<64x384xf32>
    %cst_180 = arith.constant 2.400000e-01 : f32
    %202 = vector.broadcast %cst_180 : f32 to vector<64x384xf32>
    %203 = arith.mulf %202, %200 : vector<64x384xf32>
    %204 = arith.addf %201, %203 : vector<64x384xf32>
    %cst_181 = arith.constant 0.000000e+00 : f32
    %205 = vector.broadcast %cst_181 : f32 to vector<64x384xf32>
    %206 = arith.maximumf %204, %205 : vector<64x384xf32>
    %c0_182 = arith.constant 0 : index
    %c0_183 = arith.constant 0 : index
    %207 = vector.load %arg16[%c0_182, %c0_183] : memref<64x384xf32, #tpu.memory_space<vmem>>, vector<64x384xf32>
    tpu.vector_store %arg16[%c0_182, %c0_183], %206 {strides = array<i32>} : memref<64x384xf32, #tpu.memory_space<vmem>>, vector<64x384xf32>,
    return
  }
  func.func @transform_0(%arg0: i32) -> (i32, i32) {
    %c0_i32 = arith.constant 0 : i32
    %c0_i32_0 = arith.constant 0 : i32
    return %arg0, %c0_i32 : i32, i32
  }
  func.func @transform_1(%arg0: i32) -> (i32, i32) {
    %c0_i32 = arith.constant 0 : i32
    %c0_i32_0 = arith.constant 0 : i32
    %c0_i32_1 = arith.constant 0 : i32
    return %c0_i32, %c0_i32_0 : i32, i32
  }
  func.func @transform_2(%arg0: i32) -> (i32, i32) {
    %c0_i32 = arith.constant 0 : i32
    %c0_i32_0 = arith.constant 0 : i32
    %c0_i32_1 = arith.constant 0 : i32
    return %c0_i32, %c0_i32_0 : i32, i32
  }
  func.func @transform_3(%arg0: i32) -> (i32, i32) {
    %c0_i32 = arith.constant 0 : i32
    %c0_i32_0 = arith.constant 0 : i32
    %c0_i32_1 = arith.constant 0 : i32
    return %c0_i32, %c0_i32_0 : i32, i32
  }
  func.func @transform_4(%arg0: i32) -> (i32, i32) {
    %c0_i32 = arith.constant 0 : i32
    %c0_i32_0 = arith.constant 0 : i32
    %c0_i32_1 = arith.constant 0 : i32
    return %c0_i32, %c0_i32_0 : i32, i32
  }
  func.func @transform_5(%arg0: i32) -> (i32, i32, i32) {
    %c0_i32 = arith.constant 0 : i32
    %c0_i32_0 = arith.constant 0 : i32
    %c0_i32_1 = arith.constant 0 : i32
    %c0_i32_2 = arith.constant 0 : i32
    return %c0_i32, %c0_i32_0, %c0_i32_1 : i32, i32, i32
  }
  func.func @transform_6(%arg0: i32) -> (i32, i32) {
    %c0_i32 = arith.constant 0 : i32
    %c0_i32_0 = arith.constant 0 : i32
    %c0_i32_1 = arith.constant 0 : i32
    return %c0_i32, %c0_i32_0 : i32, i32
  }
  func.func @transform_7(%arg0: i32) -> (i32, i32, i32) {
    %c0_i32 = arith.constant 0 : i32
    %c0_i32_0 = arith.constant 0 : i32
    %c0_i32_1 = arith.constant 0 : i32
    %c0_i32_2 = arith.constant 0 : i32
    return %c0_i32, %c0_i32_0, %c0_i32_1 : i32, i32, i32
  }
  func.func @transform_8(%arg0: i32) -> (i32, i32) {
    %c0_i32 = arith.constant 0 : i32
    %c0_i32_0 = arith.constant 0 : i32
    %c0_i32_1 = arith.constant 0 : i32
    return %c0_i32, %c0_i32_0 : i32, i32
  }
  func.func @transform_9(%arg0: i32) -> (i32, i32, i32) {
    %c0_i32 = arith.constant 0 : i32
    %c0_i32_0 = arith.constant 0 : i32
    %c0_i32_1 = arith.constant 0 : i32
    %c0_i32_2 = arith.constant 0 : i32
    return %c0_i32, %c0_i32_0, %c0_i32_1 : i32, i32, i32
  }
  func.func @transform_10(%arg0: i32) -> (i32, i32) {
    %c0_i32 = arith.constant 0 : i32
    %c0_i32_0 = arith.constant 0 : i32
    %c0_i32_1 = arith.constant 0 : i32
    return %c0_i32, %c0_i32_0 : i32, i32
  }
  func.func @transform_11(%arg0: i32) -> (i32, i32) {
    %c0_i32 = arith.constant 0 : i32
    %c0_i32_0 = arith.constant 0 : i32
    %c0_i32_1 = arith.constant 0 : i32
    return %c0_i32, %c0_i32_0 : i32, i32
  }
  func.func @transform_12(%arg0: i32) -> (i32, i32) {
    %c0_i32 = arith.constant 0 : i32
    %c0_i32_0 = arith.constant 0 : i32
    %c0_i32_1 = arith.constant 0 : i32
    return %c0_i32, %c0_i32_0 : i32, i32
  }
  func.func @transform_13(%arg0: i32) -> (i32, i32) {
    %c0_i32 = arith.constant 0 : i32
    %c0_i32_0 = arith.constant 0 : i32
    %c0_i32_1 = arith.constant 0 : i32
    return %c0_i32, %c0_i32_0 : i32, i32
  }
  func.func @transform_14(%arg0: i32) -> (i32, i32) {
    %c0_i32 = arith.constant 0 : i32
    %c0_i32_0 = arith.constant 0 : i32
    %c0_i32_1 = arith.constant 0 : i32
    return %c0_i32, %c0_i32_0 : i32, i32
  }
  func.func @transform_15(%arg0: i32) -> (i32, i32) {
    %c0_i32 = arith.constant 0 : i32
    %c0_i32_0 = arith.constant 0 : i32
    return %arg0, %c0_i32 : i32, i32
  }
}

</mosaic_0001>

<llo_original>
// kernel: tpu_custom_call.1
$region0: #{tpu_custom_call.1}
  #allocation0 [shape = 'u32[]', space=smem, size = 0x4, offset = 0x4, fixed_abs, tag = 'smem constant byte address 0x4 - core index']
  #allocation1 [shape = 'u32[144,128]{1,0:T(1,128)}', space=vmem, size = 0x12000, scoped, tag = 'internal scratch']
  #allocation2 [shape = 'f32[80,96]{1,0:T(8,128)}', space=vmem, size = 0xa000, scoped, tag = 'scratch operand']
  #allocation3 [shape = 'f32[80,48]{1,0:T(8,128)}', space=vmem, size = 0xa000, scoped, tag = 'scratch operand']
  %s0 = inlined_call_operand.vmem [shape: f32[128,384], index: 0, kind: input, shape index: {}]
  %s1 = inlined_call_operand.vmem [shape: bf16[384,96], index: 1, kind: input, shape index: {}]
  %s2 = inlined_call_operand.vmem [shape: f32[1,96], index: 2, kind: input, shape index: {}]
  %s3 = inlined_call_operand.vmem [shape: f32[64,64], index: 3, kind: input, shape index: {}]
  %s4 = inlined_call_operand.vmem [shape: f32[64,64], index: 4, kind: input, shape index: {}]
  %s5 = inlined_call_operand.vmem [shape: bf16[9,96,48], index: 5, kind: input, shape index: {}]
  %s6 = inlined_call_operand.vmem [shape: f32[1,48], index: 6, kind: input, shape index: {}]
  %s7 = inlined_call_operand.vmem [shape: bf16[9,96,32], index: 7, kind: input, shape index: {}]
  %s8 = inlined_call_operand.vmem [shape: f32[1,32], index: 8, kind: input, shape index: {}]
  %s9 = inlined_call_operand.vmem [shape: bf16[9,48,64], index: 9, kind: input, shape index: {}]
  %s10 = inlined_call_operand.vmem [shape: f32[1,64], index: 10, kind: input, shape index: {}]
  %s11 = inlined_call_operand.vmem [shape: bf16[64,384], index: 11, kind: input, shape index: {}]
  %s12 = inlined_call_operand.vmem [shape: bf16[32,384], index: 12, kind: input, shape index: {}]
  %s13 = inlined_call_operand.vmem [shape: bf16[96,384], index: 13, kind: input, shape index: {}]
  %s14 = inlined_call_operand.vmem [shape: f32[1,384], index: 14, kind: input, shape index: {}]
  %s15 = inlined_call_operand.hbm [shape: f32[128,384], index: 15, kind: output, shape index: {}]
  %s16 = sld [smem:[#allocation0]]
  $region93: #{tpu_custom_call.1} parent=0
    _
  %s18 = ssub.s32 1, %s16
  %s19 = scalar_select 0, %s18, %s16
  $region1: #{tpu_custom_call.1} parent=0
    #allocation4 [shape = 'u8[196608]{0}', space=vmem, size = 0x30000, scoped, tag = 'output window, operand 0']
    #allocation5 [shape = 's32[2]{0}', space=sflag, size = 0x8, scoped, tag = 'scoped memory for tpu_custom_call.1']
    %20 = vsyncpa [#allocation5], 0
    %s21 = scalar_lea.sflag [#allocation5], 1
    %22 = vsyncpa %s21, 0
    loop: start=0, step=1, limit=4
    $region2: #{tpu_custom_call.1} parent=1 // loop_pre_header
      _
    $region3: #{tpu_custom_call.1} parent=1 // loop_header
      %s24 = sphi 0, %s28
      %p25 = scmp.ge.s32.totalorder %s24, 4
      %s34 = sphi 0, %s36
      %s37 = sphi 0, %s34
      %s38 = sphi 0, %s37
      %s54 = sphi 0, %s38
      %s58 = sphi 0, %s58
      %s60 = sphi 0, %s58
      %s61 = sphi 0, %s60
      %s75 = sphi 0, %s61
      %s79 = sphi 0, %s79
      %s81 = sphi 0, %s79
      %s82 = sphi 0, %s81
      %s96 = sphi 0, %s82
      %s100 = sphi 0, %s100
      %s102 = sphi 0, %s100
      %s103 = sphi 0, %s102
      %s117 = sphi 0, %s103
      %s121 = sphi 0, %s121
      %s123 = sphi 0, %s121
      %s124 = sphi 0, %s123
      %s138 = sphi 0, %s124
      %s142 = sphi 0, %s142
      %s144 = sphi 0, %s142
      %s145 = sphi 0, %s144
      %s159 = sphi 0, %s145
      %s163 = sphi 0, %s163
      %s165 = sphi 0, %s163
      %s166 = sphi 0, %s165
      %s180 = sphi 0, %s166
      %s184 = sphi 0, %s184
      %s186 = sphi 0, %s184
      %s187 = sphi 0, %s186
      %s201 = sphi 0, %s187
      %s205 = sphi 0, %s205
      %s207 = sphi 0, %s205
      %s208 = sphi 0, %s207
      %s222 = sphi 0, %s208
      %s226 = sphi 0, %s226
      %s228 = sphi 0, %s226
      %s229 = sphi 0, %s228
      %s243 = sphi 0, %s229
      %s247 = sphi 0, %s247
      %s249 = sphi 0, %s247
      %s250 = sphi 0, %s249
      %s264 = sphi 0, %s250
      %s268 = sphi 0, %s268
      %s270 = sphi 0, %s268
      %s271 = sphi 0, %s270
      %s285 = sphi 0, %s271
      %s289 = sphi 0, %s289
      %s291 = sphi 0, %s289
      %s292 = sphi 0, %s291
      %s306 = sphi 0, %s292
      %s310 = sphi 0, %s310
      %s312 = sphi 0, %s310
      %s313 = sphi 0, %s312
      %s327 = sphi 0, %s313
      %s331 = sphi 0, %s331
      %s333 = sphi 0, %s331
      %s334 = sphi 0, %s333
      %s348 = sphi 0, %s334
      %s354 = sphi 0, %s356
      %s357 = sphi 0, %s354
      %s358 = sphi 0, %s357
      %s374 = sphi 0, %s358
    $region4: #{tpu_custom_call.1} parent=1 // loop_header_branch
      %27 = sbr.rel (%p25) target = $region8
    $region5: #{tpu_custom_call.1} parent=1 // loop_body
      %s29 = ssub.s32 %s24, 1
      %s30 = ssub.s32 %s24, 2
      %s31 = sadd.s32 %s24, 1
      %s32 = ssub.s32 %s24, %s31
      %p33 = scmp.eq.s32.totalorder %s32, 0
      %s35 = sadd.s32 %s34, 1
      %s36 = scalar_select %p33, %s34, %s35
      %p39 = pneg %p33
      %p40 = scmp.eq.s32.totalorder %s24, 1
      %p41 = por %p39, %p40
      %p42 = scmp.ne.s32.totalorder %s34, %s37
      %p43 = scmp.eq.s32.totalorder %s24, 0
      %p44 = por %p42, %p43
      %p45 = scmp.ne.s32.totalorder %s34, %s37
      %p46 = scmp.eq.s32.totalorder %s29, 1
      %p47 = por %p45, %p46
      %p48 = scmp.ne.s32.totalorder %s37, %s38
      %p49 = scmp.eq.s32.totalorder %s29, 0
      %p50 = por %p48, %p49
      %p51 = scmp.ne.s32.totalorder %s37, %s38
      %p52 = scmp.eq.s32.totalorder %s30, 1
      %p53 = por %p51, %p52
      %p55 = scmp.ne.s32.totalorder %s38, %s54
      %p56 = scmp.eq.s32.totalorder %s30, 0
      %p57 = por %p55, %p56
      %s59 = sadd.s32 %s58, 1
      %p62 = scmp.eq.s32.totalorder %s24, 1
      %p63 = scmp.ne.s32.totalorder %s58, %s60
      %p64 = scmp.eq.s32.totalorder %s24, 0
      %p65 = por %p63, %p64
      %p66 = scmp.ne.s32.totalorder %s58, %s60
      %p67 = scmp.eq.s32.totalorder %s29, 1
      %p68 = por %p66, %p67
      %p69 = scmp.ne.s32.totalorder %s60, %s61
      %p70 = scmp.eq.s32.totalorder %s29, 0
      %p71 = por %p69, %p70
      %p72 = scmp.ne.s32.totalorder %s60, %s61
      %p73 = scmp.eq.s32.totalorder %s30, 1
      %p74 = por %p72, %p73
      %p76 = scmp.ne.s32.totalorder %s61, %s75
      %p77 = scmp.eq.s32.totalorder %s30, 0
      %p78 = por %p76, %p77
      %s80 = sadd.s32 %s79, 1
      %p83 = scmp.eq.s32.totalorder %s24, 1
      %p84 = scmp.ne.s32.totalorder %s79, %s81
      %p85 = scmp.eq.s32.totalorder %s24, 0
      %p86 = por %p84, %p85
      %p87 = scmp.ne.s32.totalorder %s79, %s81
      %p88 = scmp.eq.s32.totalorder %s29, 1
      %p89 = por %p87, %p88
      %p90 = scmp.ne.s32.totalorder %s81, %s82
      %p91 = scmp.eq.s32.totalorder %s29, 0
      %p92 = por %p90, %p91
      %p93 = scmp.ne.s32.totalorder %s81, %s82
      %p94 = scmp.eq.s32.totalorder %s30, 1
      %p95 = por %p93, %p94
      %p97 = scmp.ne.s32.totalorder %s82, %s96
      %p98 = scmp.eq.s32.totalorder %s30, 0
      %p99 = por %p97, %p98
      %s101 = sadd.s32 %s100, 1
      %p104 = scmp.eq.s32.totalorder %s24, 1
      %p105 = scmp.ne.s32.totalorder %s100, %s102
      %p106 = scmp.eq.s32.totalorder %s24, 0
      %p107 = por %p105, %p106
      %p108 = scmp.ne.s32.totalorder %s100, %s102
      %p109 = scmp.eq.s32.totalorder %s29, 1
      %p110 = por %p108, %p109
      %p111 = scmp.ne.s32.totalorder %s102, %s103
      %p112 = scmp.eq.s32.totalorder %s29, 0
      %p113 = por %p111, %p112
      %p114 = scmp.ne.s32.totalorder %s102, %s103
      %p115 = scmp.eq.s32.totalorder %s30, 1
      %p116 = por %p114, %p115
      %p118 = scmp.ne.s32.totalorder %s103, %s117
      %p119 = scmp.eq.s32.totalorder %s30, 0
      %p120 = por %p118, %p119
      %s122 = sadd.s32 %s121, 1
      %p125 = scmp.eq.s32.totalorder %s24, 1
      %p126 = scmp.ne.s32.totalorder %s121, %s123
      %p127 = scmp.eq.s32.totalorder %s24, 0
      %p128 = por %p126, %p127
      %p129 = scmp.ne.s32.totalorder %s121, %s123
      %p130 = scmp.eq.s32.totalorder %s29, 1
      %p131 = por %p129, %p130
      %p132 = scmp.ne.s32.totalorder %s123, %s124
      %p133 = scmp.eq.s32.totalorder %s29, 0
      %p134 = por %p132, %p133
      %p135 = scmp.ne.s32.totalorder %s123, %s124
      %p136 = scmp.eq.s32.totalorder %s30, 1
      %p137 = por %p135, %p136
      %p139 = scmp.ne.s32.totalorder %s124, %s138
      %p140 = scmp.eq.s32.totalorder %s30, 0
      %p141 = por %p139, %p140
      %s143 = sadd.s32 %s142, 1
      %p146 = scmp.eq.s32.totalorder %s24, 1
      %p147 = scmp.ne.s32.totalorder %s142, %s144
      %p148 = scmp.eq.s32.totalorder %s24, 0
      %p149 = por %p147, %p148
      %p150 = scmp.ne.s32.totalorder %s142, %s144
      %p151 = scmp.eq.s32.totalorder %s29, 1
      %p152 = por %p150, %p151
      %p153 = scmp.ne.s32.totalorder %s144, %s145
      %p154 = scmp.eq.s32.totalorder %s29, 0
      %p155 = por %p153, %p154
      %p156 = scmp.ne.s32.totalorder %s144, %s145
      %p157 = scmp.eq.s32.totalorder %s30, 1
      %p158 = por %p156, %p157
      %p160 = scmp.ne.s32.totalorder %s145, %s159
      %p161 = scmp.eq.s32.totalorder %s30, 0
      %p162 = por %p160, %p161
      %s164 = sadd.s32 %s163, 1
      %p167 = scmp.eq.s32.totalorder %s24, 1
      %p168 = scmp.ne.s32.totalorder %s163, %s165
      %p169 = scmp.eq.s32.totalorder %s24, 0
      %p170 = por %p168, %p169
      %p171 = scmp.ne.s32.totalorder %s163, %s165
      %p172 = scmp.eq.s32.totalorder %s29, 1
      %p173 = por %p171, %p172
      %p174 = scmp.ne.s32.totalorder %s165, %s166
      %p175 = scmp.eq.s32.totalorder %s29, 0
      %p176 = por %p174, %p175
      %p177 = scmp.ne.s32.totalorder %s165, %s166
      %p178 = scmp.eq.s32.totalorder %s30, 1
      %p179 = por %p177, %p178
      %p181 = scmp.ne.s32.totalorder %s166, %s180
      %p182 = scmp.eq.s32.totalorder %s30, 0
      %p183 = por %p181, %p182
      %s185 = sadd.s32 %s184, 1
      %p188 = scmp.eq.s32.totalorder %s24, 1
      %p189 = scmp.ne.s32.totalorder %s184, %s186
      %p190 = scmp.eq.s32.totalorder %s24, 0
      %p191 = por %p189, %p190
      %p192 = scmp.ne.s32.totalorder %s184, %s186
      %p193 = scmp.eq.s32.totalorder %s29, 1
      %p194 = por %p192, %p193
      %p195 = scmp.ne.s32.totalorder %s186, %s187
      %p196 = scmp.eq.s32.totalorder %s29, 0
      %p197 = por %p195, %p196
      %p198 = scmp.ne.s32.totalorder %s186, %s187
      %p199 = scmp.eq.s32.totalorder %s30, 1
      %p200 = por %p198, %p199
      %p202 = scmp.ne.s32.totalorder %s187, %s201
      %p203 = scmp.eq.s32.totalorder %s30, 0
      %p204 = por %p202, %p203
      %s206 = sadd.s32 %s205, 1
      %p209 = scmp.eq.s32.totalorder %s24, 1
      %p210 = scmp.ne.s32.totalorder %s205, %s207
      %p211 = scmp.eq.s32.totalorder %s24, 0
      %p212 = por %p210, %p211
      %p213 = scmp.ne.s32.totalorder %s205, %s207
      %p214 = scmp.eq.s32.totalorder %s29, 1
      %p215 = por %p213, %p214
      %p216 = scmp.ne.s32.totalorder %s207, %s208
      %p217 = scmp.eq.s32.totalorder %s29, 0
      %p218 = por %p216, %p217
      %p219 = scmp.ne.s32.totalorder %s207, %s208
      %p220 = scmp.eq.s32.totalorder %s30, 1
      %p221 = por %p219, %p220
      %p223 = scmp.ne.s32.totalorder %s208, %s222
      %p224 = scmp.eq.s32.totalorder %s30, 0
      %p225 = por %p223, %p224
      %s227 = sadd.s32 %s226, 1
      %p230 = scmp.eq.s32.totalorder %s24, 1
      %p231 = scmp.ne.s32.totalorder %s226, %s228
      %p232 = scmp.eq.s32.totalorder %s24, 0
      %p233 = por %p231, %p232
      %p234 = scmp.ne.s32.totalorder %s226, %s228
      %p235 = scmp.eq.s32.totalorder %s29, 1
      %p236 = por %p234, %p235
      %p237 = scmp.ne.s32.totalorder %s228, %s229
      %p238 = scmp.eq.s32.totalorder %s29, 0
      %p239 = por %p237, %p238
      %p240 = scmp.ne.s32.totalorder %s228, %s229
      %p241 = scmp.eq.s32.totalorder %s30, 1
      %p242 = por %p240, %p241
      %p244 = scmp.ne.s32.totalorder %s229, %s243
      %p245 = scmp.eq.s32.totalorder %s30, 0
      %p246 = por %p244, %p245
      %s248 = sadd.s32 %s247, 1
      %p251 = scmp.eq.s32.totalorder %s24, 1
      %p252 = scmp.ne.s32.totalorder %s247, %s249
      %p253 = scmp.eq.s32.totalorder %s24, 0
      %p254 = por %p252, %p253
      %p255 = scmp.ne.s32.totalorder %s247, %s249
      %p256 = scmp.eq.s32.totalorder %s29, 1
      %p257 = por %p255, %p256
      %p258 = scmp.ne.s32.totalorder %s249, %s250
      %p259 = scmp.eq.s32.totalorder %s29, 0
      %p260 = por %p258, %p259
      %p261 = scmp.ne.s32.totalorder %s249, %s250
      %p262 = scmp.eq.s32.totalorder %s30, 1
      %p263 = por %p261, %p262
      %p265 = scmp.ne.s32.totalorder %s250, %s264
      %p266 = scmp.eq.s32.totalorder %s30, 0
      %p267 = por %p265, %p266
      %s269 = sadd.s32 %s268, 1
      %p272 = scmp.eq.s32.totalorder %s24, 1
      %p273 = scmp.ne.s32.totalorder %s268, %s270
      %p274 = scmp.eq.s32.totalorder %s24, 0
      %p275 = por %p273, %p274
      %p276 = scmp.ne.s32.totalorder %s268, %s270
      %p277 = scmp.eq.s32.totalorder %s29, 1
      %p278 = por %p276, %p277
      %p279 = scmp.ne.s32.totalorder %s270, %s271
      %p280 = scmp.eq.s32.totalorder %s29, 0
      %p281 = por %p279, %p280
      %p282 = scmp.ne.s32.totalorder %s270, %s271
      %p283 = scmp.eq.s32.totalorder %s30, 1
      %p284 = por %p282, %p283
      %p286 = scmp.ne.s32.totalorder %s271, %s285
      %p287 = scmp.eq.s32.totalorder %s30, 0
      %p288 = por %p286, %p287
      %s290 = sadd.s32 %s289, 1
      %p293 = scmp.eq.s32.totalorder %s24, 1
      %p294 = scmp.ne.s32.totalorder %s289, %s291
      %p295 = scmp.eq.s32.totalorder %s24, 0
      %p296 = por %p294, %p295
      %p297 = scmp.ne.s32.totalorder %s289, %s291
      %p298 = scmp.eq.s32.totalorder %s29, 1
      %p299 = por %p297, %p298
      %p300 = scmp.ne.s32.totalorder %s291, %s292
      %p301 = scmp.eq.s32.totalorder %s29, 0
      %p302 = por %p300, %p301
      %p303 = scmp.ne.s32.totalorder %s291, %s292
      %p304 = scmp.eq.s32.totalorder %s30, 1
      %p305 = por %p303, %p304
      %p307 = scmp.ne.s32.totalorder %s292, %s306
      %p308 = scmp.eq.s32.totalorder %s30, 0
      %p309 = por %p307, %p308
      %s311 = sadd.s32 %s310, 1
      %p314 = scmp.eq.s32.totalorder %s24, 1
      %p315 = scmp.ne.s32.totalorder %s310, %s312
      %p316 = scmp.eq.s32.totalorder %s24, 0
      %p317 = por %p315, %p316
      %p318 = scmp.ne.s32.totalorder %s310, %s312
      %p319 = scmp.eq.s32.totalorder %s29, 1
      %p320 = por %p318, %p319
      %p321 = scmp.ne.s32.totalorder %s312, %s313
      %p322 = scmp.eq.s32.totalorder %s29, 0
      %p323 = por %p321, %p322
      %p324 = scmp.ne.s32.totalorder %s312, %s313
      %p325 = scmp.eq.s32.totalorder %s30, 1
      %p326 = por %p324, %p325
      %p328 = scmp.ne.s32.totalorder %s313, %s327
      %p329 = scmp.eq.s32.totalorder %s30, 0
      %p330 = por %p328, %p329
      %s332 = sadd.s32 %s331, 1
      %p335 = scmp.eq.s32.totalorder %s24, 1
      %p336 = scmp.ne.s32.totalorder %s331, %s333
      %p337 = scmp.eq.s32.totalorder %s24, 0
      %p338 = por %p336, %p337
      %p339 = scmp.ne.s32.totalorder %s331, %s333
      %p340 = scmp.eq.s32.totalorder %s29, 1
      %p341 = por %p339, %p340
      %p342 = scmp.ne.s32.totalorder %s333, %s334
      %p343 = scmp.eq.s32.totalorder %s29, 0
      %p344 = por %p342, %p343
      %p345 = scmp.ne.s32.totalorder %s333, %s334
      %p346 = scmp.eq.s32.totalorder %s30, 1
      %p347 = por %p345, %p346
      %p349 = scmp.ne.s32.totalorder %s334, %s348
      %p350 = scmp.eq.s32.totalorder %s30, 0
      %p351 = por %p349, %p350
      %s352 = ssub.s32 %s24, %s31
      %p353 = scmp.eq.s32.totalorder %s352, 0
      %s355 = sadd.s32 %s354, 1
      %s356 = scalar_select %p353, %s354, %s355
      %p359 = pneg %p353
      %p360 = scmp.eq.s32.totalorder %s24, 1
      %p361 = por %p359, %p360
      %p362 = scmp.ne.s32.totalorder %s354, %s357
      %p363 = scmp.eq.s32.totalorder %s24, 0
      %p364 = por %p362, %p363
      %p365 = scmp.ne.s32.totalorder %s354, %s357
      %p366 = scmp.eq.s32.totalorder %s29, 1
      %p367 = por %p365, %p366
      %p368 = scmp.ne.s32.totalorder %s357, %s358
      %p369 = scmp.eq.s32.totalorder %s29, 0
      %p370 = por %p368, %p369
      %p371 = scmp.ne.s32.totalorder %s357, %s358
      %p372 = scmp.eq.s32.totalorder %s30, 1
      %p373 = por %p371, %p372
      %p375 = scmp.ne.s32.totalorder %s358, %s374
      %p376 = scmp.eq.s32.totalorder %s30, 0
      %p377 = por %p375, %p376
      %p378 = scmp.le.s32.totalorder 1, %s24
      %p379 = scmp.lt.s32.totalorder %s24, 3
      %p380 = pnand %p378, %p379
      %p381 = pneg %p380
      // Predicated region
      $region9: #{tpu_custom_call.1} parent=5 // pred_check
        _
      $region10: #{tpu_custom_call.1} parent=5 // pred_check_branch
        %383 = sbr.rel (%p380) target = $region12
      $region11: #{tpu_custom_call.1} parent=5 // pred_region
        %s384 = ssub.s32 %s24, 1
        // Predicated region
        $region13: #{tpu_custom_call.1} parent=11 // pred_check
          %p385 = pneg %p71
        $region14: #{tpu_custom_call.1} parent=11 // pred_check_branch
          %387 = sbr.rel (%p385) target = $region16
        $region15: #{tpu_custom_call.1} parent=11 // pred_region
          _
        $region16: #{tpu_custom_call.1} parent=11 // pred_fallthru
          _
        // Predicated region
        $region17: #{tpu_custom_call.1} parent=11 // pred_check
          %p388 = pneg %p92
        $region18: #{tpu_custom_call.1} parent=11 // pred_check_branch
          %390 = sbr.rel (%p388) target = $region20
        $region19: #{tpu_custom_call.1} parent=11 // pred_region
          _
        $region20: #{tpu_custom_call.1} parent=11 // pred_fallthru
          _
        // Predicated region
        $region21: #{tpu_custom_call.1} parent=11 // pred_check
          %p391 = pneg %p113
        $region22: #{tpu_custom_call.1} parent=11 // pred_check_branch
          %393 = sbr.rel (%p391) target = $region24
        $region23: #{tpu_custom_call.1} parent=11 // pred_region
          _
        $region24: #{tpu_custom_call.1} parent=11 // pred_fallthru
          _
        // Predicated region
        $region25: #{tpu_custom_call.1} parent=11 // pred_check
          %p394 = pneg %p134
        $region26: #{tpu_custom_call.1} parent=11 // pred_check_branch
          %396 = sbr.rel (%p394) target = $region28
        $region27: #{tpu_custom_call.1} parent=11 // pred_region
          _
        $region28: #{tpu_custom_call.1} parent=11 // pred_fallthru
          _
        // Predicated region
        $region29: #{tpu_custom_call.1} parent=11 // pred_check
          %p397 = pneg %p155
        $region30: #{tpu_custom_call.1} parent=11 // pred_check_branch
          %399 = sbr.rel (%p397) target = $region32
        $region31: #{tpu_custom_call.1} parent=11 // pred_region
          _
        $region32: #{tpu_custom_call.1} parent=11 // pred_fallthru
          _
        // Predicated region
        $region33: #{tpu_custom_call.1} parent=11 // pred_check
          %p400 = pneg %p176
        $region34: #{tpu_custom_call.1} parent=11 // pred_check_branch
          %402 = sbr.rel (%p400) target = $region36
        $region35: #{tpu_custom_call.1} parent=11 // pred_region
          _
        $region36: #{tpu_custom_call.1} parent=11 // pred_fallthru
          _
        // Predicated region
        $region37: #{tpu_custom_call.1} parent=11 // pred_check
          %p403 = pneg %p197
        $region38: #{tpu_custom_call.1} parent=11 // pred_check_branch
          %405 = sbr.rel (%p403) target = $region40
        $region39: #{tpu_custom_call.1} parent=11 // pred_region
          _
        $region40: #{tpu_custom_call.1} parent=11 // pred_fallthru
          _
        // Predicated region
        $region41: #{tpu_custom_call.1} parent=11 // pred_check
          %p406 = pneg %p218
        $region42: #{tpu_custom_call.1} parent=11 // pred_check_branch
          %408 = sbr.rel (%p406) target = $region44
        $region43: #{tpu_custom_call.1} parent=11 // pred_region
          _
        $region44: #{tpu_custom_call.1} parent=11 // pred_fallthru
          _
        // Predicated region
        $region45: #{tpu_custom_call.1} parent=11 // pred_check
          %p409 = pneg %p239
        $region46: #{tpu_custom_call.1} parent=11 // pred_check_branch
          %411 = sbr.rel (%p409) target = $region48
        $region47: #{tpu_custom_call.1} parent=11 // pred_region
          _
        $region48: #{tpu_custom_call.1} parent=11 // pred_fallthru
          _
        // Predicated region
        $region49: #{tpu_custom_call.1} parent=11 // pred_check
          %p412 = pneg %p260
        $region50: #{tpu_custom_call.1} parent=11 // pred_check_branch
          %414 = sbr.rel (%p412) target = $region52
        $region51: #{tpu_custom_call.1} parent=11 // pred_region
          _
        $region52: #{tpu_custom_call.1} parent=11 // pred_fallthru
          _
        // Predicated region
        $region53: #{tpu_custom_call.1} parent=11 // pred_check
          %p415 = pneg %p281
        $region54: #{tpu_custom_call.1} parent=11 // pred_check_branch
          %417 = sbr.rel (%p415) target = $region56
        $region55: #{tpu_custom_call.1} parent=11 // pred_region
          _
        $region56: #{tpu_custom_call.1} parent=11 // pred_fallthru
          _
        // Predicated region
        $region57: #{tpu_custom_call.1} parent=11 // pred_check
          %p418 = pneg %p302
        $region58: #{tpu_custom_call.1} parent=11 // pred_check_branch
          %420 = sbr.rel (%p418) target = $region60
        $region59: #{tpu_custom_call.1} parent=11 // pred_region
          _
        $region60: #{tpu_custom_call.1} parent=11 // pred_fallthru
          _
        // Predicated region
        $region61: #{tpu_custom_call.1} parent=11 // pred_check
          %p421 = pneg %p323
        $region62: #{tpu_custom_call.1} parent=11 // pred_check_branch
          %423 = sbr.rel (%p421) target = $region64
        $region63: #{tpu_custom_call.1} parent=11 // pred_region
          _
        $region64: #{tpu_custom_call.1} parent=11 // pred_fallthru
          _
        // Predicated region
        $region65: #{tpu_custom_call.1} parent=11 // pred_check
          %p424 = pneg %p344
        $region66: #{tpu_custom_call.1} parent=11 // pred_check_branch
          %426 = sbr.rel (%p424) target = $region68
        $region67: #{tpu_custom_call.1} parent=11 // pred_region
          _
        $region68: #{tpu_custom_call.1} parent=11 // pred_fallthru
          _
      $region12: #{tpu_custom_call.1} parent=5 // pred_fallthru
        _
      %p427 = scmp.lt.s32.totalorder %s24, 2
      // Predicated region
      $region69: #{tpu_custom_call.1} parent=5 // pred_check
        %p428 = pneg %p427
      $region70: #{tpu_custom_call.1} parent=5 // pred_check_branch
        %430 = sbr.rel (%p428) target = $region72
      $region71: #{tpu_custom_call.1} parent=5 // pred_region
        // Predicated region
        $region73: #{tpu_custom_call.1} parent=71 // pred_check
          %p431 = pneg %p44
        $region74: #{tpu_custom_call.1} parent=71 // pred_check_branch
          %433 = sbr.rel (%p431) target = $region76
        $region75: #{tpu_custom_call.1} parent=71 // pred_region
          %s434 = smul.u32 8, %s24
          %p435 = scmp.lt.s32.totalorder %s434, 15
          %s436 = scalar_select %p435, %s434, 15
          %s437 = smul.addr %s436, 3
          %s438 = smul.addr %s437, 8
          %s439 = scalar_lea.vmem %s0, %s438
          %s440 = smul.u32 8, %s24
        $region76: #{tpu_custom_call.1} parent=71 // pred_fallthru
          _
      $region72: #{tpu_custom_call.1} parent=5 // pred_fallthru
        _
      %p441 = scmp.le.s32.totalorder 1, %s24
      %p442 = scmp.lt.s32.totalorder %s24, 3
      %p443 = pnand %p441, %p442
      %p444 = pneg %p443
      // Predicated region
      $region77: #{tpu_custom_call.1} parent=5 // pred_check
        _
      $region78: #{tpu_custom_call.1} parent=5 // pred_check_branch
        %446 = sbr.rel (%p443) target = $region80
      $region79: #{tpu_custom_call.1} parent=5 // pred_region
        %s447 = ssub.s32 %s24, 1
        %s448 = smul.u32 8, %s29
        %p449 = scmp.lt.s32.totalorder %s448, 15
        %s450 = scalar_select %p449, %s448, 15
        %s451 = smul.addr %s450, 3
        %s452 = smul.addr %s451, 8
        %s453 = scalar_lea.vmem %s0, %s452
        %p454 = pneg %p50
        %p455 = pneg %p47
        %p456 = pneg %p71
        %p457 = pneg %p68
        %p458 = pneg %p92
        %p459 = pneg %p89
        %p460 = pneg %p113
        %p461 = pneg %p110
        %p462 = pneg %p134
        %p463 = pneg %p131
        %p464 = pneg %p155
        %p465 = pneg %p152
        %p466 = pneg %p176
        %p467 = pneg %p173
        %p468 = pneg %p197
        %p469 = pneg %p194
        %p470 = pneg %p218
        %p471 = pneg %p215
        %p472 = pneg %p239
        %p473 = pneg %p236
        %p474 = pneg %p260
        %p475 = pneg %p257
        %p476 = pneg %p281
        %p477 = pneg %p278
        %p478 = pneg %p302
        %p479 = pneg %p299
        %p480 = pneg %p323
        %p481 = pneg %p320
        %p482 = pneg %p344
        %p483 = pneg %p341
        %p484 = pneg %p370
        %p485 = pneg %p367
        %s486 = sand.u32 %s357, 1
        %s487 = scalar_lea.sflag [#allocation5], %s486
        %s488 = sand.u32 %s357, 1
        %s489 = smul.addr %s488, 192
        %s490 = scalar_lea.vmem [#allocation4], %s489
        %s491 = smul.u32 8, %s29
        %p492 = scmp.lt.s32.totalorder %s491, 15
        %s493 = scalar_select %p492, %s491, 15
        %s494 = smul.addr %s493, 3
        %s495 = smul.addr %s494, 8
        %s496 = scalar_lea.vmem %s0, %s495
        %s497 = smul.u32 8, %s29
        %s498 = smul.u32 8, %s29
        %v500 = vld [vmem:[%s496] sm:$0xff]
        %v501 = vld [vmem:[%s496 + $0x8] sm:$0xff]
        %v502 = vld [vmem:[%s496 + $0x10] sm:$0xff]
        %v503 = vld [vmem:[%s496 + $0x18] sm:$0xff]
        %v504 = vld [vmem:[%s496 + $0x20] sm:$0xff]
        %v505 = vld [vmem:[%s496 + $0x28] sm:$0xff]
        %v506 = vld [vmem:[%s496 + $0x30] sm:$0xff]
        %v507 = vld [vmem:[%s496 + $0x38] sm:$0xff]
        %v508 = vld [vmem:[%s496 + $0x40] sm:$0xff]
        %v509 = vld [vmem:[%s496 + $0x48] sm:$0xff]
        %v510 = vld [vmem:[%s496 + $0x50] sm:$0xff]
        %v511 = vld [vmem:[%s496 + $0x58] sm:$0xff]
        %v512 = vld [vmem:[%s496 + $0x60] sm:$0xff]
        %v513 = vld [vmem:[%s496 + $0x68] sm:$0xff]
        %v514 = vld [vmem:[%s496 + $0x70] sm:$0xff]
        %v515 = vld [vmem:[%s496 + $0x78] sm:$0xff]
        %v516 = vld [vmem:[%s496 + $0x80] sm:$0xff]
        %v517 = vld [vmem:[%s496 + $0x88] sm:$0xff]
        %v518 = vld [vmem:[%s496 + $0x90] sm:$0xff]
        %v519 = vld [vmem:[%s496 + $0x98] sm:$0xff]
        %v520 = vld [vmem:[%s496 + $0xa0] sm:$0xff]
        %v521 = vld [vmem:[%s496 + $0xa8] sm:$0xff]
        %v522 = vld [vmem:[%s496 + $0xb0] sm:$0xff]
        %v523 = vld [vmem:[%s496 + $0xb8] sm:$0xff]
        %v524 = vpack.c.bf16 %v503, %v500
        %v525 = vpack.c.bf16 %v504, %v501
        %v526 = vpack.c.bf16 %v505, %v502
        %v527 = vpack.c.bf16 %v509, %v506
        %v528 = vpack.c.bf16 %v510, %v507
        %v529 = vpack.c.bf16 %v511, %v508
        %v530 = vpack.c.bf16 %v515, %v512
        %v531 = vpack.c.bf16 %v516, %v513
        %v532 = vpack.c.bf16 %v517, %v514
        %v533 = vpack.c.bf16 %v521, %v518
        %v534 = vpack.c.bf16 %v522, %v519
        %v535 = vpack.c.bf16 %v523, %v520
        %v536 = vld [vmem:[%s1] sm:$0xf]
        %v537 = vld [vmem:[%s1 + $0x4] sm:$0xf]
        %v538 = vld [vmem:[%s1 + $0x8] sm:$0xf]
        %v539 = vld [vmem:[%s1 + $0xc] sm:$0xf]
        %v540 = vld [vmem:[%s1 + $0x10] sm:$0xf]
        %v541 = vld [vmem:[%s1 + $0x14] sm:$0xf]
        %v542 = vld [vmem:[%s1 + $0x18] sm:$0xf]
        %v543 = vld [vmem:[%s1 + $0x1c] sm:$0xf]
        %v544 = vld [vmem:[%s1 + $0x20] sm:$0xf]
        %v545 = vld [vmem:[%s1 + $0x24] sm:$0xf]
        %v546 = vld [vmem:[%s1 + $0x28] sm:$0xf]
        %v547 = vld [vmem:[%s1 + $0x2c] sm:$0xf]
        %v548 = vld [vmem:[%s1 + $0x30] sm:$0xf]
        %v549 = vld [vmem:[%s1 + $0x34] sm:$0xf]
        %v550 = vld [vmem:[%s1 + $0x38] sm:$0xf]
        %v551 = vld [vmem:[%s1 + $0x3c] sm:$0xf]
        %v552 = vld [vmem:[%s1 + $0x40] sm:$0xf]
        %v553 = vld [vmem:[%s1 + $0x44] sm:$0xf]
        %v554 = vld [vmem:[%s1 + $0x48] sm:$0xf]
        %v555 = vld [vmem:[%s1 + $0x4c] sm:$0xf]
        %v556 = vld [vmem:[%s1 + $0x50] sm:$0xf]
        %v557 = vld [vmem:[%s1 + $0x54] sm:$0xf]
        %v558 = vld [vmem:[%s1 + $0x58] sm:$0xf]
        %v559 = vld [vmem:[%s1 + $0x5c] sm:$0xf]
        %v560 = vld [vmem:[%s1 + $0x60] sm:$0xf]
        %v561 = vld [vmem:[%s1 + $0x64] sm:$0xf]
        %v562 = vld [vmem:[%s1 + $0x68] sm:$0xf]
        %v563 = vld [vmem:[%s1 + $0x6c] sm:$0xf]
        %v564 = vld [vmem:[%s1 + $0x70] sm:$0xf]
        %v565 = vld [vmem:[%s1 + $0x74] sm:$0xf]
        %v566 = vld [vmem:[%s1 + $0x78] sm:$0xf]
        %v567 = vld [vmem:[%s1 + $0x7c] sm:$0xf]
        %v568 = vld [vmem:[%s1 + $0x80] sm:$0xf]
        %v569 = vld [vmem:[%s1 + $0x84] sm:$0xf]
        %v570 = vld [vmem:[%s1 + $0x88] sm:$0xf]
        %v571 = vld [vmem:[%s1 + $0x8c] sm:$0xf]
        %v572 = vld [vmem:[%s1 + $0x90] sm:$0xf]
        %v573 = vld [vmem:[%s1 + $0x94] sm:$0xf]
        %v574 = vld [vmem:[%s1 + $0x98] sm:$0xf]
        %v575 = vld [vmem:[%s1 + $0x9c] sm:$0xf]
        %v576 = vld [vmem:[%s1 + $0xa0] sm:$0xf]
        %v577 = vld [vmem:[%s1 + $0xa4] sm:$0xf]
        %v578 = vld [vmem:[%s1 + $0xa8] sm:$0xf]
        %v579 = vld [vmem:[%s1 + $0xac] sm:$0xf]
        %v580 = vld [vmem:[%s1 + $0xb0] sm:$0xf]
        %v581 = vld [vmem:[%s1 + $0xb4] sm:$0xf]
        %v582 = vld [vmem:[%s1 + $0xb8] sm:$0xf]
        %v583 = vld [vmem:[%s1 + $0xbc] sm:$0xf]
        %v584 = vld [vmem:[%s2] sm:$0x1]
        %v586 = vlaneseq
        %v587 = vshrl.u32 %v586, 7
        %v588 = vsub.s32 0, %v587
        %v589 = vrot.slane %v584, %v588
        %v639 = vunpack.c.l.b16 %v536
        %v640 = vunpack.c.l.b16 %v537
        %v641 = vunpack.c.l.b16 %v538
        %v642 = vunpack.c.l.b16 %v539
        %v643 = vunpack.c.l.b16 %v540
        %v644 = vunpack.c.l.b16 %v541
        %v645 = vunpack.c.l.b16 %v542
        %v646 = vunpack.c.l.b16 %v543
        %v647 = vunpack.c.l.b16 %v544
        %v648 = vunpack.c.l.b16 %v545
        %v649 = vunpack.c.l.b16 %v546
        %v650 = vunpack.c.l.b16 %v547
        %v651 = vunpack.c.l.b16 %v548
        %v652 = vunpack.c.l.b16 %v549
        %v653 = vunpack.c.l.b16 %v550
        %v654 = vunpack.c.l.b16 %v551
        %v655 = vunpack.c.l.b16 %v552
        %v656 = vunpack.c.l.b16 %v553
        %v657 = vunpack.c.l.b16 %v554
        %v658 = vunpack.c.l.b16 %v555
        %v659 = vunpack.c.l.b16 %v556
        %v660 = vunpack.c.l.b16 %v557
        %v661 = vunpack.c.l.b16 %v558
        %v662 = vunpack.c.l.b16 %v559
        %v663 = vunpack.c.l.b16 %v560
        %v664 = vunpack.c.l.b16 %v561
        %v665 = vunpack.c.l.b16 %v562
        %v666 = vunpack.c.l.b16 %v563
        %v667 = vunpack.c.l.b16 %v564
        %v668 = vunpack.c.l.b16 %v565
        %v669 = vunpack.c.l.b16 %v566
        %v670 = vunpack.c.l.b16 %v567
        %v671 = vunpack.c.l.b16 %v568
        %v672 = vunpack.c.l.b16 %v569
        %v673 = vunpack.c.l.b16 %v570
        %v674 = vunpack.c.l.b16 %v571
        %v675 = vunpack.c.l.b16 %v572
        %v676 = vunpack.c.l.b16 %v573
        %v677 = vunpack.c.l.b16 %v574
        %v678 = vunpack.c.l.b16 %v575
        %v679 = vunpack.c.l.b16 %v576
        %v680 = vunpack.c.l.b16 %v577
        %v681 = vunpack.c.l.b16 %v578
        %v682 = vunpack.c.l.b16 %v579
        %v683 = vunpack.c.l.b16 %v580
        %v684 = vunpack.c.l.b16 %v581
        %v685 = vunpack.c.l.b16 %v582
        %v686 = vunpack.c.l.b16 %v583
        %v687 = vpack.c.b16 %v640, %v639
        %v688 = vpack.c.b16 %v642, %v641
        %v689 = vpack.c.b16 %v644, %v643
        %v690 = vpack.c.b16 %v646, %v645
        %v691 = vpack.c.b16 %v648, %v647
        %v692 = vpack.c.b16 %v650, %v649
        %v693 = vpack.c.b16 %v652, %v651
        %v694 = vpack.c.b16 %v654, %v653
        %v695 = vpack.c.b16 %v656, %v655
        %v696 = vpack.c.b16 %v658, %v657
        %v697 = vpack.c.b16 %v660, %v659
        %v698 = vpack.c.b16 %v662, %v661
        %v699 = vpack.c.b16 %v664, %v663
        %v700 = vpack.c.b16 %v666, %v665
        %v701 = vpack.c.b16 %v668, %v667
        %v702 = vpack.c.b16 %v670, %v669
        %v703 = vpack.c.b16 %v672, %v671
        %v704 = vpack.c.b16 %v674, %v673
        %v705 = vpack.c.b16 %v676, %v675
        %v706 = vpack.c.b16 %v678, %v677
        %v707 = vpack.c.b16 %v680, %v679
        %v708 = vpack.c.b16 %v682, %v681
        %v709 = vpack.c.b16 %v684, %v683
        %v710 = vpack.c.b16 %v686, %v685
        %735 = vmatprep.subr.bf16.mxu0 0
        %736 = vmatpush1.bf16.msra.mxu0 %v687
        %737 = vmatprep.subr.bf16.mxu0 0
        %738 = vmatpush1.bf16.msra.mxu0 %v688
        %739 = vmatprep.subr.bf16.mxu0 0
        %740 = vmatpush1.bf16.msra.mxu0 %v689
        %741 = vmatprep.subr.bf16.mxu0 0
        %742 = vmatpush1.bf16.msra.mxu0 %v690
        %743 = vmatprep.subr.bf16.mxu0 0
        %744 = vmatpush1.bf16.msra.mxu0 %v691
        %745 = vmatprep.subr.bf16.mxu0 0
        %746 = vmatpush1.bf16.msra.mxu0 %v692
        %747 = vmatprep.subr.bf16.mxu0 0
        %748 = vmatpush1.bf16.msra.mxu0 %v693
        %749 = vmatprep.subr.bf16.mxu0 0
        %750 = vmatpush1.bf16.msra.mxu0 %v694
        %751 = vmatprep.subr.bf16.mxu0 0
        %752 = vmatpush1.bf16.msra.mxu0 %v695
        %753 = vmatprep.subr.bf16.mxu0 0
        %754 = vmatpush1.bf16.msra.mxu0 %v696
        %755 = vmatprep.subr.bf16.mxu0 0
        %756 = vmatpush1.bf16.msra.mxu0 %v697
        %757 = vmatprep.subr.bf16.mxu0 0
        %758 = vmatpush1.bf16.msra.mxu0 %v698
        %759 = vmatprep.subr.bf16.mxu0 0
        %760 = vmatpush1.bf16.msra.mxu0 %v699
        %761 = vmatprep.subr.bf16.mxu0 0
        %762 = vmatpush1.bf16.msra.mxu0 %v700
        %763 = vmatprep.subr.bf16.mxu0 0
        %764 = vmatpush1.bf16.msra.mxu0 %v701
        %765 = vmatprep.subr.bf16.mxu0 0
        %766 = vmatpush1.bf16.msra.mxu0 %v702
        %767 = vmatprep.mubr.bf16.mxu0 %v525
        %768 = vmatmul.mubr.bf16.gmra.mrb[0].mxu0 %v524
        %v769 = vpop.f32.mrb[0].mxu0
        %v770 = vadd.f32 %v589, %v769
        %v771 = vpop.f32.mrb[0].mxu0
        %v772 = vpop.f32.mrb[0].mxu0
        %v773 = vadd.f32 %v589, %v772
        %v774 = vpop.f32.mrb[0].mxu0
        %775 = vmatprep.mubr.bf16.mxu0 %v528
        %776 = vmatmul.mubr.bf16.gmra.mrb[0].mxu0 %v527
        %v777 = vpop.f32.mrb[0].mxu0
        %v778 = vadd.f32 %v589, %v777
        %v779 = vpop.f32.mrb[0].mxu0
        %v780 = vpop.f32.mrb[0].mxu0
        %v781 = vadd.f32 %v589, %v780
        %v782 = vpop.f32.mrb[0].mxu0
        %783 = vmatprep.mubr.bf16.mxu0 %v531
        %784 = vmatmul.mubr.bf16.gmra.mrb[0].mxu0 %v530
        %v785 = vpop.f32.mrb[0].mxu0
        %v786 = vadd.f32 %v589, %v785
        %v787 = vpop.f32.mrb[0].mxu0
        %v788 = vpop.f32.mrb[0].mxu0
        %v789 = vadd.f32 %v589, %v788
        %v790 = vpop.f32.mrb[0].mxu0
        %791 = vmatprep.mubr.bf16.mxu0 %v534
        %792 = vmatmul.mubr.bf16.gmra.mrb[0].mxu0 %v533
        %v793 = vpop.f32.mrb[0].mxu0
        %v794 = vadd.f32 %v589, %v793
        %v795 = vpop.f32.mrb[0].mxu0
        %v796 = vpop.f32.mrb[0].mxu0
        %v797 = vadd.f32 %v589, %v796
        %v798 = vpop.f32.mrb[0].mxu0
        %799 = vdwg.mxu0
        %800 = vmatprep.subr.bf16.mxu0 0
        %801 = vmatpush1.bf16.msra.mxu0 %v703
        %802 = vmatprep.subr.bf16.mxu0 0
        %803 = vmatpush1.bf16.msra.mxu0 %v704
        %804 = vmatprep.subr.bf16.mxu0 0
        %805 = vmatpush1.bf16.msra.mxu0 %v705
        %806 = vmatprep.subr.bf16.mxu0 0
        %807 = vmatpush1.bf16.msra.mxu0 %v706
        %808 = vmatprep.subr.bf16.mxu0 0
        %809 = vmatpush1.bf16.msra.mxu0 %v707
        %810 = vmatprep.subr.bf16.mxu0 0
        %811 = vmatpush1.bf16.msra.mxu0 %v708
        %812 = vmatprep.subr.bf16.mxu0 0
        %813 = vmatpush1.bf16.msra.mxu0 %v709
        %814 = vmatprep.subr.bf16.mxu0 0
        %815 = vmatpush1.bf16.msra.mxu0 %v710
        %816 = vmatprep.subr.bf16.mxu0 0
        %817 = vmatpush1.bf16.msra.mxu0 0
        %818 = vmatprep.subr.bf16.mxu0 0
        %819 = vmatpush1.bf16.msra.mxu0 0
        %820 = vmatprep.subr.bf16.mxu0 0
        %821 = vmatpush1.bf16.msra.mxu0 0
        %822 = vmatprep.subr.bf16.mxu0 0
        %823 = vmatpush1.bf16.msra.mxu0 0
        %824 = vmatprep.subr.bf16.mxu0 0
        %825 = vmatpush1.bf16.msra.mxu0 0
        %826 = vmatprep.subr.bf16.mxu0 0
        %827 = vmatpush1.bf16.msra.mxu0 0
        %828 = vmatprep.subr.bf16.mxu0 0
        %829 = vmatpush1.bf16.msra.mxu0 0
        %830 = vmatprep.subr.bf16.mxu0 0
        %831 = vmatpush1.bf16.msra.mxu0 0
        %832 = vmatprep.mubr.bf16.mxu0 0
        %833 = vmatmul.mubr.bf16.gmra.mrb[0].mxu0 %v526
        %v834 = vpop.f32.mrb[0].mxu0
        %v835 = vadd.f32 %v770, %v834
        %v836 = vpop.f32.mrb[0].mxu0
        %v837 = vpop.f32.mrb[0].mxu0
        %v838 = vadd.f32 %v773, %v837
        %v839 = vpop.f32.mrb[0].mxu0
        %840 = vmatprep.mubr.bf16.mxu0 0
        %841 = vmatmul.mubr.bf16.gmra.mrb[0].mxu0 %v529
        %v842 = vpop.f32.mrb[0].mxu0
        %v843 = vadd.f32 %v778, %v842
        %v844 = vpop.f32.mrb[0].mxu0
        %v845 = vpop.f32.mrb[0].mxu0
        %v846 = vadd.f32 %v781, %v845
        %v847 = vpop.f32.mrb[0].mxu0
        %848 = vmatprep.mubr.bf16.mxu0 0
        %849 = vmatmul.mubr.bf16.gmra.mrb[0].mxu0 %v532
        %v850 = vpop.f32.mrb[0].mxu0
        %v851 = vadd.f32 %v786, %v850
        %v852 = vpop.f32.mrb[0].mxu0
        %v853 = vpop.f32.mrb[0].mxu0
        %v854 = vadd.f32 %v789, %v853
        %v855 = vpop.f32.mrb[0].mxu0
        %856 = vmatprep.mubr.bf16.mxu0 0
        %857 = vmatmul.mubr.bf16.gmra.mrb[0].mxu0 %v535
        %v858 = vpop.f32.mrb[0].mxu0
        %v859 = vadd.f32 %v794, %v858
        %v860 = vpop.f32.mrb[0].mxu0
        %v861 = vpop.f32.mrb[0].mxu0
        %v862 = vadd.f32 %v797, %v861
        %v863 = vpop.f32.mrb[0].mxu0
        %864 = vdwg.mxu0
        %v865 = vmax.f32 %v835, 0.0
        %v866 = vmax.f32 %v838, 0.0
        %v867 = vmax.f32 %v843, 0.0
        %v868 = vmax.f32 %v846, 0.0
        %v869 = vmax.f32 %v851, 0.0
        %v870 = vmax.f32 %v854, 0.0
        %v871 = vmax.f32 %v859, 0.0
        %v872 = vmax.f32 %v862, 0.0
        %v873 = vld [vmem:[%s3] sm:$0xff]
        %v874 = vld [vmem:[%s3 + $0x8] sm:$0xff]
        %v875 = vld [vmem:[%s3 + $0x10] sm:$0xff]
        %v876 = vld [vmem:[%s3 + $0x18] sm:$0xff]
        %v877 = vld [vmem:[%s3 + $0x20] sm:$0xff]
        %v878 = vld [vmem:[%s3 + $0x28] sm:$0xff]
        %v879 = vld [vmem:[%s3 + $0x30] sm:$0xff]
        %v880 = vld [vmem:[%s3 + $0x38] sm:$0xff]
        %v881 = vld [vmem:[%s4] sm:$0xff]
        %v882 = vld [vmem:[%s4 + $0x8] sm:$0xff]
        %v883 = vld [vmem:[%s4 + $0x10] sm:$0xff]
        %v884 = vld [vmem:[%s4 + $0x18] sm:$0xff]
        %v885 = vld [vmem:[%s4 + $0x20] sm:$0xff]
        %v886 = vld [vmem:[%s4 + $0x28] sm:$0xff]
        %v887 = vld [vmem:[%s4 + $0x30] sm:$0xff]
        %v888 = vld [vmem:[%s4 + $0x38] sm:$0xff]
        %vm889 = vcmask 785408
        %890 = vst.msk [vmem:[#allocation2] sm:$0xff] %vm889, 0.0
        %891 = vst.msk [vmem:[#allocation2 + $0x48] sm:$0xff] %vm889, 0.0
        %892 = vst.msk [vmem:[#allocation2 + $0x8] sm:$0xff] %vm889, %v865
        %893 = vst.msk [vmem:[#allocation2 + $0x10] sm:$0xff] %vm889, %v866
        %894 = vst.msk [vmem:[#allocation2 + $0x18] sm:$0xff] %vm889, %v867
        %895 = vst.msk [vmem:[#allocation2 + $0x20] sm:$0xff] %vm889, %v868
        %896 = vst.msk [vmem:[#allocation2 + $0x28] sm:$0xff] %vm889, %v869
        %897 = vst.msk [vmem:[#allocation2 + $0x30] sm:$0xff] %vm889, %v870
        %898 = vst.msk [vmem:[#allocation2 + $0x38] sm:$0xff] %vm889, %v871
        %899 = vst.msk [vmem:[#allocation2 + $0x40] sm:$0xff] %vm889, %v872
        %v900 = vld [vmem:[#allocation2] sm:$0xff]
        %v901 = vld [vmem:[#allocation2 + $0x8] sm:$0xff]
        %v902 = vld [vmem:[#allocation2 + $0x10] sm:$0xff]
        %v903 = vld [vmem:[#allocation2 + $0x18] sm:$0xff]
        %v904 = vld [vmem:[#allocation2 + $0x20] sm:$0xff]
        %v905 = vld [vmem:[#allocation2 + $0x28] sm:$0xff]
        %v906 = vld [vmem:[#allocation2 + $0x30] sm:$0xff]
        %v907 = vld [vmem:[#allocation2 + $0x38] sm:$0xff]
        %v908 = vpack.c.bf16 %v901, %v900
        %v909 = vpack.c.bf16 %v903, %v902
        %v910 = vpack.c.bf16 %v905, %v904
        %v911 = vpack.c.bf16 %v907, %v906
        %v912 = vld [vmem:[#allocation2 + $0x40] sm:$0xff]
        %v913 = vpack.c.bf16 %v902, %v901
        %v914 = vpack.c.bf16 %v904, %v903
        %v915 = vpack.c.bf16 %v906, %v905
        %v916 = vpack.c.bf16 %v912, %v907
        %v917 = vld [vmem:[#allocation2 + $0x48] sm:$0xff]
        %v918 = vpack.c.bf16 %v917, %v912
        %v919 = vld [vmem:[%s5] sm:$0xf]
        %v920 = vld [vmem:[%s5 + $0x4] sm:$0xf]
        %v921 = vld [vmem:[%s5 + $0x8] sm:$0xf]
        %v922 = vld [vmem:[%s5 + $0xc] sm:$0xf]
        %v923 = vld [vmem:[%s5 + $0x10] sm:$0xf]
        %v924 = vld [vmem:[%s5 + $0x14] sm:$0xf]
        %v925 = vld [vmem:[%s5 + $0x18] sm:$0xf]
        %v926 = vld [vmem:[%s5 + $0x1c] sm:$0xf]
        %v927 = vld [vmem:[%s5 + $0x20] sm:$0xf]
        %v928 = vld [vmem:[%s5 + $0x24] sm:$0xf]
        %v929 = vld [vmem:[%s5 + $0x28] sm:$0xf]
        %v930 = vld [vmem:[%s5 + $0x2c] sm:$0xf]
        %s931 = scalar_lea.vmem %s5, 144
        %v932 = vld [vmem:[%s931] sm:$0xf]
        %v933 = vld [vmem:[%s931 + $0x4] sm:$0xf]
        %v934 = vld [vmem:[%s931 + $0x8] sm:$0xf]
        %v935 = vld [vmem:[%s931 + $0xc] sm:$0xf]
        %v936 = vld [vmem:[%s931 + $0x10] sm:$0xf]
        %v937 = vld [vmem:[%s931 + $0x14] sm:$0xf]
        %v938 = vld [vmem:[%s931 + $0x18] sm:$0xf]
        %v939 = vld [vmem:[%s931 + $0x1c] sm:$0xf]
        %v940 = vld [vmem:[%s931 + $0x20] sm:$0xf]
        %v941 = vld [vmem:[%s931 + $0x24] sm:$0xf]
        %v942 = vld [vmem:[%s931 + $0x28] sm:$0xf]
        %v943 = vld [vmem:[%s931 + $0x2c] sm:$0xf]
        %v956 = vunpack.c.l.b16 %v932
        %v957 = vunpack.c.l.b16 %v933
        %v958 = vunpack.c.l.b16 %v934
        %v959 = vunpack.c.l.b16 %v935
        %v960 = vunpack.c.l.b16 %v936
        %v961 = vunpack.c.l.b16 %v937
        %v962 = vunpack.c.l.b16 %v938
        %v963 = vunpack.c.l.b16 %v939
        %v964 = vunpack.c.l.b16 %v940
        %v965 = vunpack.c.l.b16 %v941
        %v966 = vunpack.c.l.b16 %v942
        %v967 = vunpack.c.l.b16 %v943
        %v968 = vpack.c.b16 %v957, %v956
        %v969 = vpack.c.b16 %v959, %v958
        %v970 = vpack.c.b16 %v961, %v960
        %v971 = vpack.c.b16 %v963, %v962
        %v972 = vpack.c.b16 %v965, %v964
        %v973 = vpack.c.b16 %v967, %v966
        %v981 = vsel %vm889, %v913, 0
        %v984 = vsel %vm889, %v914, 0
        %v987 = vsel %vm889, %v915, 0
        %v990 = vsel %vm889, %v916, 0
        %992 = vmatprep.subr.bf16.mxu0 0
        %993 = vmatpush1.bf16.msra.mxu0 %v968
        %994 = vmatprep.subr.bf16.mxu0 0
        %995 = vmatpush1.bf16.msra.mxu0 %v969
        %996 = vmatprep.subr.bf16.mxu0 0
        %997 = vmatpush1.bf16.msra.mxu0 %v970
        %998 = vmatprep.subr.bf16.mxu0 0
        %999 = vmatpush1.bf16.msra.mxu0 %v971
        %1000 = vmatprep.subr.bf16.mxu0 0
        %1001 = vmatpush1.bf16.msra.mxu0 %v972
        %1002 = vmatprep.subr.bf16.mxu0 0
        %1003 = vmatpush1.bf16.msra.mxu0 %v973
        %1004 = vmatprep.subr.bf16.mxu0 0
        %1005 = vmatpush1.bf16.msra.mxu0 0
        %1006 = vmatprep.subr.bf16.mxu0 0
        %1007 = vmatpush1.bf16.msra.mxu0 0
        %1008 = vmatprep.subr.bf16.mxu0 0
        %1009 = vmatpush1.bf16.msra.mxu0 0
        %1010 = vmatprep.subr.bf16.mxu0 0
        %1011 = vmatpush1.bf16.msra.mxu0 0
        %1012 = vmatprep.subr.bf16.mxu0 0
        %1013 = vmatpush1.bf16.msra.mxu0 0
        %1014 = vmatprep.subr.bf16.mxu0 0
        %1015 = vmatpush1.bf16.msra.mxu0 0
        %1016 = vmatprep.subr.bf16.mxu0 0
        %1017 = vmatpush1.bf16.msra.mxu0 0
        %1018 = vmatprep.subr.bf16.mxu0 0
        %1019 = vmatpush1.bf16.msra.mxu0 0
        %1020 = vmatprep.subr.bf16.mxu0 0
        %1021 = vmatpush1.bf16.msra.mxu0 0
        %1022 = vmatprep.subr.bf16.mxu0 0
        %1023 = vmatpush1.bf16.msra.mxu0 0
        %1024 = vmatprep.mubr.bf16.mxu0 0
        %1025 = vmatmul.mubr.bf16.gmra.mrb[0].mxu0 %v981
        %v1026 = vpop.f32.mrb[0].mxu0
        %v1027 = vadd.f32 0.0, %v1026
        %v1028 = vpop.f32.mrb[0].mxu0
        %v1029 = vpop.f32.mrb[0].mxu0
        %v1030 = vadd.f32 0.0, %v1029
        %v1031 = vpop.f32.mrb[0].mxu0
        %1032 = vmatprep.mubr.bf16.mxu0 0
        %1033 = vmatmul.mubr.bf16.gmra.mrb[0].mxu0 %v984
        %v1034 = vpop.f32.mrb[0].mxu0
        %v1035 = vadd.f32 0.0, %v1034
        %v1036 = vpop.f32.mrb[0].mxu0
        %v1037 = vpop.f32.mrb[0].mxu0
        %v1038 = vadd.f32 0.0, %v1037
        %v1039 = vpop.f32.mrb[0].mxu0
        %1040 = vmatprep.mubr.bf16.mxu0 0
        %1041 = vmatmul.mubr.bf16.gmra.mrb[0].mxu0 %v987
        %v1042 = vpop.f32.mrb[0].mxu0
        %v1043 = vadd.f32 0.0, %v1042
        %v1044 = vpop.f32.mrb[0].mxu0
        %v1045 = vpop.f32.mrb[0].mxu0
        %v1046 = vadd.f32 0.0, %v1045
        %v1047 = vpop.f32.mrb[0].mxu0
        %1048 = vmatprep.mubr.bf16.mxu0 0
        %1049 = vmatmul.mubr.bf16.gmra.mrb[0].mxu0 %v990
        %v1050 = vpop.f32.mrb[0].mxu0
        %v1051 = vadd.f32 0.0, %v1050
        %v1052 = vpop.f32.mrb[0].mxu0
        %v1053 = vpop.f32.mrb[0].mxu0
        %v1054 = vadd.f32 0.0, %v1053
        %v1055 = vpop.f32.mrb[0].mxu0
        %1056 = vdwg.mxu0
        %v1069 = vunpack.c.l.b16 %v919
        %v1070 = vunpack.c.l.b16 %v920
        %v1071 = vunpack.c.l.b16 %v921
        %v1072 = vunpack.c.l.b16 %v922
        %v1073 = vunpack.c.l.b16 %v923
        %v1074 = vunpack.c.l.b16 %v924
        %v1075 = vunpack.c.l.b16 %v925
        %v1076 = vunpack.c.l.b16 %v926
        %v1077 = vunpack.c.l.b16 %v927
        %v1078 = vunpack.c.l.b16 %v928
        %v1079 = vunpack.c.l.b16 %v929
        %v1080 = vunpack.c.l.b16 %v930
        %v1081 = vpack.c.b16 %v1070, %v1069
        %v1082 = vpack.c.b16 %v1072, %v1071
        %v1083 = vpack.c.b16 %v1074, %v1073
        %v1084 = vpack.c.b16 %v1076, %v1075
        %v1085 = vpack.c.b16 %v1078, %v1077
        %v1086 = vpack.c.b16 %v1080, %v1079
        %v1094 = vsel %vm889, %v908, 0
        %v1097 = vsel %vm889, %v909, 0
        %v1100 = vsel %vm889, %v910, 0
        %v1103 = vsel %vm889, %v911, 0
        %1105 = vmatprep.subr.bf16.mxu0 0
        %1106 = vmatpush1.bf16.msra.mxu0 %v1081
        %1107 = vmatprep.subr.bf16.mxu0 0
        %1108 = vmatpush1.bf16.msra.mxu0 %v1082
        %1109 = vmatprep.subr.bf16.mxu0 0
        %1110 = vmatpush1.bf16.msra.mxu0 %v1083
        %1111 = vmatprep.subr.bf16.mxu0 0
        %1112 = vmatpush1.bf16.msra.mxu0 %v1084
        %1113 = vmatprep.subr.bf16.mxu0 0
        %1114 = vmatpush1.bf16.msra.mxu0 %v1085
        %1115 = vmatprep.subr.bf16.mxu0 0
        %1116 = vmatpush1.bf16.msra.mxu0 %v1086
        %1117 = vmatprep.subr.bf16.mxu0 0
        %1118 = vmatpush1.bf16.msra.mxu0 0
        %1119 = vmatprep.subr.bf16.mxu0 0
        %1120 = vmatpush1.bf16.msra.mxu0 0
        %1121 = vmatprep.subr.bf16.mxu0 0
        %1122 = vmatpush1.bf16.msra.mxu0 0
        %1123 = vmatprep.subr.bf16.mxu0 0
        %1124 = vmatpush1.bf16.msra.mxu0 0
        %1125 = vmatprep.subr.bf16.mxu0 0
        %1126 = vmatpush1.bf16.msra.mxu0 0
        %1127 = vmatprep.subr.bf16.mxu0 0
        %1128 = vmatpush1.bf16.msra.mxu0 0
        %1129 = vmatprep.subr.bf16.mxu0 0
        %1130 = vmatpush1.bf16.msra.mxu0 0
        %1131 = vmatprep.subr.bf16.mxu0 0
        %1132 = vmatpush1.bf16.msra.mxu0 0
        %1133 = vmatprep.subr.bf16.mxu0 0
        %1134 = vmatpush1.bf16.msra.mxu0 0
        %1135 = vmatprep.subr.bf16.mxu0 0
        %1136 = vmatpush1.bf16.msra.mxu0 0
        %1137 = vmatprep.mubr.bf16.mxu0 0
        %1138 = vmatmul.mubr.bf16.gmra.mrb[0].mxu0 %v1094
        %v1139 = vpop.f32.mrb[0].mxu0
        %v1140 = vadd.f32 %v1027, %v1139
        %v1141 = vpop.f32.mrb[0].mxu0
        %v1142 = vpop.f32.mrb[0].mxu0
        %v1143 = vadd.f32 %v1030, %v1142
        %v1144 = vpop.f32.mrb[0].mxu0
        %1145 = vmatprep.mubr.bf16.mxu0 0
        %1146 = vmatmul.mubr.bf16.gmra.mrb[0].mxu0 %v1097
        %v1147 = vpop.f32.mrb[0].mxu0
        %v1148 = vadd.f32 %v1035, %v1147
        %v1149 = vpop.f32.mrb[0].mxu0
        %v1150 = vpop.f32.mrb[0].mxu0
        %v1151 = vadd.f32 %v1038, %v1150
        %v1152 = vpop.f32.mrb[0].mxu0
        %1153 = vmatprep.mubr.bf16.mxu0 0
        %1154 = vmatmul.mubr.bf16.gmra.mrb[0].mxu0 %v1100
        %v1155 = vpop.f32.mrb[0].mxu0
        %v1156 = vadd.f32 %v1043, %v1155
        %v1157 = vpop.f32.mrb[0].mxu0
        %v1158 = vpop.f32.mrb[0].mxu0
        %v1159 = vadd.f32 %v1046, %v1158
        %v1160 = vpop.f32.mrb[0].mxu0
        %1161 = vmatprep.mubr.bf16.mxu0 0
        %1162 = vmatmul.mubr.bf16.gmra.mrb[0].mxu0 %v1103
        %v1163 = vpop.f32.mrb[0].mxu0
        %v1164 = vadd.f32 %v1051, %v1163
        %v1165 = vpop.f32.mrb[0].mxu0
        %v1166 = vpop.f32.mrb[0].mxu0
        %v1167 = vadd.f32 %v1054, %v1166
        %v1168 = vpop.f32.mrb[0].mxu0
        %1169 = vdwg.mxu0
        %s1170 = scalar_lea.vmem %s5, 288
        %v1171 = vld [vmem:[%s1170] sm:$0xf]
        %v1172 = vld [vmem:[%s1170 + $0x4] sm:$0xf]
        %v1173 = vld [vmem:[%s1170 + $0x8] sm:$0xf]
        %v1174 = vld [vmem:[%s1170 + $0xc] sm:$0xf]
        %v1175 = vld [vmem:[%s1170 + $0x10] sm:$0xf]
        %v1176 = vld [vmem:[%s1170 + $0x14] sm:$0xf]
        %v1177 = vld [vmem:[%s1170 + $0x18] sm:$0xf]
        %v1178 = vld [vmem:[%s1170 + $0x1c] sm:$0xf]
        %v1179 = vld [vmem:[%s1170 + $0x20] sm:$0xf]
        %v1180 = vld [vmem:[%s1170 + $0x24] sm:$0xf]
        %v1181 = vld [vmem:[%s1170 + $0x28] sm:$0xf]
        %v1182 = vld [vmem:[%s1170 + $0x2c] sm:$0xf]
        %v1195 = vunpack.c.l.b16 %v1171
        %v1196 = vunpack.c.l.b16 %v1172
        %v1197 = vunpack.c.l.b16 %v1173
        %v1198 = vunpack.c.l.b16 %v1174
        %v1199 = vunpack.c.l.b16 %v1175
        %v1200 = vunpack.c.l.b16 %v1176
        %v1201 = vunpack.c.l.b16 %v1177
        %v1202 = vunpack.c.l.b16 %v1178
        %v1203 = vunpack.c.l.b16 %v1179
        %v1204 = vunpack.c.l.b16 %v1180
        %v1205 = vunpack.c.l.b16 %v1181
        %v1206 = vunpack.c.l.b16 %v1182
        %v1207 = vpack.c.b16 %v1196, %v1195
        %v1208 = vpack.c.b16 %v1198, %v1197
        %v1209 = vpack.c.b16 %v1200, %v1199
        %v1210 = vpack.c.b16 %v1202, %v1201
        %v1211 = vpack.c.b16 %v1204, %v1203
        %v1212 = vpack.c.b16 %v1206, %v1205
        %v1220 = vsel %vm889, %v918, 0
        %1222 = vmatprep.subr.bf16.mxu0 0
        %1223 = vmatpush1.bf16.msra.mxu0 %v1207
        %1224 = vmatprep.subr.bf16.mxu0 0
        %1225 = vmatpush1.bf16.msra.mxu0 %v1208
        %1226 = vmatprep.subr.bf16.mxu0 0
        %1227 = vmatpush1.bf16.msra.mxu0 %v1209
        %1228 = vmatprep.subr.bf16.mxu0 0
        %1229 = vmatpush1.bf16.msra.mxu0 %v1210
        %1230 = vmatprep.subr.bf16.mxu0 0
        %1231 = vmatpush1.bf16.msra.mxu0 %v1211
        %1232 = vmatprep.subr.bf16.mxu0 0
        %1233 = vmatpush1.bf16.msra.mxu0 %v1212
        %1234 = vmatprep.subr.bf16.mxu0 0
        %1235 = vmatpush1.bf16.msra.mxu0 0
        %1236 = vmatprep.subr.bf16.mxu0 0
        %1237 = vmatpush1.bf16.msra.mxu0 0
        %1238 = vmatprep.subr.bf16.mxu0 0
        %1239 = vmatpush1.bf16.msra.mxu0 0
        %1240 = vmatprep.subr.bf16.mxu0 0
        %1241 = vmatpush1.bf16.msra.mxu0 0
        %1242 = vmatprep.subr.bf16.mxu0 0
        %1243 = vmatpush1.bf16.msra.mxu0 0
        %1244 = vmatprep.subr.bf16.mxu0 0
        %1245 = vmatpush1.bf16.msra.mxu0 0
        %1246 = vmatprep.subr.bf16.mxu0 0
        %1247 = vmatpush1.bf16.msra.mxu0 0
        %1248 = vmatprep.subr.bf16.mxu0 0
        %1249 = vmatpush1.bf16.msra.mxu0 0
        %1250 = vmatprep.subr.bf16.mxu0 0
        %1251 = vmatpush1.bf16.msra.mxu0 0
        %1252 = vmatprep.subr.bf16.mxu0 0
        %1253 = vmatpush1.bf16.msra.mxu0 0
        %1254 = vmatprep.mubr.bf16.mxu0 0
        %1255 = vmatmul.mubr.bf16.gmra.mrb[0].mxu0 %v1097
        %v1256 = vpop.f32.mrb[0].mxu0
        %v1257 = vadd.f32 0.0, %v1256
        %v1258 = vpop.f32.mrb[0].mxu0
        %v1259 = vpop.f32.mrb[0].mxu0
        %v1260 = vadd.f32 0.0, %v1259
        %v1261 = vpop.f32.mrb[0].mxu0
        %1262 = vmatprep.mubr.bf16.mxu0 0
        %1263 = vmatmul.mubr.bf16.gmra.mrb[0].mxu0 %v1100
        %v1264 = vpop.f32.mrb[0].mxu0
        %v1265 = vadd.f32 0.0, %v1264
        %v1266 = vpop.f32.mrb[0].mxu0
        %v1267 = vpop.f32.mrb[0].mxu0
        %v1268 = vadd.f32 0.0, %v1267
        %v1269 = vpop.f32.mrb[0].mxu0
        %1270 = vmatprep.mubr.bf16.mxu0 0
        %1271 = vmatmul.mubr.bf16.gmra.mrb[0].mxu0 %v1103
        %v1272 = vpop.f32.mrb[0].mxu0
        %v1273 = vadd.f32 0.0, %v1272
        %v1274 = vpop.f32.mrb[0].mxu0
        %v1275 = vpop.f32.mrb[0].mxu0
        %v1276 = vadd.f32 0.0, %v1275
        %v1277 = vpop.f32.mrb[0].mxu0
        %1278 = vmatprep.mubr.bf16.mxu0 0
        %1279 = vmatmul.mubr.bf16.gmra.mrb[0].mxu0 %v1220
        %v1280 = vpop.f32.mrb[0].mxu0
        %v1281 = vadd.f32 0.0, %v1280
        %v1282 = vpop.f32.mrb[0].mxu0
        %v1283 = vpop.f32.mrb[0].mxu0
        %v1284 = vadd.f32 0.0, %v1283
        %v1285 = vpop.f32.mrb[0].mxu0
        %1286 = vdwg.mxu0
        %v1287 = vadd.f32 %v1140, %v1257
        %v1288 = vadd.f32 %v1143, %v1260
        %v1289 = vadd.f32 %v1148, %v1265
        %v1290 = vadd.f32 %v1151, %v1268
        %v1291 = vadd.f32 %v1156, %v1273
        %v1292 = vadd.f32 %v1159, %v1276
        %v1293 = vadd.f32 %v1164, %v1281
        %v1294 = vadd.f32 %v1167, %v1284
        %s1295 = scalar_lea.vmem %s5, 48
        %v1296 = vld [vmem:[%s1295] sm:$0xf]
        %v1297 = vld [vmem:[%s1295 + $0x4] sm:$0xf]
        %v1298 = vld [vmem:[%s1295 + $0x8] sm:$0xf]
        %v1299 = vld [vmem:[%s1295 + $0xc] sm:$0xf]
        %v1300 = vld [vmem:[%s1295 + $0x10] sm:$0xf]
        %v1301 = vld [vmem:[%s1295 + $0x14] sm:$0xf]
        %v1302 = vld [vmem:[%s1295 + $0x18] sm:$0xf]
        %v1303 = vld [vmem:[%s1295 + $0x1c] sm:$0xf]
        %v1304 = vld [vmem:[%s1295 + $0x20] sm:$0xf]
        %v1305 = vld [vmem:[%s1295 + $0x24] sm:$0xf]
        %v1306 = vld [vmem:[%s1295 + $0x28] sm:$0xf]
        %v1307 = vld [vmem:[%s1295 + $0x2c] sm:$0xf]
        %s1308 = scalar_lea.vmem %s5, 192
        %v1309 = vld [vmem:[%s1308] sm:$0xf]
        %v1310 = vld [vmem:[%s1308 + $0x4] sm:$0xf]
        %v1311 = vld [vmem:[%s1308 + $0x8] sm:$0xf]
        %v1312 = vld [vmem:[%s1308 + $0xc] sm:$0xf]
        %v1313 = vld [vmem:[%s1308 + $0x10] sm:$0xf]
        %v1314 = vld [vmem:[%s1308 + $0x14] sm:$0xf]
        %v1315 = vld [vmem:[%s1308 + $0x18] sm:$0xf]
        %v1316 = vld [vmem:[%s1308 + $0x1c] sm:$0xf]
        %v1317 = vld [vmem:[%s1308 + $0x20] sm:$0xf]
        %v1318 = vld [vmem:[%s1308 + $0x24] sm:$0xf]
        %v1319 = vld [vmem:[%s1308 + $0x28] sm:$0xf]
        %v1320 = vld [vmem:[%s1308 + $0x2c] sm:$0xf]
        %v1333 = vunpack.c.l.b16 %v1309
        %v1334 = vunpack.c.l.b16 %v1310
        %v1335 = vunpack.c.l.b16 %v1311
        %v1336 = vunpack.c.l.b16 %v1312
        %v1337 = vunpack.c.l.b16 %v1313
        %v1338 = vunpack.c.l.b16 %v1314
        %v1339 = vunpack.c.l.b16 %v1315
        %v1340 = vunpack.c.l.b16 %v1316
        %v1341 = vunpack.c.l.b16 %v1317
        %v1342 = vunpack.c.l.b16 %v1318
        %v1343 = vunpack.c.l.b16 %v1319
        %v1344 = vunpack.c.l.b16 %v1320
        %v1345 = vpack.c.b16 %v1334, %v1333
        %v1346 = vpack.c.b16 %v1336, %v1335
        %v1347 = vpack.c.b16 %v1338, %v1337
        %v1348 = vpack.c.b16 %v1340, %v1339
        %v1349 = vpack.c.b16 %v1342, %v1341
        %v1350 = vpack.c.b16 %v1344, %v1343
        %1357 = vmatprep.subr.bf16.mxu0 0
        %1358 = vmatpush1.bf16.msra.mxu0 %v1345
        %1359 = vmatprep.subr.bf16.mxu0 0
        %1360 = vmatpush1.bf16.msra.mxu0 %v1346
        %1361 = vmatprep.subr.bf16.mxu0 0
        %1362 = vmatpush1.bf16.msra.mxu0 %v1347
        %1363 = vmatprep.subr.bf16.mxu0 0
        %1364 = vmatpush1.bf16.msra.mxu0 %v1348
        %1365 = vmatprep.subr.bf16.mxu0 0
        %1366 = vmatpush1.bf16.msra.mxu0 %v1349
        %1367 = vmatprep.subr.bf16.mxu0 0
        %1368 = vmatpush1.bf16.msra.mxu0 %v1350
        %1369 = vmatprep.subr.bf16.mxu0 0
        %1370 = vmatpush1.bf16.msra.mxu0 0
        %1371 = vmatprep.subr.bf16.mxu0 0
        %1372 = vmatpush1.bf16.msra.mxu0 0
        %1373 = vmatprep.subr.bf16.mxu0 0
        %1374 = vmatpush1.bf16.msra.mxu0 0
        %1375 = vmatprep.subr.bf16.mxu0 0
        %1376 = vmatpush1.bf16.msra.mxu0 0
        %1377 = vmatprep.subr.bf16.mxu0 0
        %1378 = vmatpush1.bf16.msra.mxu0 0
        %1379 = vmatprep.subr.bf16.mxu0 0
        %1380 = vmatpush1.bf16.msra.mxu0 0
        %1381 = vmatprep.subr.bf16.mxu0 0
        %1382 = vmatpush1.bf16.msra.mxu0 0
        %1383 = vmatprep.subr.bf16.mxu0 0
        %1384 = vmatpush1.bf16.msra.mxu0 0
        %1385 = vmatprep.subr.bf16.mxu0 0
        %1386 = vmatpush1.bf16.msra.mxu0 0
        %1387 = vmatprep.subr.bf16.mxu0 0
        %1388 = vmatpush1.bf16.msra.mxu0 0
        %1389 = vmatprep.mubr.bf16.mxu0 0
        %1390 = vmatmul.mubr.bf16.gmra.mrb[0].mxu0 %v981
        %v1391 = vpop.f32.mrb[0].mxu0
        %v1392 = vadd.f32 0.0, %v1391
        %v1393 = vpop.f32.mrb[0].mxu0
        %v1394 = vpop.f32.mrb[0].mxu0
        %v1395 = vadd.f32 0.0, %v1394
        %v1396 = vpop.f32.mrb[0].mxu0
        %1397 = vmatprep.mubr.bf16.mxu0 0
        %1398 = vmatmul.mubr.bf16.gmra.mrb[0].mxu0 %v984
        %v1399 = vpop.f32.mrb[0].mxu0
        %v1400 = vadd.f32 0.0, %v1399
        %v1401 = vpop.f32.mrb[0].mxu0
        %v1402 = vpop.f32.mrb[0].mxu0
        %v1403 = vadd.f32 0.0, %v1402
        %v1404 = vpop.f32.mrb[0].mxu0
        %1405 = vmatprep.mubr.bf16.mxu0 0
        %1406 = vmatmul.mubr.bf16.gmra.mrb[0].mxu0 %v987
        %v1407 = vpop.f32.mrb[0].mxu0
        %v1408 = vadd.f32 0.0, %v1407
        %v1409 = vpop.f32.mrb[0].mxu0
        %v1410 = vpop.f32.mrb[0].mxu0
        %v1411 = vadd.f32 0.0, %v1410
        %v1412 = vpop.f32.mrb[0].mxu0
        %1413 = vmatprep.mubr.bf16.mxu0 0
        %1414 = vmatmul.mubr.bf16.gmra.mrb[0].mxu0 %v990
        %v1415 = vpop.f32.mrb[0].mxu0
        %v1416 = vadd.f32 0.0, %v1415
        %v1417 = vpop.f32.mrb[0].mxu0
        %v1418 = vpop.f32.mrb[0].mxu0
        %v1419 = vadd.f32 0.0, %v1418
        %v1420 = vpop.f32.mrb[0].mxu0
        %1421 = vdwg.mxu0
        %v1434 = vunpack.c.l.b16 %v1296
        %v1435 = vunpack.c.l.b16 %v1297
        %v1436 = vunpack.c.l.b16 %v1298
        %v1437 = vunpack.c.l.b16 %v1299
        %v1438 = vunpack.c.l.b16 %v1300
        %v1439 = vunpack.c.l.b16 %v1301
        %v1440 = vunpack.c.l.b16 %v1302
        %v1441 = vunpack.c.l.b16 %v1303
        %v1442 = vunpack.c.l.b16 %v1304
        %v1443 = vunpack.c.l.b16 %v1305
        %v1444 = vunpack.c.l.b16 %v1306
        %v1445 = vunpack.c.l.b16 %v1307
        %v1446 = vpack.c.b16 %v1435, %v1434
        %v1447 = vpack.c.b16 %v1437, %v1436
        %v1448 = vpack.c.b16 %v1439, %v1438
        %v1449 = vpack.c.b16 %v1441, %v1440
        %v1450 = vpack.c.b16 %v1443, %v1442
        %v1451 = vpack.c.b16 %v1445, %v1444
        %1458 = vmatprep.subr.bf16.mxu0 0
        %1459 = vmatpush1.bf16.msra.mxu0 %v1446
        %1460 = vmatprep.subr.bf16.mxu0 0
        %1461 = vmatpush1.bf16.msra.mxu0 %v1447
        %1462 = vmatprep.subr.bf16.mxu0 0
        %1463 = vmatpush1.bf16.msra.mxu0 %v1448
        %1464 = vmatprep.subr.bf16.mxu0 0
        %1465 = vmatpush1.bf16.msra.mxu0 %v1449
        %1466 = vmatprep.subr.bf16.mxu0 0
        %1467 = vmatpush1.bf16.msra.mxu0 %v1450
        %1468 = vmatprep.subr.bf16.mxu0 0
        %1469 = vmatpush1.bf16.msra.mxu0 %v1451
        %1470 = vmatprep.subr.bf16.mxu0 0
        %1471 = vmatpush1.bf16.msra.mxu0 0
        %1472 = vmatprep.subr.bf16.mxu0 0
        %1473 = vmatpush1.bf16.msra.mxu0 0
        %1474 = vmatprep.subr.bf16.mxu0 0
        %1475 = vmatpush1.bf16.msra.mxu0 0
        %1476 = vmatprep.subr.bf16.mxu0 0
        %1477 = vmatpush1.bf16.msra.mxu0 0
        %1478 = vmatprep.subr.bf16.mxu0 0
        %1479 = vmatpush1.bf16.msra.mxu0 0
        %1480 = vmatprep.subr.bf16.mxu0 0
        %1481 = vmatpush1.bf16.msra.mxu0 0
        %1482 = vmatprep.subr.bf16.mxu0 0
        %1483 = vmatpush1.bf16.msra.mxu0 0
        %1484 = vmatprep.subr.bf16.mxu0 0
        %1485 = vmatpush1.bf16.msra.mxu0 0
        %1486 = vmatprep.subr.bf16.mxu0 0
        %1487 = vmatpush1.bf16.msra.mxu0 0
        %1488 = vmatprep.subr.bf16.mxu0 0
        %1489 = vmatpush1.bf16.msra.mxu0 0
        %1490 = vmatprep.mubr.bf16.mxu0 0
        %1491 = vmatmul.mubr.bf16.gmra.mrb[0].mxu0 %v1094
        %v1492 = vpop.f32.mrb[0].mxu0
        %v1493 = vadd.f32 %v1392, %v1492
        %v1494 = vpop.f32.mrb[0].mxu0
        %v1495 = vpop.f32.mrb[0].mxu0
        %v1496 = vadd.f32 %v1395, %v1495
        %v1497 = vpop.f32.mrb[0].mxu0
        %1498 = vmatprep.mubr.bf16.mxu0 0
        %1499 = vmatmul.mubr.bf16.gmra.mrb[0].mxu0 %v1097
        %v1500 = vpop.f32.mrb[0].mxu0
        %v1501 = vadd.f32 %v1400, %v1500
        %v1502 = vpop.f32.mrb[0].mxu0
        %v1503 = vpop.f32.mrb[0].mxu0
        %v1504 = vadd.f32 %v1403, %v1503
        %v1505 = vpop.f32.mrb[0].mxu0
        %1506 = vmatprep.mubr.bf16.mxu0 0
        %1507 = vmatmul.mubr.bf16.gmra.mrb[0].mxu0 %v1100
        %v1508 = vpop.f32.mrb[0].mxu0
        %v1509 = vadd.f32 %v1408, %v1508
        %v1510 = vpop.f32.mrb[0].mxu0
        %v1511 = vpop.f32.mrb[0].mxu0
        %v1512 = vadd.f32 %v1411, %v1511
        %v1513 = vpop.f32.mrb[0].mxu0
        %1514 = vmatprep.mubr.bf16.mxu0 0
        %1515 = vmatmul.mubr.bf16.gmra.mrb[0].mxu0 %v1103
        %v1516 = vpop.f32.mrb[0].mxu0
        %v1517 = vadd.f32 %v1416, %v1516
        %v1518 = vpop.f32.mrb[0].mxu0
        %v1519 = vpop.f32.mrb[0].mxu0
        %v1520 = vadd.f32 %v1419, %v1519
        %v1521 = vpop.f32.mrb[0].mxu0
        %1522 = vdwg.mxu0
        %s1523 = scalar_lea.vmem %s5, 336
        %v1524 = vld [vmem:[%s1523] sm:$0xf]
        %v1525 = vld [vmem:[%s1523 + $0x4] sm:$0xf]
        %v1526 = vld [vmem:[%s1523 + $0x8] sm:$0xf]
        %v1527 = vld [vmem:[%s1523 + $0xc] sm:$0xf]
        %v1528 = vld [vmem:[%s1523 + $0x10] sm:$0xf]
        %v1529 = vld [vmem:[%s1523 + $0x14] sm:$0xf]
        %v1530 = vld [vmem:[%s1523 + $0x18] sm:$0xf]
        %v1531 = vld [vmem:[%s1523 + $0x1c] sm:$0xf]
        %v1532 = vld [vmem:[%s1523 + $0x20] sm:$0xf]
        %v1533 = vld [vmem:[%s1523 + $0x24] sm:$0xf]
        %v1534 = vld [vmem:[%s1523 + $0x28] sm:$0xf]
        %v1535 = vld [vmem:[%s1523 + $0x2c] sm:$0xf]
        %v1548 = vunpack.c.l.b16 %v1524
        %v1549 = vunpack.c.l.b16 %v1525
        %v1550 = vunpack.c.l.b16 %v1526
        %v1551 = vunpack.c.l.b16 %v1527
        %v1552 = vunpack.c.l.b16 %v1528
        %v1553 = vunpack.c.l.b16 %v1529
        %v1554 = vunpack.c.l.b16 %v1530
        %v1555 = vunpack.c.l.b16 %v1531
        %v1556 = vunpack.c.l.b16 %v1532
        %v1557 = vunpack.c.l.b16 %v1533
        %v1558 = vunpack.c.l.b16 %v1534
        %v1559 = vunpack.c.l.b16 %v1535
        %v1560 = vpack.c.b16 %v1549, %v1548
        %v1561 = vpack.c.b16 %v1551, %v1550
        %v1562 = vpack.c.b16 %v1553, %v1552
        %v1563 = vpack.c.b16 %v1555, %v1554
        %v1564 = vpack.c.b16 %v1557, %v1556
        %v1565 = vpack.c.b16 %v1559, %v1558
        %1572 = vmatprep.subr.bf16.mxu0 0
        %1573 = vmatpush1.bf16.msra.mxu0 %v1560
        %1574 = vmatprep.subr.bf16.mxu0 0
        %1575 = vmatpush1.bf16.msra.mxu0 %v1561
        %1576 = vmatprep.subr.bf16.mxu0 0
        %1577 = vmatpush1.bf16.msra.mxu0 %v1562
        %1578 = vmatprep.subr.bf16.mxu0 0
        %1579 = vmatpush1.bf16.msra.mxu0 %v1563
        %1580 = vmatprep.subr.bf16.mxu0 0
        %1581 = vmatpush1.bf16.msra.mxu0 %v1564
        %1582 = vmatprep.subr.bf16.mxu0 0
        %1583 = vmatpush1.bf16.msra.mxu0 %v1565
        %1584 = vmatprep.subr.bf16.mxu0 0
        %1585 = vmatpush1.bf16.msra.mxu0 0
        %1586 = vmatprep.subr.bf16.mxu0 0
        %1587 = vmatpush1.bf16.msra.mxu0 0
        %1588 = vmatprep.subr.bf16.mxu0 0
        %1589 = vmatpush1.bf16.msra.mxu0 0
        %1590 = vmatprep.subr.bf16.mxu0 0
        %1591 = vmatpush1.bf16.msra.mxu0 0
        %1592 = vmatprep.subr.bf16.mxu0 0
        %1593 = vmatpush1.bf16.msra.mxu0 0
        %1594 = vmatprep.subr.bf16.mxu0 0
        %1595 = vmatpush1.bf16.msra.mxu0 0
        %1596 = vmatprep.subr.bf16.mxu0 0
        %1597 = vmatpush1.bf16.msra.mxu0 0
        %1598 = vmatprep.subr.bf16.mxu0 0
        %1599 = vmatpush1.bf16.msra.mxu0 0
        %1600 = vmatprep.subr.bf16.mxu0 0
        %1601 = vmatpush1.bf16.msra.mxu0 0
        %1602 = vmatprep.subr.bf16.mxu0 0
        %1603 = vmatpush1.bf16.msra.mxu0 0
        %1604 = vmatprep.mubr.bf16.mxu0 0
        %1605 = vmatmul.mubr.bf16.gmra.mrb[0].mxu0 %v1097
        %v1606 = vpop.f32.mrb[0].mxu0
        %v1607 = vadd.f32 0.0, %v1606
        %v1608 = vpop.f32.mrb[0].mxu0
        %v1609 = vpop.f32.mrb[0].mxu0
        %v1610 = vadd.f32 0.0, %v1609
        %v1611 = vpop.f32.mrb[0].mxu0
        %1612 = vmatprep.mubr.bf16.mxu0 0
        %1613 = vmatmul.mubr.bf16.gmra.mrb[0].mxu0 %v1100
        %v1614 = vpop.f32.mrb[0].mxu0
        %v1615 = vadd.f32 0.0, %v1614
        %v1616 = vpop.f32.mrb[0].mxu0
        %v1617 = vpop.f32.mrb[0].mxu0
        %v1618 = vadd.f32 0.0, %v1617
        %v1619 = vpop.f32.mrb[0].mxu0
        %1620 = vmatprep.mubr.bf16.mxu0 0
        %1621 = vmatmul.mubr.bf16.gmra.mrb[0].mxu0 %v1103
        %v1622 = vpop.f32.mrb[0].mxu0
        %v1623 = vadd.f32 0.0, %v1622
        %v1624 = vpop.f32.mrb[0].mxu0
        %v1625 = vpop.f32.mrb[0].mxu0
        %v1626 = vadd.f32 0.0, %v1625
        %v1627 = vpop.f32.mrb[0].mxu0
        %1628 = vmatprep.mubr.bf16.mxu0 0
        %1629 = vmatmul.mubr.bf16.gmra.mrb[0].mxu0 %v1220
        %v1630 = vpop.f32.mrb[0].mxu0
        %v1631 = vadd.f32 0.0, %v1630
        %v1632 = vpop.f32.mrb[0].mxu0
        %v1633 = vpop.f32.mrb[0].mxu0
        %v1634 = vadd.f32 0.0, %v1633
        %v1635 = vpop.f32.mrb[0].mxu0
        %1636 = vdwg.mxu0
        %v1637 = vadd.f32 %v1493, %v1607
        %v1638 = vadd.f32 %v1496, %v1610
        %v1639 = vadd.f32 %v1501, %v1615
        %v1640 = vadd.f32 %v1504, %v1618
        %v1641 = vadd.f32 %v1509, %v1623
        %v1642 = vadd.f32 %v1512, %v1626
        %v1643 = vadd.f32 %v1517, %v1631
        %v1644 = vadd.f32 %v1520, %v1634
        %vm1645 = vcmask 523264
        %v1647 = vsel %vm1645, %v873, 0
        %v1650 = vsel %vm1645, %v874, 0
        %v1653 = vsel %vm1645, %v875, 0
        %v1656 = vsel %vm1645, %v876, 0
        %v1659 = vsel %vm1645, %v877, 0
        %v1662 = vsel %vm1645, %v878, 0
        %v1665 = vsel %vm1645, %v879, 0
        %v1668 = vsel %vm1645, %v880, 0
        %1670 = vmatprep.subr.mxu0 0.0
        %1671 = vmatpush1.msra.mxu0 %v1287
        %1672 = vmatprep.subr.mxu0 0.0
        %1673 = vmatpush1.msra.mxu0 %v1288
        %1674 = vmatprep.subr.mxu0 0.0
        %1675 = vmatpush1.msra.mxu0 %v1289
        %1676 = vmatprep.subr.mxu0 0.0
        %1677 = vmatpush1.msra.mxu0 %v1290
        %1678 = vmatprep.subr.mxu0 0.0
        %1679 = vmatpush1.msra.mxu0 %v1291
        %1680 = vmatprep.subr.mxu0 0.0
        %1681 = vmatpush1.msra.mxu0 %v1292
        %1682 = vmatprep.subr.mxu0 0.0
        %1683 = vmatpush1.msra.mxu0 %v1293
        %1684 = vmatprep.subr.mxu0 0.0
        %1685 = vmatpush1.msra.mxu0 %v1294
        %1686 = vmatprep.subr.mxu0 0.0
        %1687 = vmatpush1.msra.mxu0 0.0
        %1688 = vmatprep.subr.mxu0 0.0
        %1689 = vmatpush1.msra.mxu0 0.0
        %1690 = vmatprep.subr.mxu0 0.0
        %1691 = vmatpush1.msra.mxu0 0.0
        %1692 = vmatprep.subr.mxu0 0.0
        %1693 = vmatpush1.msra.mxu0 0.0
        %1694 = vmatprep.subr.mxu0 0.0
        %1695 = vmatpush1.msra.mxu0 0.0
        %1696 = vmatprep.subr.mxu0 0.0
        %1697 = vmatpush1.msra.mxu0 0.0
        %1698 = vmatprep.subr.mxu0 0.0
        %1699 = vmatpush1.msra.mxu0 0.0
        %1700 = vmatprep.subr.mxu0 0.0
        %1701 = vmatpush1.msra.mxu0 0.0
        %1702 = vmatprep.subr.mxu0 0.0
        %1703 = vmatpush1.msra.mxu0 0.0
        %1704 = vmatprep.subr.mxu0 0.0
        %1705 = vmatpush1.msra.mxu0 0.0
        %1706 = vmatprep.subr.mxu0 0.0
        %1707 = vmatpush1.msra.mxu0 0.0
        %1708 = vmatprep.subr.mxu0 0.0
        %1709 = vmatpush1.msra.mxu0 0.0
        %1710 = vmatprep.subr.mxu0 0.0
        %1711 = vmatpush1.msra.mxu0 0.0
        %1712 = vmatprep.subr.mxu0 0.0
        %1713 = vmatpush1.msra.mxu0 0.0
        %1714 = vmatprep.subr.mxu0 0.0
        %1715 = vmatpush1.msra.mxu0 0.0
        %1716 = vmatprep.subr.mxu0 0.0
        %1717 = vmatpush1.msra.mxu0 0.0
        %1718 = vmatprep.subr.mxu0 0.0
        %1719 = vmatpush1.msra.mxu0 0.0
        %1720 = vmatprep.subr.mxu0 0.0
        %1721 = vmatpush1.msra.mxu0 0.0
        %1722 = vmatprep.subr.mxu0 0.0
        %1723 = vmatpush1.msra.mxu0 0.0
        %1724 = vmatprep.subr.mxu0 0.0
        %1725 = vmatpush1.msra.mxu0 0.0
        %1726 = vmatprep.subr.mxu0 0.0
        %1727 = vmatpush1.msra.mxu0 0.0
        %1728 = vmatprep.subr.mxu0 0.0
        %1729 = vmatpush1.msra.mxu0 0.0
        %1730 = vmatprep.subr.mxu0 0.0
        %1731 = vmatpush1.msra.mxu0 0.0
        %1732 = vmatprep.subr.mxu0 0.0
        %1733 = vmatpush1.msra.mxu0 0.0
        %1734 = vmatprep.mubr.f32.mxu0 0.0
        %1735 = vmatmul.mubr.f32.gmra.mrb[0].mxu0 %v1647
        %v1736 = vpop.f32.mrb[0].mxu0
        %v1737 = vadd.f32 %v1637, %v1736
        %v1738 = vpop.f32.mrb[0].mxu0
        %1739 = vmatprep.mubr.f32.mxu0 0.0
        %1740 = vmatmul.mubr.f32.gmra.mrb[0].mxu0 %v1650
        %v1741 = vpop.f32.mrb[0].mxu0
        %v1742 = vadd.f32 %v1638, %v1741
        %v1743 = vpop.f32.mrb[0].mxu0
        %1744 = vmatprep.mubr.f32.mxu0 0.0
        %1745 = vmatmul.mubr.f32.gmra.mrb[0].mxu0 %v1653
        %v1746 = vpop.f32.mrb[0].mxu0
        %v1747 = vadd.f32 %v1639, %v1746
        %v1748 = vpop.f32.mrb[0].mxu0
        %1749 = vmatprep.mubr.f32.mxu0 0.0
        %1750 = vmatmul.mubr.f32.gmra.mrb[0].mxu0 %v1656
        %v1751 = vpop.f32.mrb[0].mxu0
        %v1752 = vadd.f32 %v1640, %v1751
        %v1753 = vpop.f32.mrb[0].mxu0
        %1754 = vmatprep.mubr.f32.mxu0 0.0
        %1755 = vmatmul.mubr.f32.gmra.mrb[0].mxu0 %v1659
        %v1756 = vpop.f32.mrb[0].mxu0
        %v1757 = vadd.f32 %v1641, %v1756
        %v1758 = vpop.f32.mrb[0].mxu0
        %1759 = vmatprep.mubr.f32.mxu0 0.0
        %1760 = vmatmul.mubr.f32.gmra.mrb[0].mxu0 %v1662
        %v1761 = vpop.f32.mrb[0].mxu0
        %v1762 = vadd.f32 %v1642, %v1761
        %v1763 = vpop.f32.mrb[0].mxu0
        %1764 = vmatprep.mubr.f32.mxu0 0.0
        %1765 = vmatmul.mubr.f32.gmra.mrb[0].mxu0 %v1665
        %v1766 = vpop.f32.mrb[0].mxu0
        %v1767 = vadd.f32 %v1643, %v1766
        %v1768 = vpop.f32.mrb[0].mxu0
        %1769 = vmatprep.mubr.f32.mxu0 0.0
        %1770 = vmatmul.mubr.f32.gmra.mrb[0].mxu0 %v1668
        %v1771 = vpop.f32.mrb[0].mxu0
        %v1772 = vadd.f32 %v1644, %v1771
        %v1773 = vpop.f32.mrb[0].mxu0
        %1774 = vdwg.mxu0
        %s1775 = scalar_lea.vmem %s5, 96
        %v1776 = vld [vmem:[%s1775] sm:$0xf]
        %v1777 = vld [vmem:[%s1775 + $0x4] sm:$0xf]
        %v1778 = vld [vmem:[%s1775 + $0x8] sm:$0xf]
        %v1779 = vld [vmem:[%s1775 + $0xc] sm:$0xf]
        %v1780 = vld [vmem:[%s1775 + $0x10] sm:$0xf]
        %v1781 = vld [vmem:[%s1775 + $0x14] sm:$0xf]
        %v1782 = vld [vmem:[%s1775 + $0x18] sm:$0xf]
        %v1783 = vld [vmem:[%s1775 + $0x1c] sm:$0xf]
        %v1784 = vld [vmem:[%s1775 + $0x20] sm:$0xf]
        %v1785 = vld [vmem:[%s1775 + $0x24] sm:$0xf]
        %v1786 = vld [vmem:[%s1775 + $0x28] sm:$0xf]
        %v1787 = vld [vmem:[%s1775 + $0x2c] sm:$0xf]
        %s1788 = scalar_lea.vmem %s5, 240
        %v1789 = vld [vmem:[%s1788] sm:$0xf]
        %v1790 = vld [vmem:[%s1788 + $0x4] sm:$0xf]
        %v1791 = vld [vmem:[%s1788 + $0x8] sm:$0xf]
        %v1792 = vld [vmem:[%s1788 + $0xc] sm:$0xf]
        %v1793 = vld [vmem:[%s1788 + $0x10] sm:$0xf]
        %v1794 = vld [vmem:[%s1788 + $0x14] sm:$0xf]
        %v1795 = vld [vmem:[%s1788 + $0x18] sm:$0xf]
        %v1796 = vld [vmem:[%s1788 + $0x1c] sm:$0xf]
        %v1797 = vld [vmem:[%s1788 + $0x20] sm:$0xf]
        %v1798 = vld [vmem:[%s1788 + $0x24] sm:$0xf]
        %v1799 = vld [vmem:[%s1788 + $0x28] sm:$0xf]
        %v1800 = vld [vmem:[%s1788 + $0x2c] sm:$0xf]
        %v1813 = vunpack.c.l.b16 %v1789
        %v1814 = vunpack.c.l.b16 %v1790
        %v1815 = vunpack.c.l.b16 %v1791
        %v1816 = vunpack.c.l.b16 %v1792
        %v1817 = vunpack.c.l.b16 %v1793
        %v1818 = vunpack.c.l.b16 %v1794
        %v1819 = vunpack.c.l.b16 %v1795
        %v1820 = vunpack.c.l.b16 %v1796
        %v1821 = vunpack.c.l.b16 %v1797
        %v1822 = vunpack.c.l.b16 %v1798
        %v1823 = vunpack.c.l.b16 %v1799
        %v1824 = vunpack.c.l.b16 %v1800
        %v1825 = vpack.c.b16 %v1814, %v1813
        %v1826 = vpack.c.b16 %v1816, %v1815
        %v1827 = vpack.c.b16 %v1818, %v1817
        %v1828 = vpack.c.b16 %v1820, %v1819
        %v1829 = vpack.c.b16 %v1822, %v1821
        %v1830 = vpack.c.b16 %v1824, %v1823
        %1837 = vmatprep.subr.bf16.mxu0 0
        %1838 = vmatpush1.bf16.msra.mxu0 %v1825
        %1839 = vmatprep.subr.bf16.mxu0 0
        %1840 = vmatpush1.bf16.msra.mxu0 %v1826
        %1841 = vmatprep.subr.bf16.mxu0 0
        %1842 = vmatpush1.bf16.msra.mxu0 %v1827
        %1843 = vmatprep.subr.bf16.mxu0 0
        %1844 = vmatpush1.bf16.msra.mxu0 %v1828
        %1845 = vmatprep.subr.bf16.mxu0 0
        %1846 = vmatpush1.bf16.msra.mxu0 %v1829
        %1847 = vmatprep.subr.bf16.mxu0 0
        %1848 = vmatpush1.bf16.msra.mxu0 %v1830
        %1849 = vmatprep.subr.bf16.mxu0 0
        %1850 = vmatpush1.bf16.msra.mxu0 0
        %1851 = vmatprep.subr.bf16.mxu0 0
        %1852 = vmatpush1.bf16.msra.mxu0 0
        %1853 = vmatprep.subr.bf16.mxu0 0
        %1854 = vmatpush1.bf16.msra.mxu0 0
        %1855 = vmatprep.subr.bf16.mxu0 0
        %1856 = vmatpush1.bf16.msra.mxu0 0
        %1857 = vmatprep.subr.bf16.mxu0 0
        %1858 = vmatpush1.bf16.msra.mxu0 0
        %1859 = vmatprep.subr.bf16.mxu0 0
        %1860 = vmatpush1.bf16.msra.mxu0 0
        %1861 = vmatprep.subr.bf16.mxu0 0
        %1862 = vmatpush1.bf16.msra.mxu0 0
        %1863 = vmatprep.subr.bf16.mxu0 0
        %1864 = vmatpush1.bf16.msra.mxu0 0
        %1865 = vmatprep.subr.bf16.mxu0 0
        %1866 = vmatpush1.bf16.msra.mxu0 0
        %1867 = vmatprep.subr.bf16.mxu0 0
        %1868 = vmatpush1.bf16.msra.mxu0 0
        %1869 = vmatprep.mubr.bf16.mxu0 0
        %1870 = vmatmul.mubr.bf16.gmra.mrb[0].mxu0 %v981
        %v1871 = vpop.f32.mrb[0].mxu0
        %v1872 = vadd.f32 0.0, %v1871
        %v1873 = vpop.f32.mrb[0].mxu0
        %v1874 = vpop.f32.mrb[0].mxu0
        %v1875 = vadd.f32 0.0, %v1874
        %v1876 = vpop.f32.mrb[0].mxu0
        %1877 = vmatprep.mubr.bf16.mxu0 0
        %1878 = vmatmul.mubr.bf16.gmra.mrb[0].mxu0 %v984
        %v1879 = vpop.f32.mrb[0].mxu0
        %v1880 = vadd.f32 0.0, %v1879
        %v1881 = vpop.f32.mrb[0].mxu0
        %v1882 = vpop.f32.mrb[0].mxu0
        %v1883 = vadd.f32 0.0, %v1882
        %v1884 = vpop.f32.mrb[0].mxu0
        %1885 = vmatprep.mubr.bf16.mxu0 0
        %1886 = vmatmul.mubr.bf16.gmra.mrb[0].mxu0 %v987
        %v1887 = vpop.f32.mrb[0].mxu0
        %v1888 = vadd.f32 0.0, %v1887
        %v1889 = vpop.f32.mrb[0].mxu0
        %v1890 = vpop.f32.mrb[0].mxu0
        %v1891 = vadd.f32 0.0, %v1890
        %v1892 = vpop.f32.mrb[0].mxu0
        %1893 = vmatprep.mubr.bf16.mxu0 0
        %1894 = vmatmul.mubr.bf16.gmra.mrb[0].mxu0 %v990
        %v1895 = vpop.f32.mrb[0].mxu0
        %v1896 = vadd.f32 0.0, %v1895
        %v1897 = vpop.f32.mrb[0].mxu0
        %v1898 = vpop.f32.mrb[0].mxu0
        %v1899 = vadd.f32 0.0, %v1898
        %v1900 = vpop.f32.mrb[0].mxu0
        %1901 = vdwg.mxu0
        %v1914 = vunpack.c.l.b16 %v1776
        %v1915 = vunpack.c.l.b16 %v1777
        %v1916 = vunpack.c.l.b16 %v1778
        %v1917 = vunpack.c.l.b16 %v1779
        %v1918 = vunpack.c.l.b16 %v1780
        %v1919 = vunpack.c.l.b16 %v1781
        %v1920 = vunpack.c.l.b16 %v1782
        %v1921 = vunpack.c.l.b16 %v1783
        %v1922 = vunpack.c.l.b16 %v1784
        %v1923 = vunpack.c.l.b16 %v1785
        %v1924 = vunpack.c.l.b16 %v1786
        %v1925 = vunpack.c.l.b16 %v1787
        %v1926 = vpack.c.b16 %v1915, %v1914
        %v1927 = vpack.c.b16 %v1917, %v1916
        %v1928 = vpack.c.b16 %v1919, %v1918
        %v1929 = vpack.c.b16 %v1921, %v1920
        %v1930 = vpack.c.b16 %v1923, %v1922
        %v1931 = vpack.c.b16 %v1925, %v1924
        %1938 = vmatprep.subr.bf16.mxu0 0
        %1939 = vmatpush1.bf16.msra.mxu0 %v1926
        %1940 = vmatprep.subr.bf16.mxu0 0
        %1941 = vmatpush1.bf16.msra.mxu0 %v1927
        %1942 = vmatprep.subr.bf16.mxu0 0
        %1943 = vmatpush1.bf16.msra.mxu0 %v1928
        %1944 = vmatprep.subr.bf16.mxu0 0
        %1945 = vmatpush1.bf16.msra.mxu0 %v1929
        %1946 = vmatprep.subr.bf16.mxu0 0
        %1947 = vmatpush1.bf16.msra.mxu0 %v1930
        %1948 = vmatprep.subr.bf16.mxu0 0
        %1949 = vmatpush1.bf16.msra.mxu0 %v1931
        %1950 = vmatprep.subr.bf16.mxu0 0
        %1951 = vmatpush1.bf16.msra.mxu0 0
        %1952 = vmatprep.subr.bf16.mxu0 0
        %1953 = vmatpush1.bf16.msra.mxu0 0
        %1954 = vmatprep.subr.bf16.mxu0 0
        %1955 = vmatpush1.bf16.msra.mxu0 0
        %1956 = vmatprep.subr.bf16.mxu0 0
        %1957 = vmatpush1.bf16.msra.mxu0 0
        %1958 = vmatprep.subr.bf16.mxu0 0
        %1959 = vmatpush1.bf16.msra.mxu0 0
        %1960 = vmatprep.subr.bf16.mxu0 0
        %1961 = vmatpush1.bf16.msra.mxu0 0
        %1962 = vmatprep.subr.bf16.mxu0 0
        %1963 = vmatpush1.bf16.msra.mxu0 0
        %1964 = vmatprep.subr.bf16.mxu0 0
        %1965 = vmatpush1.bf16.msra.mxu0 0
        %1966 = vmatprep.subr.bf16.mxu0 0
        %1967 = vmatpush1.bf16.msra.mxu0 0
        %1968 = vmatprep.subr.bf16.mxu0 0
        %1969 = vmatpush1.bf16.msra.mxu0 0
        %1970 = vmatprep.mubr.bf16.mxu0 0
        %1971 = vmatmul.mubr.bf16.gmra.mrb[0].mxu0 %v1094
        %v1972 = vpop.f32.mrb[0].mxu0
        %v1973 = vadd.f32 %v1872, %v1972
        %v1974 = vpop.f32.mrb[0].mxu0
        %v1975 = vpop.f32.mrb[0].mxu0
        %v1976 = vadd.f32 %v1875, %v1975
        %v1977 = vpop.f32.mrb[0].mxu0
        %1978 = vmatprep.mubr.bf16.mxu0 0
        %1979 = vmatmul.mubr.bf16.gmra.mrb[0].mxu0 %v1097
        %v1980 = vpop.f32.mrb[0].mxu0
        %v1981 = vadd.f32 %v1880, %v1980
        %v1982 = vpop.f32.mrb[0].mxu0
        %v1983 = vpop.f32.mrb[0].mxu0
        %v1984 = vadd.f32 %v1883, %v1983
        %v1985 = vpop.f32.mrb[0].mxu0
        %1986 = vmatprep.mubr.bf16.mxu0 0
        %1987 = vmatmul.mubr.bf16.gmra.mrb[0].mxu0 %v1100
        %v1988 = vpop.f32.mrb[0].mxu0
        %v1989 = vadd.f32 %v1888, %v1988
        %v1990 = vpop.f32.mrb[0].mxu0
        %v1991 = vpop.f32.mrb[0].mxu0
        %v1992 = vadd.f32 %v1891, %v1991
        %v1993 = vpop.f32.mrb[0].mxu0
        %1994 = vmatprep.mubr.bf16.mxu0 0
        %1995 = vmatmul.mubr.bf16.gmra.mrb[0].mxu0 %v1103
        %v1996 = vpop.f32.mrb[0].mxu0
        %v1997 = vadd.f32 %v1896, %v1996
        %v1998 = vpop.f32.mrb[0].mxu0
        %v1999 = vpop.f32.mrb[0].mxu0
        %v2000 = vadd.f32 %v1899, %v1999
        %v2001 = vpop.f32.mrb[0].mxu0
        %2002 = vdwg.mxu0
        %s2003 = scalar_lea.vmem %s5, 384
        %v2004 = vld [vmem:[%s2003] sm:$0xf]
        %v2005 = vld [vmem:[%s2003 + $0x4] sm:$0xf]
        %v2006 = vld [vmem:[%s2003 + $0x8] sm:$0xf]
        %v2007 = vld [vmem:[%s2003 + $0xc] sm:$0xf]
        %v2008 = vld [vmem:[%s2003 + $0x10] sm:$0xf]
        %v2009 = vld [vmem:[%s2003 + $0x14] sm:$0xf]
        %v2010 = vld [vmem:[%s2003 + $0x18] sm:$0xf]
        %v2011 = vld [vmem:[%s2003 + $0x1c] sm:$0xf]
        %v2012 = vld [vmem:[%s2003 + $0x20] sm:$0xf]
        %v2013 = vld [vmem:[%s2003 + $0x24] sm:$0xf]
        %v2014 = vld [vmem:[%s2003 + $0x28] sm:$0xf]
        %v2015 = vld [vmem:[%s2003 + $0x2c] sm:$0xf]
        %v2028 = vunpack.c.l.b16 %v2004
        %v2029 = vunpack.c.l.b16 %v2005
        %v2030 = vunpack.c.l.b16 %v2006
        %v2031 = vunpack.c.l.b16 %v2007
        %v2032 = vunpack.c.l.b16 %v2008
        %v2033 = vunpack.c.l.b16 %v2009
        %v2034 = vunpack.c.l.b16 %v2010
        %v2035 = vunpack.c.l.b16 %v2011
        %v2036 = vunpack.c.l.b16 %v2012
        %v2037 = vunpack.c.l.b16 %v2013
        %v2038 = vunpack.c.l.b16 %v2014
        %v2039 = vunpack.c.l.b16 %v2015
        %v2040 = vpack.c.b16 %v2029, %v2028
        %v2041 = vpack.c.b16 %v2031, %v2030
        %v2042 = vpack.c.b16 %v2033, %v2032
        %v2043 = vpack.c.b16 %v2035, %v2034
        %v2044 = vpack.c.b16 %v2037, %v2036
        %v2045 = vpack.c.b16 %v2039, %v2038
        %2052 = vmatprep.subr.bf16.mxu0 0
        %2053 = vmatpush1.bf16.msra.mxu0 %v2040
        %2054 = vmatprep.subr.bf16.mxu0 0
        %2055 = vmatpush1.bf16.msra.mxu0 %v2041
        %2056 = vmatprep.subr.bf16.mxu0 0
        %2057 = vmatpush1.bf16.msra.mxu0 %v2042
        %2058 = vmatprep.subr.bf16.mxu0 0
        %2059 = vmatpush1.bf16.msra.mxu0 %v2043
        %2060 = vmatprep.subr.bf16.mxu0 0
        %2061 = vmatpush1.bf16.msra.mxu0 %v2044
        %2062 = vmatprep.subr.bf16.mxu0 0
        %2063 = vmatpush1.bf16.msra.mxu0 %v2045
        %2064 = vmatprep.subr.bf16.mxu0 0
        %2065 = vmatpush1.bf16.msra.mxu0 0
        %2066 = vmatprep.subr.bf16.mxu0 0
        %2067 = vmatpush1.bf16.msra.mxu0 0
        %2068 = vmatprep.subr.bf16.mxu0 0
        %2069 = vmatpush1.bf16.msra.mxu0 0
        %2070 = vmatprep.subr.bf16.mxu0 0
        %2071 = vmatpush1.bf16.msra.mxu0 0
        %2072 = vmatprep.subr.bf16.mxu0 0
        %2073 = vmatpush1.bf16.msra.mxu0 0
        %2074 = vmatprep.subr.bf16.mxu0 0
        %2075 = vmatpush1.bf16.msra.mxu0 0
        %2076 = vmatprep.subr.bf16.mxu0 0
        %2077 = vmatpush1.bf16.msra.mxu0 0
        %2078 = vmatprep.subr.bf16.mxu0 0
        %2079 = vmatpush1.bf16.msra.mxu0 0
        %2080 = vmatprep.subr.bf16.mxu0 0
        %2081 = vmatpush1.bf16.msra.mxu0 0
        %2082 = vmatprep.subr.bf16.mxu0 0
        %2083 = vmatpush1.bf16.msra.mxu0 0
        %2084 = vmatprep.mubr.bf16.mxu0 0
        %2085 = vmatmul.mubr.bf16.gmra.mrb[0].mxu0 %v1097
        %v2086 = vpop.f32.mrb[0].mxu0
        %v2087 = vadd.f32 0.0, %v2086
        %v2088 = vpop.f32.mrb[0].mxu0
        %v2089 = vpop.f32.mrb[0].mxu0
        %v2090 = vadd.f32 0.0, %v2089
        %v2091 = vpop.f32.mrb[0].mxu0
        %2092 = vmatprep.mubr.bf16.mxu0 0
        %2093 = vmatmul.mubr.bf16.gmra.mrb[0].mxu0 %v1100
        %v2094 = vpop.f32.mrb[0].mxu0
        %v2095 = vadd.f32 0.0, %v2094
        %v2096 = vpop.f32.mrb[0].mxu0
        %v2097 = vpop.f32.mrb[0].mxu0
        %v2098 = vadd.f32 0.0, %v2097
        %v2099 = vpop.f32.mrb[0].mxu0
        %2100 = vmatprep.mubr.bf16.mxu0 0
        %2101 = vmatmul.mubr.bf16.gmra.mrb[0].mxu0 %v1103
        %v2102 = vpop.f32.mrb[0].mxu0
        %v2103 = vadd.f32 0.0, %v2102
        %v2104 = vpop.f32.mrb[0].mxu0
        %v2105 = vpop.f32.mrb[0].mxu0
        %v2106 = vadd.f32 0.0, %v2105
        %v2107 = vpop.f32.mrb[0].mxu0
        %2108 = vmatprep.mubr.bf16.mxu0 0
        %2109 = vmatmul.mubr.bf16.gmra.mrb[0].mxu0 %v1220
        %v2110 = vpop.f32.mrb[0].mxu0
        %v2111 = vadd.f32 0.0, %v2110
        %v2112 = vpop.f32.mrb[0].mxu0
        %v2113 = vpop.f32.mrb[0].mxu0
        %v2114 = vadd.f32 0.0, %v2113
        %v2115 = vpop.f32.mrb[0].mxu0
        %2116 = vdwg.mxu0
        %v2117 = vadd.f32 %v1973, %v2087
        %v2118 = vadd.f32 %v1976, %v2090
        %v2119 = vadd.f32 %v1981, %v2095
        %v2120 = vadd.f32 %v1984, %v2098
        %v2121 = vadd.f32 %v1989, %v2103
        %v2122 = vadd.f32 %v1992, %v2106
        %v2123 = vadd.f32 %v1997, %v2111
        %v2124 = vadd.f32 %v2000, %v2114
        %v2126 = vsel %vm1645, %v881, 0
        %v2129 = vsel %vm1645, %v882, 0
        %v2132 = vsel %vm1645, %v883, 0
        %v2135 = vsel %vm1645, %v884, 0
        %v2138 = vsel %vm1645, %v885, 0
        %v2141 = vsel %vm1645, %v886, 0
        %v2144 = vsel %vm1645, %v887, 0
        %v2147 = vsel %vm1645, %v888, 0
        %2149 = vmatprep.subr.mxu0 0.0
        %2150 = vmatpush1.msra.mxu0 %v2117
        %2151 = vmatprep.subr.mxu0 0.0
        %2152 = vmatpush1.msra.mxu0 %v2118
        %2153 = vmatprep.subr.mxu0 0.0
        %2154 = vmatpush1.msra.mxu0 %v2119
        %2155 = vmatprep.subr.mxu0 0.0
        %2156 = vmatpush1.msra.mxu0 %v2120
        %2157 = vmatprep.subr.mxu0 0.0
        %2158 = vmatpush1.msra.mxu0 %v2121
        %2159 = vmatprep.subr.mxu0 0.0
        %2160 = vmatpush1.msra.mxu0 %v2122
        %2161 = vmatprep.subr.mxu0 0.0
        %2162 = vmatpush1.msra.mxu0 %v2123
        %2163 = vmatprep.subr.mxu0 0.0
        %2164 = vmatpush1.msra.mxu0 %v2124
        %2165 = vmatprep.subr.mxu0 0.0
        %2166 = vmatpush1.msra.mxu0 0.0
        %2167 = vmatprep.subr.mxu0 0.0
        %2168 = vmatpush1.msra.mxu0 0.0
        %2169 = vmatprep.subr.mxu0 0.0
        %2170 = vmatpush1.msra.mxu0 0.0
        %2171 = vmatprep.subr.mxu0 0.0
        %2172 = vmatpush1.msra.mxu0 0.0
        %2173 = vmatprep.subr.mxu0 0.0
        %2174 = vmatpush1.msra.mxu0 0.0
        %2175 = vmatprep.subr.mxu0 0.0
        %2176 = vmatpush1.msra.mxu0 0.0
        %2177 = vmatprep.subr.mxu0 0.0
        %2178 = vmatpush1.msra.mxu0 0.0
        %2179 = vmatprep.subr.mxu0 0.0
        %2180 = vmatpush1.msra.mxu0 0.0
        %2181 = vmatprep.subr.mxu0 0.0
        %2182 = vmatpush1.msra.mxu0 0.0
        %2183 = vmatprep.subr.mxu0 0.0
        %2184 = vmatpush1.msra.mxu0 0.0
        %2185 = vmatprep.subr.mxu0 0.0
        %2186 = vmatpush1.msra.mxu0 0.0
        %2187 = vmatprep.subr.mxu0 0.0
        %2188 = vmatpush1.msra.mxu0 0.0
        %2189 = vmatprep.subr.mxu0 0.0
        %2190 = vmatpush1.msra.mxu0 0.0
        %2191 = vmatprep.subr.mxu0 0.0
        %2192 = vmatpush1.msra.mxu0 0.0
        %2193 = vmatprep.subr.mxu0 0.0
        %2194 = vmatpush1.msra.mxu0 0.0
        %2195 = vmatprep.subr.mxu0 0.0
        %2196 = vmatpush1.msra.mxu0 0.0
        %2197 = vmatprep.subr.mxu0 0.0
        %2198 = vmatpush1.msra.mxu0 0.0
        %2199 = vmatprep.subr.mxu0 0.0
        %2200 = vmatpush1.msra.mxu0 0.0
        %2201 = vmatprep.subr.mxu0 0.0
        %2202 = vmatpush1.msra.mxu0 0.0
        %2203 = vmatprep.subr.mxu0 0.0
        %2204 = vmatpush1.msra.mxu0 0.0
        %2205 = vmatprep.subr.mxu0 0.0
        %2206 = vmatpush1.msra.mxu0 0.0
        %2207 = vmatprep.subr.mxu0 0.0
        %2208 = vmatpush1.msra.mxu0 0.0
        %2209 = vmatprep.subr.mxu0 0.0
        %2210 = vmatpush1.msra.mxu0 0.0
        %2211 = vmatprep.subr.mxu0 0.0
        %2212 = vmatpush1.msra.mxu0 0.0
        %2213 = vmatprep.mubr.f32.mxu0 0.0
        %2214 = vmatmul.mubr.f32.gmra.mrb[0].mxu0 %v2126
        %v2215 = vpop.f32.mrb[0].mxu0
        %v2216 = vadd.f32 0.0, %v2215
        %v2217 = vpop.f32.mrb[0].mxu0
        %2218 = vmatprep.mubr.f32.mxu0 0.0
        %2219 = vmatmul.mubr.f32.gmra.mrb[0].mxu0 %v2129
        %v2220 = vpop.f32.mrb[0].mxu0
        %v2221 = vadd.f32 0.0, %v2220
        %v2222 = vpop.f32.mrb[0].mxu0
        %2223 = vmatprep.mubr.f32.mxu0 0.0
        %2224 = vmatmul.mubr.f32.gmra.mrb[0].mxu0 %v2132
        %v2225 = vpop.f32.mrb[0].mxu0
        %v2226 = vadd.f32 0.0, %v2225
        %v2227 = vpop.f32.mrb[0].mxu0
        %2228 = vmatprep.mubr.f32.mxu0 0.0
        %2229 = vmatmul.mubr.f32.gmra.mrb[0].mxu0 %v2135
        %v2230 = vpop.f32.mrb[0].mxu0
        %v2231 = vadd.f32 0.0, %v2230
        %v2232 = vpop.f32.mrb[0].mxu0
        %2233 = vmatprep.mubr.f32.mxu0 0.0
        %2234 = vmatmul.mubr.f32.gmra.mrb[0].mxu0 %v2138
        %v2235 = vpop.f32.mrb[0].mxu0
        %v2236 = vadd.f32 0.0, %v2235
        %v2237 = vpop.f32.mrb[0].mxu0
        %2238 = vmatprep.mubr.f32.mxu0 0.0
        %2239 = vmatmul.mubr.f32.gmra.mrb[0].mxu0 %v2141
        %v2240 = vpop.f32.mrb[0].mxu0
        %v2241 = vadd.f32 0.0, %v2240
        %v2242 = vpop.f32.mrb[0].mxu0
        %2243 = vmatprep.mubr.f32.mxu0 0.0
        %2244 = vmatmul.mubr.f32.gmra.mrb[0].mxu0 %v2144
        %v2245 = vpop.f32.mrb[0].mxu0
        %v2246 = vadd.f32 0.0, %v2245
        %v2247 = vpop.f32.mrb[0].mxu0
        %2248 = vmatprep.mubr.f32.mxu0 0.0
        %2249 = vmatmul.mubr.f32.gmra.mrb[0].mxu0 %v2147
        %v2250 = vpop.f32.mrb[0].mxu0
        %v2251 = vadd.f32 0.0, %v2250
        %v2252 = vpop.f32.mrb[0].mxu0
        %2253 = vdwg.mxu0
        %v2254 = vadd.f32 %v1737, %v2216
        %v2255 = vadd.f32 %v1742, %v2221
        %v2256 = vadd.f32 %v1747, %v2226
        %v2257 = vadd.f32 %v1752, %v2231
        %v2258 = vadd.f32 %v1757, %v2236
        %v2259 = vadd.f32 %v1762, %v2241
        %v2260 = vadd.f32 %v1767, %v2246
        %v2261 = vadd.f32 %v1772, %v2251
        %v2262 = vld [vmem:[%s6] sm:$0x1]
        %v2264 = vlaneseq
        %v2265 = vshrl.u32 %v2264, 7
        %v2266 = vsub.s32 0, %v2265
        %v2267 = vrot.slane %v2262, %v2266
        %v2269 = vadd.f32 %v2254, %v2267
        %v2270 = vadd.f32 %v2255, %v2267
        %v2271 = vadd.f32 %v2256, %v2267
        %v2272 = vadd.f32 %v2257, %v2267
        %v2273 = vadd.f32 %v2258, %v2267
        %v2274 = vadd.f32 %v2259, %v2267
        %v2275 = vadd.f32 %v2260, %v2267
        %v2276 = vadd.f32 %v2261, %v2267
        %v2277 = vmax.f32 %v2269, 0.0
        %v2278 = vmax.f32 %v2270, 0.0
        %v2279 = vmax.f32 %v2271, 0.0
        %v2280 = vmax.f32 %v2272, 0.0
        %v2281 = vmax.f32 %v2273, 0.0
        %v2282 = vmax.f32 %v2274, 0.0
        %v2283 = vmax.f32 %v2275, 0.0
        %v2284 = vmax.f32 %v2276, 0.0
        %v2285 = vld [vmem:[%s7] sm:$0xf]
        %v2286 = vld [vmem:[%s7 + $0x4] sm:$0xf]
        %v2287 = vld [vmem:[%s7 + $0x8] sm:$0xf]
        %v2288 = vld [vmem:[%s7 + $0xc] sm:$0xf]
        %v2289 = vld [vmem:[%s7 + $0x10] sm:$0xf]
        %v2290 = vld [vmem:[%s7 + $0x14] sm:$0xf]
        %v2291 = vld [vmem:[%s7 + $0x18] sm:$0xf]
        %v2292 = vld [vmem:[%s7 + $0x1c] sm:$0xf]
        %v2293 = vld [vmem:[%s7 + $0x20] sm:$0xf]
        %v2294 = vld [vmem:[%s7 + $0x24] sm:$0xf]
        %v2295 = vld [vmem:[%s7 + $0x28] sm:$0xf]
        %v2296 = vld [vmem:[%s7 + $0x2c] sm:$0xf]
        %s2297 = scalar_lea.vmem %s7, 144
        %v2298 = vld [vmem:[%s2297] sm:$0xf]
        %v2299 = vld [vmem:[%s2297 + $0x4] sm:$0xf]
        %v2300 = vld [vmem:[%s2297 + $0x8] sm:$0xf]
        %v2301 = vld [vmem:[%s2297 + $0xc] sm:$0xf]
        %v2302 = vld [vmem:[%s2297 + $0x10] sm:$0xf]
        %v2303 = vld [vmem:[%s2297 + $0x14] sm:$0xf]
        %v2304 = vld [vmem:[%s2297 + $0x18] sm:$0xf]
        %v2305 = vld [vmem:[%s2297 + $0x1c] sm:$0xf]
        %v2306 = vld [vmem:[%s2297 + $0x20] sm:$0xf]
        %v2307 = vld [vmem:[%s2297 + $0x24] sm:$0xf]
        %v2308 = vld [vmem:[%s2297 + $0x28] sm:$0xf]
        %v2309 = vld [vmem:[%s2297 + $0x2c] sm:$0xf]
        %v2322 = vunpack.c.l.b16 %v2298
        %v2323 = vunpack.c.l.b16 %v2299
        %v2324 = vunpack.c.l.b16 %v2300
        %v2325 = vunpack.c.l.b16 %v2301
        %v2326 = vunpack.c.l.b16 %v2302
        %v2327 = vunpack.c.l.b16 %v2303
        %v2328 = vunpack.c.l.b16 %v2304
        %v2329 = vunpack.c.l.b16 %v2305
        %v2330 = vunpack.c.l.b16 %v2306
        %v2331 = vunpack.c.l.b16 %v2307
        %v2332 = vunpack.c.l.b16 %v2308
        %v2333 = vunpack.c.l.b16 %v2309
        %v2334 = vpack.c.b16 %v2323, %v2322
        %v2335 = vpack.c.b16 %v2325, %v2324
        %v2336 = vpack.c.b16 %v2327, %v2326
        %v2337 = vpack.c.b16 %v2329, %v2328
        %v2338 = vpack.c.b16 %v2331, %v2330
        %v2339 = vpack.c.b16 %v2333, %v2332
        %2346 = vmatprep.subr.bf16.mxu0 0
        %2347 = vmatpush1.bf16.msra.mxu0 %v2334
        %2348 = vmatprep.subr.bf16.mxu0 0
        %2349 = vmatpush1.bf16.msra.mxu0 %v2335
        %2350 = vmatprep.subr.bf16.mxu0 0
        %2351 = vmatpush1.bf16.msra.mxu0 %v2336
        %2352 = vmatprep.subr.bf16.mxu0 0
        %2353 = vmatpush1.bf16.msra.mxu0 %v2337
        %2354 = vmatprep.subr.bf16.mxu0 0
        %2355 = vmatpush1.bf16.msra.mxu0 %v2338
        %2356 = vmatprep.subr.bf16.mxu0 0
        %2357 = vmatpush1.bf16.msra.mxu0 %v2339
        %2358 = vmatprep.subr.bf16.mxu0 0
        %2359 = vmatpush1.bf16.msra.mxu0 0
        %2360 = vmatprep.subr.bf16.mxu0 0
        %2361 = vmatpush1.bf16.msra.mxu0 0
        %2362 = vmatprep.subr.bf16.mxu0 0
        %2363 = vmatpush1.bf16.msra.mxu0 0
        %2364 = vmatprep.subr.bf16.mxu0 0
        %2365 = vmatpush1.bf16.msra.mxu0 0
        %2366 = vmatprep.subr.bf16.mxu0 0
        %2367 = vmatpush1.bf16.msra.mxu0 0
        %2368 = vmatprep.subr.bf16.mxu0 0
        %2369 = vmatpush1.bf16.msra.mxu0 0
        %2370 = vmatprep.subr.bf16.mxu0 0
        %2371 = vmatpush1.bf16.msra.mxu0 0
        %2372 = vmatprep.subr.bf16.mxu0 0
        %2373 = vmatpush1.bf16.msra.mxu0 0
        %2374 = vmatprep.subr.bf16.mxu0 0
        %2375 = vmatpush1.bf16.msra.mxu0 0
        %2376 = vmatprep.subr.bf16.mxu0 0
        %2377 = vmatpush1.bf16.msra.mxu0 0
        %2378 = vmatprep.mubr.bf16.mxu0 0
        %2379 = vmatmul.mubr.bf16.gmra.mrb[0].mxu0 %v981
        %v2380 = vpop.f32.mrb[0].mxu0
        %v2381 = vadd.f32 0.0, %v2380
        %v2382 = vpop.f32.mrb[0].mxu0
        %v2383 = vpop.f32.mrb[0].mxu0
        %v2384 = vadd.f32 0.0, %v2383
        %v2385 = vpop.f32.mrb[0].mxu0
        %2386 = vmatprep.mubr.bf16.mxu0 0
        %2387 = vmatmul.mubr.bf16.gmra.mrb[0].mxu0 %v984
        %v2388 = vpop.f32.mrb[0].mxu0
        %v2389 = vadd.f32 0.0, %v2388
        %v2390 = vpop.f32.mrb[0].mxu0
        %v2391 = vpop.f32.mrb[0].mxu0
        %v2392 = vadd.f32 0.0, %v2391
        %v2393 = vpop.f32.mrb[0].mxu0
        %2394 = vmatprep.mubr.bf16.mxu0 0
        %2395 = vmatmul.mubr.bf16.gmra.mrb[0].mxu0 %v987
        %v2396 = vpop.f32.mrb[0].mxu0
        %v2397 = vadd.f32 0.0, %v2396
        %v2398 = vpop.f32.mrb[0].mxu0
        %v2399 = vpop.f32.mrb[0].mxu0
        %v2400 = vadd.f32 0.0, %v2399
        %v2401 = vpop.f32.mrb[0].mxu0
        %2402 = vmatprep.mubr.bf16.mxu0 0
        %2403 = vmatmul.mubr.bf16.gmra.mrb[0].mxu0 %v990
        %v2404 = vpop.f32.mrb[0].mxu0
        %v2405 = vadd.f32 0.0, %v2404
        %v2406 = vpop.f32.mrb[0].mxu0
        %v2407 = vpop.f32.mrb[0].mxu0
        %v2408 = vadd.f32 0.0, %v2407
        %v2409 = vpop.f32.mrb[0].mxu0
        %2410 = vdwg.mxu0
        %v2423 = vunpack.c.l.b16 %v2285
        %v2424 = vunpack.c.l.b16 %v2286
        %v2425 = vunpack.c.l.b16 %v2287
        %v2426 = vunpack.c.l.b16 %v2288
        %v2427 = vunpack.c.l.b16 %v2289
        %v2428 = vunpack.c.l.b16 %v2290
        %v2429 = vunpack.c.l.b16 %v2291
        %v2430 = vunpack.c.l.b16 %v2292
        %v2431 = vunpack.c.l.b16 %v2293
        %v2432 = vunpack.c.l.b16 %v2294
        %v2433 = vunpack.c.l.b16 %v2295
        %v2434 = vunpack.c.l.b16 %v2296
        %v2435 = vpack.c.b16 %v2424, %v2423
        %v2436 = vpack.c.b16 %v2426, %v2425
        %v2437 = vpack.c.b16 %v2428, %v2427
        %v2438 = vpack.c.b16 %v2430, %v2429
        %v2439 = vpack.c.b16 %v2432, %v2431
        %v2440 = vpack.c.b16 %v2434, %v2433
        %2447 = vmatprep.subr.bf16.mxu0 0
        %2448 = vmatpush1.bf16.msra.mxu0 %v2435
        %2449 = vmatprep.subr.bf16.mxu0 0
        %2450 = vmatpush1.bf16.msra.mxu0 %v2436
        %2451 = vmatprep.subr.bf16.mxu0 0
        %2452 = vmatpush1.bf16.msra.mxu0 %v2437
        %2453 = vmatprep.subr.bf16.mxu0 0
        %2454 = vmatpush1.bf16.msra.mxu0 %v2438
        %2455 = vmatprep.subr.bf16.mxu0 0
        %2456 = vmatpush1.bf16.msra.mxu0 %v2439
        %2457 = vmatprep.subr.bf16.mxu0 0
        %2458 = vmatpush1.bf16.msra.mxu0 %v2440
        %2459 = vmatprep.subr.bf16.mxu0 0
        %2460 = vmatpush1.bf16.msra.mxu0 0
        %2461 = vmatprep.subr.bf16.mxu0 0
        %2462 = vmatpush1.bf16.msra.mxu0 0
        %2463 = vmatprep.subr.bf16.mxu0 0
        %2464 = vmatpush1.bf16.msra.mxu0 0
        %2465 = vmatprep.subr.bf16.mxu0 0
        %2466 = vmatpush1.bf16.msra.mxu0 0
        %2467 = vmatprep.subr.bf16.mxu0 0
        %2468 = vmatpush1.bf16.msra.mxu0 0
        %2469 = vmatprep.subr.bf16.mxu0 0
        %2470 = vmatpush1.bf16.msra.mxu0 0
        %2471 = vmatprep.subr.bf16.mxu0 0
        %2472 = vmatpush1.bf16.msra.mxu0 0
        %2473 = vmatprep.subr.bf16.mxu0 0
        %2474 = vmatpush1.bf16.msra.mxu0 0
        %2475 = vmatprep.subr.bf16.mxu0 0
        %2476 = vmatpush1.bf16.msra.mxu0 0
        %2477 = vmatprep.subr.bf16.mxu0 0
        %2478 = vmatpush1.bf16.msra.mxu0 0
        %2479 = vmatprep.mubr.bf16.mxu0 0
        %2480 = vmatmul.mubr.bf16.gmra.mrb[0].mxu0 %v1094
        %v2481 = vpop.f32.mrb[0].mxu0
        %v2482 = vadd.f32 %v2381, %v2481
        %v2483 = vpop.f32.mrb[0].mxu0
        %v2484 = vpop.f32.mrb[0].mxu0
        %v2485 = vadd.f32 %v2384, %v2484
        %v2486 = vpop.f32.mrb[0].mxu0
        %2487 = vmatprep.mubr.bf16.mxu0 0
        %2488 = vmatmul.mubr.bf16.gmra.mrb[0].mxu0 %v1097
        %v2489 = vpop.f32.mrb[0].mxu0
        %v2490 = vadd.f32 %v2389, %v2489
        %v2491 = vpop.f32.mrb[0].mxu0
        %v2492 = vpop.f32.mrb[0].mxu0
        %v2493 = vadd.f32 %v2392, %v2492
        %v2494 = vpop.f32.mrb[0].mxu0
        %2495 = vmatprep.mubr.bf16.mxu0 0
        %2496 = vmatmul.mubr.bf16.gmra.mrb[0].mxu0 %v1100
        %v2497 = vpop.f32.mrb[0].mxu0
        %v2498 = vadd.f32 %v2397, %v2497
        %v2499 = vpop.f32.mrb[0].mxu0
        %v2500 = vpop.f32.mrb[0].mxu0
        %v2501 = vadd.f32 %v2400, %v2500
        %v2502 = vpop.f32.mrb[0].mxu0
        %2503 = vmatprep.mubr.bf16.mxu0 0
        %2504 = vmatmul.mubr.bf16.gmra.mrb[0].mxu0 %v1103
        %v2505 = vpop.f32.mrb[0].mxu0
        %v2506 = vadd.f32 %v2405, %v2505
        %v2507 = vpop.f32.mrb[0].mxu0
        %v2508 = vpop.f32.mrb[0].mxu0
        %v2509 = vadd.f32 %v2408, %v2508
        %v2510 = vpop.f32.mrb[0].mxu0
        %2511 = vdwg.mxu0
        %s2512 = scalar_lea.vmem %s7, 288
        %v2513 = vld [vmem:[%s2512] sm:$0xf]
        %v2514 = vld [vmem:[%s2512 + $0x4] sm:$0xf]
        %v2515 = vld [vmem:[%s2512 + $0x8] sm:$0xf]
        %v2516 = vld [vmem:[%s2512 + $0xc] sm:$0xf]
        %v2517 = vld [vmem:[%s2512 + $0x10] sm:$0xf]
        %v2518 = vld [vmem:[%s2512 + $0x14] sm:$0xf]
        %v2519 = vld [vmem:[%s2512 + $0x18] sm:$0xf]
        %v2520 = vld [vmem:[%s2512 + $0x1c] sm:$0xf]
        %v2521 = vld [vmem:[%s2512 + $0x20] sm:$0xf]
        %v2522 = vld [vmem:[%s2512 + $0x24] sm:$0xf]
        %v2523 = vld [vmem:[%s2512 + $0x28] sm:$0xf]
        %v2524 = vld [vmem:[%s2512 + $0x2c] sm:$0xf]
        %v2537 = vunpack.c.l.b16 %v2513
        %v2538 = vunpack.c.l.b16 %v2514
        %v2539 = vunpack.c.l.b16 %v2515
        %v2540 = vunpack.c.l.b16 %v2516
        %v2541 = vunpack.c.l.b16 %v2517
        %v2542 = vunpack.c.l.b16 %v2518
        %v2543 = vunpack.c.l.b16 %v2519
        %v2544 = vunpack.c.l.b16 %v2520
        %v2545 = vunpack.c.l.b16 %v2521
        %v2546 = vunpack.c.l.b16 %v2522
        %v2547 = vunpack.c.l.b16 %v2523
        %v2548 = vunpack.c.l.b16 %v2524
        %v2549 = vpack.c.b16 %v2538, %v2537
        %v2550 = vpack.c.b16 %v2540, %v2539
        %v2551 = vpack.c.b16 %v2542, %v2541
        %v2552 = vpack.c.b16 %v2544, %v2543
        %v2553 = vpack.c.b16 %v2546, %v2545
        %v2554 = vpack.c.b16 %v2548, %v2547
        %2561 = vmatprep.subr.bf16.mxu0 0
        %2562 = vmatpush1.bf16.msra.mxu0 %v2549
        %2563 = vmatprep.subr.bf16.mxu0 0
        %2564 = vmatpush1.bf16.msra.mxu0 %v2550
        %2565 = vmatprep.subr.bf16.mxu0 0
        %2566 = vmatpush1.bf16.msra.mxu0 %v2551
        %2567 = vmatprep.subr.bf16.mxu0 0
        %2568 = vmatpush1.bf16.msra.mxu0 %v2552
        %2569 = vmatprep.subr.bf16.mxu0 0
        %2570 = vmatpush1.bf16.msra.mxu0 %v2553
        %2571 = vmatprep.subr.bf16.mxu0 0
        %2572 = vmatpush1.bf16.msra.mxu0 %v2554
        %2573 = vmatprep.subr.bf16.mxu0 0
        %2574 = vmatpush1.bf16.msra.mxu0 0
        %2575 = vmatprep.subr.bf16.mxu0 0
        %2576 = vmatpush1.bf16.msra.mxu0 0
        %2577 = vmatprep.subr.bf16.mxu0 0
        %2578 = vmatpush1.bf16.msra.mxu0 0
        %2579 = vmatprep.subr.bf16.mxu0 0
        %2580 = vmatpush1.bf16.msra.mxu0 0
        %2581 = vmatprep.subr.bf16.mxu0 0
        %2582 = vmatpush1.bf16.msra.mxu0 0
        %2583 = vmatprep.subr.bf16.mxu0 0
        %2584 = vmatpush1.bf16.msra.mxu0 0
        %2585 = vmatprep.subr.bf16.mxu0 0
        %2586 = vmatpush1.bf16.msra.mxu0 0
        %2587 = vmatprep.subr.bf16.mxu0 0
        %2588 = vmatpush1.bf16.msra.mxu0 0
        %2589 = vmatprep.subr.bf16.mxu0 0
        %2590 = vmatpush1.bf16.msra.mxu0 0
        %2591 = vmatprep.subr.bf16.mxu0 0
        %2592 = vmatpush1.bf16.msra.mxu0 0
        %2593 = vmatprep.mubr.bf16.mxu0 0
        %2594 = vmatmul.mubr.bf16.gmra.mrb[0].mxu0 %v1097
        %v2595 = vpop.f32.mrb[0].mxu0
        %v2596 = vadd.f32 0.0, %v2595
        %v2597 = vpop.f32.mrb[0].mxu0
        %v2598 = vpop.f32.mrb[0].mxu0
        %v2599 = vadd.f32 0.0, %v2598
        %v2600 = vpop.f32.mrb[0].mxu0
        %2601 = vmatprep.mubr.bf16.mxu0 0
        %2602 = vmatmul.mubr.bf16.gmra.mrb[0].mxu0 %v1100
        %v2603 = vpop.f32.mrb[0].mxu0
        %v2604 = vadd.f32 0.0, %v2603
        %v2605 = vpop.f32.mrb[0].mxu0
        %v2606 = vpop.f32.mrb[0].mxu0
        %v2607 = vadd.f32 0.0, %v2606
        %v2608 = vpop.f32.mrb[0].mxu0
        %2609 = vmatprep.mubr.bf16.mxu0 0
        %2610 = vmatmul.mubr.bf16.gmra.mrb[0].mxu0 %v1103
        %v2611 = vpop.f32.mrb[0].mxu0
        %v2612 = vadd.f32 0.0, %v2611
        %v2613 = vpop.f32.mrb[0].mxu0
        %v2614 = vpop.f32.mrb[0].mxu0
        %v2615 = vadd.f32 0.0, %v2614
        %v2616 = vpop.f32.mrb[0].mxu0
        %2617 = vmatprep.mubr.bf16.mxu0 0
        %2618 = vmatmul.mubr.bf16.gmra.mrb[0].mxu0 %v1220
        %v2619 = vpop.f32.mrb[0].mxu0
        %v2620 = vadd.f32 0.0, %v2619
        %v2621 = vpop.f32.mrb[0].mxu0
        %v2622 = vpop.f32.mrb[0].mxu0
        %v2623 = vadd.f32 0.0, %v2622
        %v2624 = vpop.f32.mrb[0].mxu0
        %2625 = vdwg.mxu0
        %v2626 = vadd.f32 %v2482, %v2596
        %v2627 = vadd.f32 %v2485, %v2599
        %v2628 = vadd.f32 %v2490, %v2604
        %v2629 = vadd.f32 %v2493, %v2607
        %v2630 = vadd.f32 %v2498, %v2612
        %v2631 = vadd.f32 %v2501, %v2615
        %v2632 = vadd.f32 %v2506, %v2620
        %v2633 = vadd.f32 %v2509, %v2623
        %s2634 = scalar_lea.vmem %s7, 48
        %v2635 = vld [vmem:[%s2634] sm:$0xf]
        %v2636 = vld [vmem:[%s2634 + $0x4] sm:$0xf]
        %v2637 = vld [vmem:[%s2634 + $0x8] sm:$0xf]
        %v2638 = vld [vmem:[%s2634 + $0xc] sm:$0xf]
        %v2639 = vld [vmem:[%s2634 + $0x10] sm:$0xf]
        %v2640 = vld [vmem:[%s2634 + $0x14] sm:$0xf]
        %v2641 = vld [vmem:[%s2634 + $0x18] sm:$0xf]
        %v2642 = vld [vmem:[%s2634 + $0x1c] sm:$0xf]
        %v2643 = vld [vmem:[%s2634 + $0x20] sm:$0xf]
        %v2644 = vld [vmem:[%s2634 + $0x24] sm:$0xf]
        %v2645 = vld [vmem:[%s2634 + $0x28] sm:$0xf]
        %v2646 = vld [vmem:[%s2634 + $0x2c] sm:$0xf]
        %s2647 = scalar_lea.vmem %s7, 192
        %v2648 = vld [vmem:[%s2647] sm:$0xf]
        %v2649 = vld [vmem:[%s2647 + $0x4] sm:$0xf]
        %v2650 = vld [vmem:[%s2647 + $0x8] sm:$0xf]
        %v2651 = vld [vmem:[%s2647 + $0xc] sm:$0xf]
        %v2652 = vld [vmem:[%s2647 + $0x10] sm:$0xf]
        %v2653 = vld [vmem:[%s2647 + $0x14] sm:$0xf]
        %v2654 = vld [vmem:[%s2647 + $0x18] sm:$0xf]
        %v2655 = vld [vmem:[%s2647 + $0x1c] sm:$0xf]
        %v2656 = vld [vmem:[%s2647 + $0x20] sm:$0xf]
        %v2657 = vld [vmem:[%s2647 + $0x24] sm:$0xf]
        %v2658 = vld [vmem:[%s2647 + $0x28] sm:$0xf]
        %v2659 = vld [vmem:[%s2647 + $0x2c] sm:$0xf]
        %v2672 = vunpack.c.l.b16 %v2648
        %v2673 = vunpack.c.l.b16 %v2649
        %v2674 = vunpack.c.l.b16 %v2650
        %v2675 = vunpack.c.l.b16 %v2651
        %v2676 = vunpack.c.l.b16 %v2652
        %v2677 = vunpack.c.l.b16 %v2653
        %v2678 = vunpack.c.l.b16 %v2654
        %v2679 = vunpack.c.l.b16 %v2655
        %v2680 = vunpack.c.l.b16 %v2656
        %v2681 = vunpack.c.l.b16 %v2657
        %v2682 = vunpack.c.l.b16 %v2658
        %v2683 = vunpack.c.l.b16 %v2659
        %v2684 = vpack.c.b16 %v2673, %v2672
        %v2685 = vpack.c.b16 %v2675, %v2674
        %v2686 = vpack.c.b16 %v2677, %v2676
        %v2687 = vpack.c.b16 %v2679, %v2678
        %v2688 = vpack.c.b16 %v2681, %v2680
        %v2689 = vpack.c.b16 %v2683, %v2682
        %2696 = vmatprep.subr.bf16.mxu0 0
        %2697 = vmatpush1.bf16.msra.mxu0 %v2684
        %2698 = vmatprep.subr.bf16.mxu0 0
        %2699 = vmatpush1.bf16.msra.mxu0 %v2685
        %2700 = vmatprep.subr.bf16.mxu0 0
        %2701 = vmatpush1.bf16.msra.mxu0 %v2686
        %2702 = vmatprep.subr.bf16.mxu0 0
        %2703 = vmatpush1.bf16.msra.mxu0 %v2687
        %2704 = vmatprep.subr.bf16.mxu0 0
        %2705 = vmatpush1.bf16.msra.mxu0 %v2688
        %2706 = vmatprep.subr.bf16.mxu0 0
        %2707 = vmatpush1.bf16.msra.mxu0 %v2689
        %2708 = vmatprep.subr.bf16.mxu0 0
        %2709 = vmatpush1.bf16.msra.mxu0 0
        %2710 = vmatprep.subr.bf16.mxu0 0
        %2711 = vmatpush1.bf16.msra.mxu0 0
        %2712 = vmatprep.subr.bf16.mxu0 0
        %2713 = vmatpush1.bf16.msra.mxu0 0
        %2714 = vmatprep.subr.bf16.mxu0 0
        %2715 = vmatpush1.bf16.msra.mxu0 0
        %2716 = vmatprep.subr.bf16.mxu0 0
        %2717 = vmatpush1.bf16.msra.mxu0 0
        %2718 = vmatprep.subr.bf16.mxu0 0
        %2719 = vmatpush1.bf16.msra.mxu0 0
        %2720 = vmatprep.subr.bf16.mxu0 0
        %2721 = vmatpush1.bf16.msra.mxu0 0
        %2722 = vmatprep.subr.bf16.mxu0 0
        %2723 = vmatpush1.bf16.msra.mxu0 0
        %2724 = vmatprep.subr.bf16.mxu0 0
        %2725 = vmatpush1.bf16.msra.mxu0 0
        %2726 = vmatprep.subr.bf16.mxu0 0
        %2727 = vmatpush1.bf16.msra.mxu0 0
        %2728 = vmatprep.mubr.bf16.mxu0 0
        %2729 = vmatmul.mubr.bf16.gmra.mrb[0].mxu0 %v981
        %v2730 = vpop.f32.mrb[0].mxu0
        %v2731 = vadd.f32 0.0, %v2730
        %v2732 = vpop.f32.mrb[0].mxu0
        %v2733 = vpop.f32.mrb[0].mxu0
        %v2734 = vadd.f32 0.0, %v2733
        %v2735 = vpop.f32.mrb[0].mxu0
        %2736 = vmatprep.mubr.bf16.mxu0 0
        %2737 = vmatmul.mubr.bf16.gmra.mrb[0].mxu0 %v984
        %v2738 = vpop.f32.mrb[0].mxu0
        %v2739 = vadd.f32 0.0, %v2738
        %v2740 = vpop.f32.mrb[0].mxu0
        %v2741 = vpop.f32.mrb[0].mxu0
        %v2742 = vadd.f32 0.0, %v2741
        %v2743 = vpop.f32.mrb[0].mxu0
        %2744 = vmatprep.mubr.bf16.mxu0 0
        %2745 = vmatmul.mubr.bf16.gmra.mrb[0].mxu0 %v987
        %v2746 = vpop.f32.mrb[0].mxu0
        %v2747 = vadd.f32 0.0, %v2746
        %v2748 = vpop.f32.mrb[0].mxu0
        %v2749 = vpop.f32.mrb[0].mxu0
        %v2750 = vadd.f32 0.0, %v2749
        %v2751 = vpop.f32.mrb[0].mxu0
        %2752 = vmatprep.mubr.bf16.mxu0 0
        %2753 = vmatmul.mubr.bf16.gmra.mrb[0].mxu0 %v990
        %v2754 = vpop.f32.mrb[0].mxu0
        %v2755 = vadd.f32 0.0, %v2754
        %v2756 = vpop.f32.mrb[0].mxu0
        %v2757 = vpop.f32.mrb[0].mxu0
        %v2758 = vadd.f32 0.0, %v2757
        %v2759 = vpop.f32.mrb[0].mxu0
        %2760 = vdwg.mxu0
        %v2773 = vunpack.c.l.b16 %v2635
        %v2774 = vunpack.c.l.b16 %v2636
        %v2775 = vunpack.c.l.b16 %v2637
        %v2776 = vunpack.c.l.b16 %v2638
        %v2777 = vunpack.c.l.b16 %v2639
        %v2778 = vunpack.c.l.b16 %v2640
        %v2779 = vunpack.c.l.b16 %v2641
        %v2780 = vunpack.c.l.b16 %v2642
        %v2781 = vunpack.c.l.b16 %v2643
        %v2782 = vunpack.c.l.b16 %v2644
        %v2783 = vunpack.c.l.b16 %v2645
        %v2784 = vunpack.c.l.b16 %v2646
        %v2785 = vpack.c.b16 %v2774, %v2773
        %v2786 = vpack.c.b16 %v2776, %v2775
        %v2787 = vpack.c.b16 %v2778, %v2777
        %v2788 = vpack.c.b16 %v2780, %v2779
        %v2789 = vpack.c.b16 %v2782, %v2781
        %v2790 = vpack.c.b16 %v2784, %v2783
        %2797 = vmatprep.subr.bf16.mxu0 0
        %2798 = vmatpush1.bf16.msra.mxu0 %v2785
        %2799 = vmatprep.subr.bf16.mxu0 0
        %2800 = vmatpush1.bf16.msra.mxu0 %v2786
        %2801 = vmatprep.subr.bf16.mxu0 0
        %2802 = vmatpush1.bf16.msra.mxu0 %v2787
        %2803 = vmatprep.subr.bf16.mxu0 0
        %2804 = vmatpush1.bf16.msra.mxu0 %v2788
        %2805 = vmatprep.subr.bf16.mxu0 0
        %2806 = vmatpush1.bf16.msra.mxu0 %v2789
        %2807 = vmatprep.subr.bf16.mxu0 0
        %2808 = vmatpush1.bf16.msra.mxu0 %v2790
        %2809 = vmatprep.subr.bf16.mxu0 0
        %2810 = vmatpush1.bf16.msra.mxu0 0
        %2811 = vmatprep.subr.bf16.mxu0 0
        %2812 = vmatpush1.bf16.msra.mxu0 0
        %2813 = vmatprep.subr.bf16.mxu0 0
        %2814 = vmatpush1.bf16.msra.mxu0 0
        %2815 = vmatprep.subr.bf16.mxu0 0
        %2816 = vmatpush1.bf16.msra.mxu0 0
        %2817 = vmatprep.subr.bf16.mxu0 0
        %2818 = vmatpush1.bf16.msra.mxu0 0
        %2819 = vmatprep.subr.bf16.mxu0 0
        %2820 = vmatpush1.bf16.msra.mxu0 0
        %2821 = vmatprep.subr.bf16.mxu0 0
        %2822 = vmatpush1.bf16.msra.mxu0 0
        %2823 = vmatprep.subr.bf16.mxu0 0
        %2824 = vmatpush1.bf16.msra.mxu0 0
        %2825 = vmatprep.subr.bf16.mxu0 0
        %2826 = vmatpush1.bf16.msra.mxu0 0
        %2827 = vmatprep.subr.bf16.mxu0 0
        %2828 = vmatpush1.bf16.msra.mxu0 0
        %2829 = vmatprep.mubr.bf16.mxu0 0
        %2830 = vmatmul.mubr.bf16.gmra.mrb[0].mxu0 %v1094
        %v2831 = vpop.f32.mrb[0].mxu0
        %v2832 = vadd.f32 %v2731, %v2831
        %v2833 = vpop.f32.mrb[0].mxu0
        %v2834 = vpop.f32.mrb[0].mxu0
        %v2835 = vadd.f32 %v2734, %v2834
        %v2836 = vpop.f32.mrb[0].mxu0
        %2837 = vmatprep.mubr.bf16.mxu0 0
        %2838 = vmatmul.mubr.bf16.gmra.mrb[0].mxu0 %v1097
        %v2839 = vpop.f32.mrb[0].mxu0
        %v2840 = vadd.f32 %v2739, %v2839
        %v2841 = vpop.f32.mrb[0].mxu0
        %v2842 = vpop.f32.mrb[0].mxu0
        %v2843 = vadd.f32 %v2742, %v2842
        %v2844 = vpop.f32.mrb[0].mxu0
        %2845 = vmatprep.mubr.bf16.mxu0 0
        %2846 = vmatmul.mubr.bf16.gmra.mrb[0].mxu0 %v1100
        %v2847 = vpop.f32.mrb[0].mxu0
        %v2848 = vadd.f32 %v2747, %v2847
        %v2849 = vpop.f32.mrb[0].mxu0
        %v2850 = vpop.f32.mrb[0].mxu0
        %v2851 = vadd.f32 %v2750, %v2850
        %v2852 = vpop.f32.mrb[0].mxu0
        %2853 = vmatprep.mubr.bf16.mxu0 0
        %2854 = vmatmul.mubr.bf16.gmra.mrb[0].mxu0 %v1103
        %v2855 = vpop.f32.mrb[0].mxu0
        %v2856 = vadd.f32 %v2755, %v2855
        %v2857 = vpop.f32.mrb[0].mxu0
        %v2858 = vpop.f32.mrb[0].mxu0
        %v2859 = vadd.f32 %v2758, %v2858
        %v2860 = vpop.f32.mrb[0].mxu0
        %2861 = vdwg.mxu0
        %s2862 = scalar_lea.vmem %s7, 336
        %v2863 = vld [vmem:[%s2862] sm:$0xf]
        %v2864 = vld [vmem:[%s2862 + $0x4] sm:$0xf]
        %v2865 = vld [vmem:[%s2862 + $0x8] sm:$0xf]
        %v2866 = vld [vmem:[%s2862 + $0xc] sm:$0xf]
        %v2867 = vld [vmem:[%s2862 + $0x10] sm:$0xf]
        %v2868 = vld [vmem:[%s2862 + $0x14] sm:$0xf]
        %v2869 = vld [vmem:[%s2862 + $0x18] sm:$0xf]
        %v2870 = vld [vmem:[%s2862 + $0x1c] sm:$0xf]
        %v2871 = vld [vmem:[%s2862 + $0x20] sm:$0xf]
        %v2872 = vld [vmem:[%s2862 + $0x24] sm:$0xf]
        %v2873 = vld [vmem:[%s2862 + $0x28] sm:$0xf]
        %v2874 = vld [vmem:[%s2862 + $0x2c] sm:$0xf]
        %v2887 = vunpack.c.l.b16 %v2863
        %v2888 = vunpack.c.l.b16 %v2864
        %v2889 = vunpack.c.l.b16 %v2865
        %v2890 = vunpack.c.l.b16 %v2866
        %v2891 = vunpack.c.l.b16 %v2867
        %v2892 = vunpack.c.l.b16 %v2868
        %v2893 = vunpack.c.l.b16 %v2869
        %v2894 = vunpack.c.l.b16 %v2870
        %v2895 = vunpack.c.l.b16 %v2871
        %v2896 = vunpack.c.l.b16 %v2872
        %v2897 = vunpack.c.l.b16 %v2873
        %v2898 = vunpack.c.l.b16 %v2874
        %v2899 = vpack.c.b16 %v2888, %v2887
        %v2900 = vpack.c.b16 %v2890, %v2889
        %v2901 = vpack.c.b16 %v2892, %v2891
        %v2902 = vpack.c.b16 %v2894, %v2893
        %v2903 = vpack.c.b16 %v2896, %v2895
        %v2904 = vpack.c.b16 %v2898, %v2897
        %2911 = vmatprep.subr.bf16.mxu0 0
        %2912 = vmatpush1.bf16.msra.mxu0 %v2899
        %2913 = vmatprep.subr.bf16.mxu0 0
        %2914 = vmatpush1.bf16.msra.mxu0 %v2900
        %2915 = vmatprep.subr.bf16.mxu0 0
        %2916 = vmatpush1.bf16.msra.mxu0 %v2901
        %2917 = vmatprep.subr.bf16.mxu0 0
        %2918 = vmatpush1.bf16.msra.mxu0 %v2902
        %2919 = vmatprep.subr.bf16.mxu0 0
        %2920 = vmatpush1.bf16.msra.mxu0 %v2903
        %2921 = vmatprep.subr.bf16.mxu0 0
        %2922 = vmatpush1.bf16.msra.mxu0 %v2904
        %2923 = vmatprep.subr.bf16.mxu0 0
        %2924 = vmatpush1.bf16.msra.mxu0 0
        %2925 = vmatprep.subr.bf16.mxu0 0
        %2926 = vmatpush1.bf16.msra.mxu0 0
        %2927 = vmatprep.subr.bf16.mxu0 0
        %2928 = vmatpush1.bf16.msra.mxu0 0
        %2929 = vmatprep.subr.bf16.mxu0 0
        %2930 = vmatpush1.bf16.msra.mxu0 0
        %2931 = vmatprep.subr.bf16.mxu0 0
        %2932 = vmatpush1.bf16.msra.mxu0 0
        %2933 = vmatprep.subr.bf16.mxu0 0
        %2934 = vmatpush1.bf16.msra.mxu0 0
        %2935 = vmatprep.subr.bf16.mxu0 0
        %2936 = vmatpush1.bf16.msra.mxu0 0
        %2937 = vmatprep.subr.bf16.mxu0 0
        %2938 = vmatpush1.bf16.msra.mxu0 0
        %2939 = vmatprep.subr.bf16.mxu0 0
        %2940 = vmatpush1.bf16.msra.mxu0 0
        %2941 = vmatprep.subr.bf16.mxu0 0
        %2942 = vmatpush1.bf16.msra.mxu0 0
        %2943 = vmatprep.mubr.bf16.mxu0 0
        %2944 = vmatmul.mubr.bf16.gmra.mrb[0].mxu0 %v1097
        %v2945 = vpop.f32.mrb[0].mxu0
        %v2946 = vadd.f32 0.0, %v2945
        %v2947 = vpop.f32.mrb[0].mxu0
        %v2948 = vpop.f32.mrb[0].mxu0
        %v2949 = vadd.f32 0.0, %v2948
        %v2950 = vpop.f32.mrb[0].mxu0
        %2951 = vmatprep.mubr.bf16.mxu0 0
        %2952 = vmatmul.mubr.bf16.gmra.mrb[0].mxu0 %v1100
        %v2953 = vpop.f32.mrb[0].mxu0
        %v2954 = vadd.f32 0.0, %v2953
        %v2955 = vpop.f32.mrb[0].mxu0
        %v2956 = vpop.f32.mrb[0].mxu0
        %v2957 = vadd.f32 0.0, %v2956
        %v2958 = vpop.f32.mrb[0].mxu0
        %2959 = vmatprep.mubr.bf16.mxu0 0
        %2960 = vmatmul.mubr.bf16.gmra.mrb[0].mxu0 %v1103
        %v2961 = vpop.f32.mrb[0].mxu0
        %v2962 = vadd.f32 0.0, %v2961
        %v2963 = vpop.f32.mrb[0].mxu0
        %v2964 = vpop.f32.mrb[0].mxu0
        %v2965 = vadd.f32 0.0, %v2964
        %v2966 = vpop.f32.mrb[0].mxu0
        %2967 = vmatprep.mubr.bf16.mxu0 0
        %2968 = vmatmul.mubr.bf16.gmra.mrb[0].mxu0 %v1220
        %v2969 = vpop.f32.mrb[0].mxu0
        %v2970 = vadd.f32 0.0, %v2969
        %v2971 = vpop.f32.mrb[0].mxu0
        %v2972 = vpop.f32.mrb[0].mxu0
        %v2973 = vadd.f32 0.0, %v2972
        %v2974 = vpop.f32.mrb[0].mxu0
        %2975 = vdwg.mxu0
        %v2976 = vadd.f32 %v2832, %v2946
        %v2977 = vadd.f32 %v2835, %v2949
        %v2978 = vadd.f32 %v2840, %v2954
        %v2979 = vadd.f32 %v2843, %v2957
        %v2980 = vadd.f32 %v2848, %v2962
        %v2981 = vadd.f32 %v2851, %v2965
        %v2982 = vadd.f32 %v2856, %v2970
        %v2983 = vadd.f32 %v2859, %v2973
        %2984 = vmatprep.subr.mxu0 0.0
        %2985 = vmatpush1.msra.mxu0 %v2626
        %2986 = vmatprep.subr.mxu0 0.0
        %2987 = vmatpush1.msra.mxu0 %v2627
        %2988 = vmatprep.subr.mxu0 0.0
        %2989 = vmatpush1.msra.mxu0 %v2628
        %2990 = vmatprep.subr.mxu0 0.0
        %2991 = vmatpush1.msra.mxu0 %v2629
        %2992 = vmatprep.subr.mxu0 0.0
        %2993 = vmatpush1.msra.mxu0 %v2630
        %2994 = vmatprep.subr.mxu0 0.0
        %2995 = vmatpush1.msra.mxu0 %v2631
        %2996 = vmatprep.subr.mxu0 0.0
        %2997 = vmatpush1.msra.mxu0 %v2632
        %2998 = vmatprep.subr.mxu0 0.0
        %2999 = vmatpush1.msra.mxu0 %v2633
        %3000 = vmatprep.subr.mxu0 0.0
        %3001 = vmatpush1.msra.mxu0 0.0
        %3002 = vmatprep.subr.mxu0 0.0
        %3003 = vmatpush1.msra.mxu0 0.0
        %3004 = vmatprep.subr.mxu0 0.0
        %3005 = vmatpush1.msra.mxu0 0.0
        %3006 = vmatprep.subr.mxu0 0.0
        %3007 = vmatpush1.msra.mxu0 0.0
        %3008 = vmatprep.subr.mxu0 0.0
        %3009 = vmatpush1.msra.mxu0 0.0
        %3010 = vmatprep.subr.mxu0 0.0
        %3011 = vmatpush1.msra.mxu0 0.0
        %3012 = vmatprep.subr.mxu0 0.0
        %3013 = vmatpush1.msra.mxu0 0.0
        %3014 = vmatprep.subr.mxu0 0.0
        %3015 = vmatpush1.msra.mxu0 0.0
        %3016 = vmatprep.subr.mxu0 0.0
        %3017 = vmatpush1.msra.mxu0 0.0
        %3018 = vmatprep.subr.mxu0 0.0
        %3019 = vmatpush1.msra.mxu0 0.0
        %3020 = vmatprep.subr.mxu0 0.0
        %3021 = vmatpush1.msra.mxu0 0.0
        %3022 = vmatprep.subr.mxu0 0.0
        %3023 = vmatpush1.msra.mxu0 0.0
        %3024 = vmatprep.subr.mxu0 0.0
        %3025 = vmatpush1.msra.mxu0 0.0
        %3026 = vmatprep.subr.mxu0 0.0
        %3027 = vmatpush1.msra.mxu0 0.0
        %3028 = vmatprep.subr.mxu0 0.0
        %3029 = vmatpush1.msra.mxu0 0.0
        %3030 = vmatprep.subr.mxu0 0.0
        %3031 = vmatpush1.msra.mxu0 0.0
        %3032 = vmatprep.subr.mxu0 0.0
        %3033 = vmatpush1.msra.mxu0 0.0
        %3034 = vmatprep.subr.mxu0 0.0
        %3035 = vmatpush1.msra.mxu0 0.0
        %3036 = vmatprep.subr.mxu0 0.0
        %3037 = vmatpush1.msra.mxu0 0.0
        %3038 = vmatprep.subr.mxu0 0.0
        %3039 = vmatpush1.msra.mxu0 0.0
        %3040 = vmatprep.subr.mxu0 0.0
        %3041 = vmatpush1.msra.mxu0 0.0
        %3042 = vmatprep.subr.mxu0 0.0
        %3043 = vmatpush1.msra.mxu0 0.0
        %3044 = vmatprep.subr.mxu0 0.0
        %3045 = vmatpush1.msra.mxu0 0.0
        %3046 = vmatprep.subr.mxu0 0.0
        %3047 = vmatpush1.msra.mxu0 0.0
        %3048 = vmatprep.mubr.f32.mxu0 0.0
        %3049 = vmatmul.mubr.f32.gmra.mrb[0].mxu0 %v1647
        %v3050 = vpop.f32.mrb[0].mxu0
        %v3051 = vadd.f32 %v2976, %v3050
        %v3052 = vpop.f32.mrb[0].mxu0
        %3053 = vmatprep.mubr.f32.mxu0 0.0
        %3054 = vmatmul.mubr.f32.gmra.mrb[0].mxu0 %v1650
        %v3055 = vpop.f32.mrb[0].mxu0
        %v3056 = vadd.f32 %v2977, %v3055
        %v3057 = vpop.f32.mrb[0].mxu0
        %3058 = vmatprep.mubr.f32.mxu0 0.0
        %3059 = vmatmul.mubr.f32.gmra.mrb[0].mxu0 %v1653
        %v3060 = vpop.f32.mrb[0].mxu0
        %v3061 = vadd.f32 %v2978, %v3060
        %v3062 = vpop.f32.mrb[0].mxu0
        %3063 = vmatprep.mubr.f32.mxu0 0.0
        %3064 = vmatmul.mubr.f32.gmra.mrb[0].mxu0 %v1656
        %v3065 = vpop.f32.mrb[0].mxu0
        %v3066 = vadd.f32 %v2979, %v3065
        %v3067 = vpop.f32.mrb[0].mxu0
        %3068 = vmatprep.mubr.f32.mxu0 0.0
        %3069 = vmatmul.mubr.f32.gmra.mrb[0].mxu0 %v1659
        %v3070 = vpop.f32.mrb[0].mxu0
        %v3071 = vadd.f32 %v2980, %v3070
        %v3072 = vpop.f32.mrb[0].mxu0
        %3073 = vmatprep.mubr.f32.mxu0 0.0
        %3074 = vmatmul.mubr.f32.gmra.mrb[0].mxu0 %v1662
        %v3075 = vpop.f32.mrb[0].mxu0
        %v3076 = vadd.f32 %v2981, %v3075
        %v3077 = vpop.f32.mrb[0].mxu0
        %3078 = vmatprep.mubr.f32.mxu0 0.0
        %3079 = vmatmul.mubr.f32.gmra.mrb[0].mxu0 %v1665
        %v3080 = vpop.f32.mrb[0].mxu0
        %v3081 = vadd.f32 %v2982, %v3080
        %v3082 = vpop.f32.mrb[0].mxu0
        %3083 = vmatprep.mubr.f32.mxu0 0.0
        %3084 = vmatmul.mubr.f32.gmra.mrb[0].mxu0 %v1668
        %v3085 = vpop.f32.mrb[0].mxu0
        %v3086 = vadd.f32 %v2983, %v3085
        %v3087 = vpop.f32.mrb[0].mxu0
        %3088 = vdwg.mxu0
        %s3089 = scalar_lea.vmem %s7, 96
        %v3090 = vld [vmem:[%s3089] sm:$0xf]
        %v3091 = vld [vmem:[%s3089 + $0x4] sm:$0xf]
        %v3092 = vld [vmem:[%s3089 + $0x8] sm:$0xf]
        %v3093 = vld [vmem:[%s3089 + $0xc] sm:$0xf]
        %v3094 = vld [vmem:[%s3089 + $0x10] sm:$0xf]
        %v3095 = vld [vmem:[%s3089 + $0x14] sm:$0xf]
        %v3096 = vld [vmem:[%s3089 + $0x18] sm:$0xf]
        %v3097 = vld [vmem:[%s3089 + $0x1c] sm:$0xf]
        %v3098 = vld [vmem:[%s3089 + $0x20] sm:$0xf]
        %v3099 = vld [vmem:[%s3089 + $0x24] sm:$0xf]
        %v3100 = vld [vmem:[%s3089 + $0x28] sm:$0xf]
        %v3101 = vld [vmem:[%s3089 + $0x2c] sm:$0xf]
        %s3102 = scalar_lea.vmem %s7, 240
        %v3103 = vld [vmem:[%s3102] sm:$0xf]
        %v3104 = vld [vmem:[%s3102 + $0x4] sm:$0xf]
        %v3105 = vld [vmem:[%s3102 + $0x8] sm:$0xf]
        %v3106 = vld [vmem:[%s3102 + $0xc] sm:$0xf]
        %v3107 = vld [vmem:[%s3102 + $0x10] sm:$0xf]
        %v3108 = vld [vmem:[%s3102 + $0x14] sm:$0xf]
        %v3109 = vld [vmem:[%s3102 + $0x18] sm:$0xf]
        %v3110 = vld [vmem:[%s3102 + $0x1c] sm:$0xf]
        %v3111 = vld [vmem:[%s3102 + $0x20] sm:$0xf]
        %v3112 = vld [vmem:[%s3102 + $0x24] sm:$0xf]
        %v3113 = vld [vmem:[%s3102 + $0x28] sm:$0xf]
        %v3114 = vld [vmem:[%s3102 + $0x2c] sm:$0xf]
        %v3127 = vunpack.c.l.b16 %v3103
        %v3128 = vunpack.c.l.b16 %v3104
        %v3129 = vunpack.c.l.b16 %v3105
        %v3130 = vunpack.c.l.b16 %v3106
        %v3131 = vunpack.c.l.b16 %v3107
        %v3132 = vunpack.c.l.b16 %v3108
        %v3133 = vunpack.c.l.b16 %v3109
        %v3134 = vunpack.c.l.b16 %v3110
        %v3135 = vunpack.c.l.b16 %v3111
        %v3136 = vunpack.c.l.b16 %v3112
        %v3137 = vunpack.c.l.b16 %v3113
        %v3138 = vunpack.c.l.b16 %v3114
        %v3139 = vpack.c.b16 %v3128, %v3127
        %v3140 = vpack.c.b16 %v3130, %v3129
        %v3141 = vpack.c.b16 %v3132, %v3131
        %v3142 = vpack.c.b16 %v3134, %v3133
        %v3143 = vpack.c.b16 %v3136, %v3135
        %v3144 = vpack.c.b16 %v3138, %v3137
        %3151 = vmatprep.subr.bf16.mxu0 0
        %3152 = vmatpush1.bf16.msra.mxu0 %v3139
        %3153 = vmatprep.subr.bf16.mxu0 0
        %3154 = vmatpush1.bf16.msra.mxu0 %v3140
        %3155 = vmatprep.subr.bf16.mxu0 0
        %3156 = vmatpush1.bf16.msra.mxu0 %v3141
        %3157 = vmatprep.subr.bf16.mxu0 0
        %3158 = vmatpush1.bf16.msra.mxu0 %v3142
        %3159 = vmatprep.subr.bf16.mxu0 0
        %3160 = vmatpush1.bf16.msra.mxu0 %v3143
        %3161 = vmatprep.subr.bf16.mxu0 0
        %3162 = vmatpush1.bf16.msra.mxu0 %v3144
        %3163 = vmatprep.subr.bf16.mxu0 0
        %3164 = vmatpush1.bf16.msra.mxu0 0
        %3165 = vmatprep.subr.bf16.mxu0 0
        %3166 = vmatpush1.bf16.msra.mxu0 0
        %3167 = vmatprep.subr.bf16.mxu0 0
        %3168 = vmatpush1.bf16.msra.mxu0 0
        %3169 = vmatprep.subr.bf16.mxu0 0
        %3170 = vmatpush1.bf16.msra.mxu0 0
        %3171 = vmatprep.subr.bf16.mxu0 0
        %3172 = vmatpush1.bf16.msra.mxu0 0
        %3173 = vmatprep.subr.bf16.mxu0 0
        %3174 = vmatpush1.bf16.msra.mxu0 0
        %3175 = vmatprep.subr.bf16.mxu0 0
        %3176 = vmatpush1.bf16.msra.mxu0 0
        %3177 = vmatprep.subr.bf16.mxu0 0
        %3178 = vmatpush1.bf16.msra.mxu0 0
        %3179 = vmatprep.subr.bf16.mxu0 0
        %3180 = vmatpush1.bf16.msra.mxu0 0
        %3181 = vmatprep.subr.bf16.mxu0 0
        %3182 = vmatpush1.bf16.msra.mxu0 0
        %3183 = vmatprep.mubr.bf16.mxu0 0
        %3184 = vmatmul.mubr.bf16.gmra.mrb[0].mxu0 %v981
        %v3185 = vpop.f32.mrb[0].mxu0
        %v3186 = vadd.f32 0.0, %v3185
        %v3187 = vpop.f32.mrb[0].mxu0
        %v3188 = vpop.f32.mrb[0].mxu0
        %v3189 = vadd.f32 0.0, %v3188
        %v3190 = vpop.f32.mrb[0].mxu0
        %3191 = vmatprep.mubr.bf16.mxu0 0
        %3192 = vmatmul.mubr.bf16.gmra.mrb[0].mxu0 %v984
        %v3193 = vpop.f32.mrb[0].mxu0
        %v3194 = vadd.f32 0.0, %v3193
        %v3195 = vpop.f32.mrb[0].mxu0
        %v3196 = vpop.f32.mrb[0].mxu0
        %v3197 = vadd.f32 0.0, %v3196
        %v3198 = vpop.f32.mrb[0].mxu0
        %3199 = vmatprep.mubr.bf16.mxu0 0
        %3200 = vmatmul.mubr.bf16.gmra.mrb[0].mxu0 %v987
        %v3201 = vpop.f32.mrb[0].mxu0
        %v3202 = vadd.f32 0.0, %v3201
        %v3203 = vpop.f32.mrb[0].mxu0
        %v3204 = vpop.f32.mrb[0].mxu0
        %v3205 = vadd.f32 0.0, %v3204
        %v3206 = vpop.f32.mrb[0].mxu0
        %3207 = vmatprep.mubr.bf16.mxu0 0
        %3208 = vmatmul.mubr.bf16.gmra.mrb[0].mxu0 %v990
        %v3209 = vpop.f32.mrb[0].mxu0
        %v3210 = vadd.f32 0.0, %v3209
        %v3211 = vpop.f32.mrb[0].mxu0
        %v3212 = vpop.f32.mrb[0].mxu0
        %v3213 = vadd.f32 0.0, %v3212
        %v3214 = vpop.f32.mrb[0].mxu0
        %3215 = vdwg.mxu0
        %v3228 = vunpack.c.l.b16 %v3090
        %v3229 = vunpack.c.l.b16 %v3091
        %v3230 = vunpack.c.l.b16 %v3092
        %v3231 = vunpack.c.l.b16 %v3093
        %v3232 = vunpack.c.l.b16 %v3094
        %v3233 = vunpack.c.l.b16 %v3095
        %v3234 = vunpack.c.l.b16 %v3096
        %v3235 = vunpack.c.l.b16 %v3097
        %v3236 = vunpack.c.l.b16 %v3098
        %v3237 = vunpack.c.l.b16 %v3099
        %v3238 = vunpack.c.l.b16 %v3100
        %v3239 = vunpack.c.l.b16 %v3101
        %v3240 = vpack.c.b16 %v3229, %v3228
        %v3241 = vpack.c.b16 %v3231, %v3230
        %v3242 = vpack.c.b16 %v3233, %v3232
        %v3243 = vpack.c.b16 %v3235, %v3234
        %v3244 = vpack.c.b16 %v3237, %v3236
        %v3245 = vpack.c.b16 %v3239, %v3238
        %3252 = vmatprep.subr.bf16.mxu0 0
        %3253 = vmatpush1.bf16.msra.mxu0 %v3240
        %3254 = vmatprep.subr.bf16.mxu0 0
        %3255 = vmatpush1.bf16.msra.mxu0 %v3241
        %3256 = vmatprep.subr.bf16.mxu0 0
        %3257 = vmatpush1.bf16.msra.mxu0 %v3242
        %3258 = vmatprep.subr.bf16.mxu0 0
        %3259 = vmatpush1.bf16.msra.mxu0 %v3243
        %3260 = vmatprep.subr.bf16.mxu0 0
        %3261 = vmatpush1.bf16.msra.mxu0 %v3244
        %3262 = vmatprep.subr.bf16.mxu0 0
        %3263 = vmatpush1.bf16.msra.mxu0 %v3245
        %3264 = vmatprep.subr.bf16.mxu0 0
        %3265 = vmatpush1.bf16.msra.mxu0 0
        %3266 = vmatprep.subr.bf16.mxu0 0
        %3267 = vmatpush1.bf16.msra.mxu0 0
        %3268 = vmatprep.subr.bf16.mxu0 0
        %3269 = vmatpush1.bf16.msra.mxu0 0
        %3270 = vmatprep.subr.bf16.mxu0 0
        %3271 = vmatpush1.bf16.msra.mxu0 0
        %3272 = vmatprep.subr.bf16.mxu0 0
        %3273 = vmatpush1.bf16.msra.mxu0 0
        %3274 = vmatprep.subr.bf16.mxu0 0
        %3275 = vmatpush1.bf16.msra.mxu0 0
        %3276 = vmatprep.subr.bf16.mxu0 0
        %3277 = vmatpush1.bf16.msra.mxu0 0
        %3278 = vmatprep.subr.bf16.mxu0 0
        %3279 = vmatpush1.bf16.msra.mxu0 0
        %3280 = vmatprep.subr.bf16.mxu0 0
        %3281 = vmatpush1.bf16.msra.mxu0 0
        %3282 = vmatprep.subr.bf16.mxu0 0
        %3283 = vmatpush1.bf16.msra.mxu0 0
        %3284 = vmatprep.mubr.bf16.mxu0 0
        %3285 = vmatmul.mubr.bf16.gmra.mrb[0].mxu0 %v1094
        %v3286 = vpop.f32.mrb[0].mxu0
        %v3287 = vadd.f32 %v3186, %v3286
        %v3288 = vpop.f32.mrb[0].mxu0
        %v3289 = vpop.f32.mrb[0].mxu0
        %v3290 = vadd.f32 %v3189, %v3289
        %v3291 = vpop.f32.mrb[0].mxu0
        %3292 = vmatprep.mubr.bf16.mxu0 0
        %3293 = vmatmul.mubr.bf16.gmra.mrb[0].mxu0 %v1097
        %v3294 = vpop.f32.mrb[0].mxu0
        %v3295 = vadd.f32 %v3194, %v3294
        %v3296 = vpop.f32.mrb[0].mxu0
        %v3297 = vpop.f32.mrb[0].mxu0
        %v3298 = vadd.f32 %v3197, %v3297
        %v3299 = vpop.f32.mrb[0].mxu0
        %3300 = vmatprep.mubr.bf16.mxu0 0
        %3301 = vmatmul.mubr.bf16.gmra.mrb[0].mxu0 %v1100
        %v3302 = vpop.f32.mrb[0].mxu0
        %v3303 = vadd.f32 %v3202, %v3302
        %v3304 = vpop.f32.mrb[0].mxu0
        %v3305 = vpop.f32.mrb[0].mxu0
        %v3306 = vadd.f32 %v3205, %v3305
        %v3307 = vpop.f32.mrb[0].mxu0
        %3308 = vmatprep.mubr.bf16.mxu0 0
        %3309 = vmatmul.mubr.bf16.gmra.mrb[0].mxu0 %v1103
        %v3310 = vpop.f32.mrb[0].mxu0
        %v3311 = vadd.f32 %v3210, %v3310
        %v3312 = vpop.f32.mrb[0].mxu0
        %v3313 = vpop.f32.mrb[0].mxu0
        %v3314 = vadd.f32 %v3213, %v3313
        %v3315 = vpop.f32.mrb[0].mxu0
        %3316 = vdwg.mxu0
        %s3317 = scalar_lea.vmem %s7, 384
        %v3318 = vld [vmem:[%s3317] sm:$0xf]
        %v3319 = vld [vmem:[%s3317 + $0x4] sm:$0xf]
        %v3320 = vld [vmem:[%s3317 + $0x8] sm:$0xf]
        %v3321 = vld [vmem:[%s3317 + $0xc] sm:$0xf]
        %v3322 = vld [vmem:[%s3317 + $0x10] sm:$0xf]
        %v3323 = vld [vmem:[%s3317 + $0x14] sm:$0xf]
        %v3324 = vld [vmem:[%s3317 + $0x18] sm:$0xf]
        %v3325 = vld [vmem:[%s3317 + $0x1c] sm:$0xf]
        %v3326 = vld [vmem:[%s3317 + $0x20] sm:$0xf]
        %v3327 = vld [vmem:[%s3317 + $0x24] sm:$0xf]
        %v3328 = vld [vmem:[%s3317 + $0x28] sm:$0xf]
        %v3329 = vld [vmem:[%s3317 + $0x2c] sm:$0xf]
        %v3342 = vunpack.c.l.b16 %v3318
        %v3343 = vunpack.c.l.b16 %v3319
        %v3344 = vunpack.c.l.b16 %v3320
        %v3345 = vunpack.c.l.b16 %v3321
        %v3346 = vunpack.c.l.b16 %v3322
        %v3347 = vunpack.c.l.b16 %v3323
        %v3348 = vunpack.c.l.b16 %v3324
        %v3349 = vunpack.c.l.b16 %v3325
        %v3350 = vunpack.c.l.b16 %v3326
        %v3351 = vunpack.c.l.b16 %v3327
        %v3352 = vunpack.c.l.b16 %v3328
        %v3353 = vunpack.c.l.b16 %v3329
        %v3354 = vpack.c.b16 %v3343, %v3342
        %v3355 = vpack.c.b16 %v3345, %v3344
        %v3356 = vpack.c.b16 %v3347, %v3346
        %v3357 = vpack.c.b16 %v3349, %v3348
        %v3358 = vpack.c.b16 %v3351, %v3350
        %v3359 = vpack.c.b16 %v3353, %v3352
        %3366 = vmatprep.subr.bf16.mxu0 0
        %3367 = vmatpush1.bf16.msra.mxu0 %v3354
        %3368 = vmatprep.subr.bf16.mxu0 0
        %3369 = vmatpush1.bf16.msra.mxu0 %v3355
        %3370 = vmatprep.subr.bf16.mxu0 0
        %3371 = vmatpush1.bf16.msra.mxu0 %v3356
        %3372 = vmatprep.subr.bf16.mxu0 0
        %3373 = vmatpush1.bf16.msra.mxu0 %v3357
        %3374 = vmatprep.subr.bf16.mxu0 0
        %3375 = vmatpush1.bf16.msra.mxu0 %v3358
        %3376 = vmatprep.subr.bf16.mxu0 0
        %3377 = vmatpush1.bf16.msra.mxu0 %v3359
        %3378 = vmatprep.subr.bf16.mxu0 0
        %3379 = vmatpush1.bf16.msra.mxu0 0
        %3380 = vmatprep.subr.bf16.mxu0 0
        %3381 = vmatpush1.bf16.msra.mxu0 0
        %3382 = vmatprep.subr.bf16.mxu0 0
        %3383 = vmatpush1.bf16.msra.mxu0 0
        %3384 = vmatprep.subr.bf16.mxu0 0
        %3385 = vmatpush1.bf16.msra.mxu0 0
        %3386 = vmatprep.subr.bf16.mxu0 0
        %3387 = vmatpush1.bf16.msra.mxu0 0
        %3388 = vmatprep.subr.bf16.mxu0 0
        %3389 = vmatpush1.bf16.msra.mxu0 0
        %3390 = vmatprep.subr.bf16.mxu0 0
        %3391 = vmatpush1.bf16.msra.mxu0 0
        %3392 = vmatprep.subr.bf16.mxu0 0
        %3393 = vmatpush1.bf16.msra.mxu0 0
        %3394 = vmatprep.subr.bf16.mxu0 0
        %3395 = vmatpush1.bf16.msra.mxu0 0
        %3396 = vmatprep.subr.bf16.mxu0 0
        %3397 = vmatpush1.bf16.msra.mxu0 0
        %3398 = vmatprep.mubr.bf16.mxu0 0
        %3399 = vmatmul.mubr.bf16.gmra.mrb[0].mxu0 %v1097
        %v3400 = vpop.f32.mrb[0].mxu0
        %v3401 = vadd.f32 0.0, %v3400
        %v3402 = vpop.f32.mrb[0].mxu0
        %v3403 = vpop.f32.mrb[0].mxu0
        %v3404 = vadd.f32 0.0, %v3403
        %v3405 = vpop.f32.mrb[0].mxu0
        %3406 = vmatprep.mubr.bf16.mxu0 0
        %3407 = vmatmul.mubr.bf16.gmra.mrb[0].mxu0 %v1100
        %v3408 = vpop.f32.mrb[0].mxu0
        %v3409 = vadd.f32 0.0, %v3408
        %v3410 = vpop.f32.mrb[0].mxu0
        %v3411 = vpop.f32.mrb[0].mxu0
        %v3412 = vadd.f32 0.0, %v3411
        %v3413 = vpop.f32.mrb[0].mxu0
        %3414 = vmatprep.mubr.bf16.mxu0 0
        %3415 = vmatmul.mubr.bf16.gmra.mrb[0].mxu0 %v1103
        %v3416 = vpop.f32.mrb[0].mxu0
        %v3417 = vadd.f32 0.0, %v3416
        %v3418 = vpop.f32.mrb[0].mxu0
        %v3419 = vpop.f32.mrb[0].mxu0
        %v3420 = vadd.f32 0.0, %v3419
        %v3421 = vpop.f32.mrb[0].mxu0
        %3422 = vmatprep.mubr.bf16.mxu0 0
        %3423 = vmatmul.mubr.bf16.gmra.mrb[0].mxu0 %v1220
        %v3424 = vpop.f32.mrb[0].mxu0
        %v3425 = vadd.f32 0.0, %v3424
        %v3426 = vpop.f32.mrb[0].mxu0
        %v3427 = vpop.f32.mrb[0].mxu0
        %v3428 = vadd.f32 0.0, %v3427
        %v3429 = vpop.f32.mrb[0].mxu0
        %3430 = vdwg.mxu0
        %v3431 = vadd.f32 %v3287, %v3401
        %v3432 = vadd.f32 %v3290, %v3404
        %v3433 = vadd.f32 %v3295, %v3409
        %v3434 = vadd.f32 %v3298, %v3412
        %v3435 = vadd.f32 %v3303, %v3417
        %v3436 = vadd.f32 %v3306, %v3420
        %v3437 = vadd.f32 %v3311, %v3425
        %v3438 = vadd.f32 %v3314, %v3428
        %3439 = vmatprep.subr.mxu0 0.0
        %3440 = vmatpush1.msra.mxu0 %v3431
        %3441 = vmatprep.subr.mxu0 0.0
        %3442 = vmatpush1.msra.mxu0 %v3432
        %3443 = vmatprep.subr.mxu0 0.0
        %3444 = vmatpush1.msra.mxu0 %v3433
        %3445 = vmatprep.subr.mxu0 0.0
        %3446 = vmatpush1.msra.mxu0 %v3434
        %3447 = vmatprep.subr.mxu0 0.0
        %3448 = vmatpush1.msra.mxu0 %v3435
        %3449 = vmatprep.subr.mxu0 0.0
        %3450 = vmatpush1.msra.mxu0 %v3436
        %3451 = vmatprep.subr.mxu0 0.0
        %3452 = vmatpush1.msra.mxu0 %v3437
        %3453 = vmatprep.subr.mxu0 0.0
        %3454 = vmatpush1.msra.mxu0 %v3438
        %3455 = vmatprep.subr.mxu0 0.0
        %3456 = vmatpush1.msra.mxu0 0.0
        %3457 = vmatprep.subr.mxu0 0.0
        %3458 = vmatpush1.msra.mxu0 0.0
        %3459 = vmatprep.subr.mxu0 0.0
        %3460 = vmatpush1.msra.mxu0 0.0
        %3461 = vmatprep.subr.mxu0 0.0
        %3462 = vmatpush1.msra.mxu0 0.0
        %3463 = vmatprep.subr.mxu0 0.0
        %3464 = vmatpush1.msra.mxu0 0.0
        %3465 = vmatprep.subr.mxu0 0.0
        %3466 = vmatpush1.msra.mxu0 0.0
        %3467 = vmatprep.subr.mxu0 0.0
        %3468 = vmatpush1.msra.mxu0 0.0
        %3469 = vmatprep.subr.mxu0 0.0
        %3470 = vmatpush1.msra.mxu0 0.0
        %3471 = vmatprep.subr.mxu0 0.0
        %3472 = vmatpush1.msra.mxu0 0.0
        %3473 = vmatprep.subr.mxu0 0.0
        %3474 = vmatpush1.msra.mxu0 0.0
        %3475 = vmatprep.subr.mxu0 0.0
        %3476 = vmatpush1.msra.mxu0 0.0
        %3477 = vmatprep.subr.mxu0 0.0
        %3478 = vmatpush1.msra.mxu0 0.0
        %3479 = vmatprep.subr.mxu0 0.0
        %3480 = vmatpush1.msra.mxu0 0.0
        %3481 = vmatprep.subr.mxu0 0.0
        %3482 = vmatpush1.msra.mxu0 0.0
        %3483 = vmatprep.subr.mxu0 0.0
        %3484 = vmatpush1.msra.mxu0 0.0
        %3485 = vmatprep.subr.mxu0 0.0
        %3486 = vmatpush1.msra.mxu0 0.0
        %3487 = vmatprep.subr.mxu0 0.0
        %3488 = vmatpush1.msra.mxu0 0.0
        %3489 = vmatprep.subr.mxu0 0.0
        %3490 = vmatpush1.msra.mxu0 0.0
        %3491 = vmatprep.subr.mxu0 0.0
        %3492 = vmatpush1.msra.mxu0 0.0
        %3493 = vmatprep.subr.mxu0 0.0
        %3494 = vmatpush1.msra.mxu0 0.0
        %3495 = vmatprep.subr.mxu0 0.0
        %3496 = vmatpush1.msra.mxu0 0.0
        %3497 = vmatprep.subr.mxu0 0.0
        %3498 = vmatpush1.msra.mxu0 0.0
        %3499 = vmatprep.subr.mxu0 0.0
        %3500 = vmatpush1.msra.mxu0 0.0
        %3501 = vmatprep.subr.mxu0 0.0
        %3502 = vmatpush1.msra.mxu0 0.0
        %3503 = vmatprep.mubr.f32.mxu0 0.0
        %3504 = vmatmul.mubr.f32.gmra.mrb[0].mxu0 %v2126
        %v3505 = vpop.f32.mrb[0].mxu0
        %v3506 = vadd.f32 0.0, %v3505
        %v3507 = vpop.f32.mrb[0].mxu0
        %3508 = vmatprep.mubr.f32.mxu0 0.0
        %3509 = vmatmul.mubr.f32.gmra.mrb[0].mxu0 %v2129
        %v3510 = vpop.f32.mrb[0].mxu0
        %v3511 = vadd.f32 0.0, %v3510
        %v3512 = vpop.f32.mrb[0].mxu0
        %3513 = vmatprep.mubr.f32.mxu0 0.0
        %3514 = vmatmul.mubr.f32.gmra.mrb[0].mxu0 %v2132
        %v3515 = vpop.f32.mrb[0].mxu0
        %v3516 = vadd.f32 0.0, %v3515
        %v3517 = vpop.f32.mrb[0].mxu0
        %3518 = vmatprep.mubr.f32.mxu0 0.0
        %3519 = vmatmul.mubr.f32.gmra.mrb[0].mxu0 %v2135
        %v3520 = vpop.f32.mrb[0].mxu0
        %v3521 = vadd.f32 0.0, %v3520
        %v3522 = vpop.f32.mrb[0].mxu0
        %3523 = vmatprep.mubr.f32.mxu0 0.0
        %3524 = vmatmul.mubr.f32.gmra.mrb[0].mxu0 %v2138
        %v3525 = vpop.f32.mrb[0].mxu0
        %v3526 = vadd.f32 0.0, %v3525
        %v3527 = vpop.f32.mrb[0].mxu0
        %3528 = vmatprep.mubr.f32.mxu0 0.0
        %3529 = vmatmul.mubr.f32.gmra.mrb[0].mxu0 %v2141
        %v3530 = vpop.f32.mrb[0].mxu0
        %v3531 = vadd.f32 0.0, %v3530
        %v3532 = vpop.f32.mrb[0].mxu0
        %3533 = vmatprep.mubr.f32.mxu0 0.0
        %3534 = vmatmul.mubr.f32.gmra.mrb[0].mxu0 %v2144
        %v3535 = vpop.f32.mrb[0].mxu0
        %v3536 = vadd.f32 0.0, %v3535
        %v3537 = vpop.f32.mrb[0].mxu0
        %3538 = vmatprep.mubr.f32.mxu0 0.0
        %3539 = vmatmul.mubr.f32.gmra.mrb[0].mxu0 %v2147
        %v3540 = vpop.f32.mrb[0].mxu0
        %v3541 = vadd.f32 0.0, %v3540
        %v3542 = vpop.f32.mrb[0].mxu0
        %3543 = vdwg.mxu0
        %v3544 = vadd.f32 %v3051, %v3506
        %v3545 = vadd.f32 %v3056, %v3511
        %v3546 = vadd.f32 %v3061, %v3516
        %v3547 = vadd.f32 %v3066, %v3521
        %v3548 = vadd.f32 %v3071, %v3526
        %v3549 = vadd.f32 %v3076, %v3531
        %v3550 = vadd.f32 %v3081, %v3536
        %v3551 = vadd.f32 %v3086, %v3541
        %v3552 = vld [vmem:[%s8] sm:$0x1]
        %v3554 = vlaneseq
        %v3555 = vshrl.u32 %v3554, 7
        %v3556 = vsub.s32 0, %v3555
        %v3557 = vrot.slane %v3552, %v3556
        %v3559 = vadd.f32 %v3544, %v3557
        %v3560 = vadd.f32 %v3545, %v3557
        %v3561 = vadd.f32 %v3546, %v3557
        %v3562 = vadd.f32 %v3547, %v3557
        %v3563 = vadd.f32 %v3548, %v3557
        %v3564 = vadd.f32 %v3549, %v3557
        %v3565 = vadd.f32 %v3550, %v3557
        %v3566 = vadd.f32 %v3551, %v3557
        %v3567 = vmax.f32 %v3559, 0.0
        %v3568 = vmax.f32 %v3560, 0.0
        %v3569 = vmax.f32 %v3561, 0.0
        %v3570 = vmax.f32 %v3562, 0.0
        %v3571 = vmax.f32 %v3563, 0.0
        %v3572 = vmax.f32 %v3564, 0.0
        %v3573 = vmax.f32 %v3565, 0.0
        %v3574 = vmax.f32 %v3566, 0.0
        %vm3575 = vcmask 392192
        %3576 = vst.msk [vmem:[#allocation3] sm:$0xff] %vm3575, 0.0
        %3577 = vst.msk [vmem:[#allocation3 + $0x48] sm:$0xff] %vm3575, 0.0
        %3578 = vst.msk [vmem:[#allocation3 + $0x8] sm:$0xff] %vm3575, %v2277
        %3579 = vst.msk [vmem:[#allocation3 + $0x10] sm:$0xff] %vm3575, %v2278
        %3580 = vst.msk [vmem:[#allocation3 + $0x18] sm:$0xff] %vm3575, %v2279
        %3581 = vst.msk [vmem:[#allocation3 + $0x20] sm:$0xff] %vm3575, %v2280
        %3582 = vst.msk [vmem:[#allocation3 + $0x28] sm:$0xff] %vm3575, %v2281
        %3583 = vst.msk [vmem:[#allocation3 + $0x30] sm:$0xff] %vm3575, %v2282
        %3584 = vst.msk [vmem:[#allocation3 + $0x38] sm:$0xff] %vm3575, %v2283
        %3585 = vst.msk [vmem:[#allocation3 + $0x40] sm:$0xff] %vm3575, %v2284
        %v3586 = vld [vmem:[#allocation3] sm:$0xff]
        %v3587 = vld [vmem:[#allocation3 + $0x8] sm:$0xff]
        %v3588 = vld [vmem:[#allocation3 + $0x10] sm:$0xff]
        %v3589 = vld [vmem:[#allocation3 + $0x18] sm:$0xff]
        %v3590 = vld [vmem:[#allocation3 + $0x20] sm:$0xff]
        %v3591 = vld [vmem:[#allocation3 + $0x28] sm:$0xff]
        %v3592 = vld [vmem:[#allocation3 + $0x30] sm:$0xff]
        %v3593 = vld [vmem:[#allocation3 + $0x38] sm:$0xff]
        %v3594 = vpack.c.bf16 %v3587, %v3586
        %v3595 = vpack.c.bf16 %v3589, %v3588
        %v3596 = vpack.c.bf16 %v3591, %v3590
        %v3597 = vpack.c.bf16 %v3593, %v3592
        %v3598 = vld [vmem:[#allocation3 + $0x40] sm:$0xff]
        %v3599 = vpack.c.bf16 %v3588, %v3587
        %v3600 = vpack.c.bf16 %v3590, %v3589
        %v3601 = vpack.c.bf16 %v3592, %v3591
        %v3602 = vpack.c.bf16 %v3598, %v3593
        %v3603 = vld [vmem:[#allocation3 + $0x48] sm:$0xff]
        %v3604 = vpack.c.bf16 %v3603, %v3598
        %v3605 = vld [vmem:[%s9] sm:$0xf]
        %v3606 = vld [vmem:[%s9 + $0x4] sm:$0xf]
        %v3607 = vld [vmem:[%s9 + $0x8] sm:$0xf]
        %v3608 = vld [vmem:[%s9 + $0xc] sm:$0xf]
        %v3609 = vld [vmem:[%s9 + $0x10] sm:$0xf]
        %v3610 = vld [vmem:[%s9 + $0x14] sm:$0xf]
        %s3611 = scalar_lea.vmem %s9, 72
        %v3612 = vld [vmem:[%s3611] sm:$0xf]
        %v3613 = vld [vmem:[%s3611 + $0x4] sm:$0xf]
        %v3614 = vld [vmem:[%s3611 + $0x8] sm:$0xf]
        %v3615 = vld [vmem:[%s3611 + $0xc] sm:$0xf]
        %v3616 = vld [vmem:[%s3611 + $0x10] sm:$0xf]
        %v3617 = vld [vmem:[%s3611 + $0x14] sm:$0xf]
        %v3624 = vunpack.c.l.b16 %v3612
        %v3625 = vunpack.c.l.b16 %v3613
        %v3626 = vunpack.c.l.b16 %v3614
        %v3627 = vunpack.c.l.b16 %v3615
        %v3628 = vunpack.c.l.b16 %v3616
        %v3629 = vunpack.c.l.b16 %v3617
        %v3630 = vpack.c.b16 %v3625, %v3624
        %v3631 = vpack.c.b16 %v3627, %v3626
        %v3632 = vpack.c.b16 %v3629, %v3628
        %v3637 = vsel %vm3575, %v3599, 0
        %v3640 = vsel %vm3575, %v3600, 0
        %v3643 = vsel %vm3575, %v3601, 0
        %v3646 = vsel %vm3575, %v3602, 0
        %3648 = vmatprep.subr.bf16.mxu0 0
        %3649 = vmatpush1.bf16.msra.mxu0 %v3630
        %3650 = vmatprep.subr.bf16.mxu0 0
        %3651 = vmatpush1.bf16.msra.mxu0 %v3631
        %3652 = vmatprep.subr.bf16.mxu0 0
        %3653 = vmatpush1.bf16.msra.mxu0 %v3632
        %3654 = vmatprep.subr.bf16.mxu0 0
        %3655 = vmatpush1.bf16.msra.mxu0 0
        %3656 = vmatprep.subr.bf16.mxu0 0
        %3657 = vmatpush1.bf16.msra.mxu0 0
        %3658 = vmatprep.subr.bf16.mxu0 0
        %3659 = vmatpush1.bf16.msra.mxu0 0
        %3660 = vmatprep.subr.bf16.mxu0 0
        %3661 = vmatpush1.bf16.msra.mxu0 0
        %3662 = vmatprep.subr.bf16.mxu0 0
        %3663 = vmatpush1.bf16.msra.mxu0 0
        %3664 = vmatprep.subr.bf16.mxu0 0
        %3665 = vmatpush1.bf16.msra.mxu0 0
        %3666 = vmatprep.subr.bf16.mxu0 0
        %3667 = vmatpush1.bf16.msra.mxu0 0
        %3668 = vmatprep.subr.bf16.mxu0 0
        %3669 = vmatpush1.bf16.msra.mxu0 0
        %3670 = vmatprep.subr.bf16.mxu0 0
        %3671 = vmatpush1.bf16.msra.mxu0 0
        %3672 = vmatprep.subr.bf16.mxu0 0
        %3673 = vmatpush1.bf16.msra.mxu0 0
        %3674 = vmatprep.subr.bf16.mxu0 0
        %3675 = vmatpush1.bf16.msra.mxu0 0
        %3676 = vmatprep.subr.bf16.mxu0 0
        %3677 = vmatpush1.bf16.msra.mxu0 0
        %3678 = vmatprep.subr.bf16.mxu0 0
        %3679 = vmatpush1.bf16.msra.mxu0 0
        %3680 = vmatprep.mubr.bf16.mxu0 0
        %3681 = vmatmul.mubr.bf16.gmra.mrb[0].mxu0 %v3637
        %v3682 = vpop.f32.mrb[0].mxu0
        %v3683 = vadd.f32 0.0, %v3682
        %v3684 = vpop.f32.mrb[0].mxu0
        %v3685 = vpop.f32.mrb[0].mxu0
        %v3686 = vadd.f32 0.0, %v3685
        %v3687 = vpop.f32.mrb[0].mxu0
        %3688 = vmatprep.mubr.bf16.mxu0 0
        %3689 = vmatmul.mubr.bf16.gmra.mrb[0].mxu0 %v3640
        %v3690 = vpop.f32.mrb[0].mxu0
        %v3691 = vadd.f32 0.0, %v3690
        %v3692 = vpop.f32.mrb[0].mxu0
        %v3693 = vpop.f32.mrb[0].mxu0
        %v3694 = vadd.f32 0.0, %v3693
        %v3695 = vpop.f32.mrb[0].mxu0
        %3696 = vmatprep.mubr.bf16.mxu0 0
        %3697 = vmatmul.mubr.bf16.gmra.mrb[0].mxu0 %v3643
        %v3698 = vpop.f32.mrb[0].mxu0
        %v3699 = vadd.f32 0.0, %v3698
        %v3700 = vpop.f32.mrb[0].mxu0
        %v3701 = vpop.f32.mrb[0].mxu0
        %v3702 = vadd.f32 0.0, %v3701
        %v3703 = vpop.f32.mrb[0].mxu0
        %3704 = vmatprep.mubr.bf16.mxu0 0
        %3705 = vmatmul.mubr.bf16.gmra.mrb[0].mxu0 %v3646
        %v3706 = vpop.f32.mrb[0].mxu0
        %v3707 = vadd.f32 0.0, %v3706
        %v3708 = vpop.f32.mrb[0].mxu0
        %v3709 = vpop.f32.mrb[0].mxu0
        %v3710 = vadd.f32 0.0, %v3709
        %v3711 = vpop.f32.mrb[0].mxu0
        %3712 = vdwg.mxu0
        %v3719 = vunpack.c.l.b16 %v3605
        %v3720 = vunpack.c.l.b16 %v3606
        %v3721 = vunpack.c.l.b16 %v3607
        %v3722 = vunpack.c.l.b16 %v3608
        %v3723 = vunpack.c.l.b16 %v3609
        %v3724 = vunpack.c.l.b16 %v3610
        %v3725 = vpack.c.b16 %v3720, %v3719
        %v3726 = vpack.c.b16 %v3722, %v3721
        %v3727 = vpack.c.b16 %v3724, %v3723
        %v3732 = vsel %vm3575, %v3594, 0
        %v3735 = vsel %vm3575, %v3595, 0
        %v3738 = vsel %vm3575, %v3596, 0
        %v3741 = vsel %vm3575, %v3597, 0
        %3743 = vmatprep.subr.bf16.mxu0 0
        %3744 = vmatpush1.bf16.msra.mxu0 %v3725
        %3745 = vmatprep.subr.bf16.mxu0 0
        %3746 = vmatpush1.bf16.msra.mxu0 %v3726
        %3747 = vmatprep.subr.bf16.mxu0 0
        %3748 = vmatpush1.bf16.msra.mxu0 %v3727
        %3749 = vmatprep.subr.bf16.mxu0 0
        %3750 = vmatpush1.bf16.msra.mxu0 0
        %3751 = vmatprep.subr.bf16.mxu0 0
        %3752 = vmatpush1.bf16.msra.mxu0 0
        %3753 = vmatprep.subr.bf16.mxu0 0
        %3754 = vmatpush1.bf16.msra.mxu0 0
        %3755 = vmatprep.subr.bf16.mxu0 0
        %3756 = vmatpush1.bf16.msra.mxu0 0
        %3757 = vmatprep.subr.bf16.mxu0 0
        %3758 = vmatpush1.bf16.msra.mxu0 0
        %3759 = vmatprep.subr.bf16.mxu0 0
        %3760 = vmatpush1.bf16.msra.mxu0 0
        %3761 = vmatprep.subr.bf16.mxu0 0
        %3762 = vmatpush1.bf16.msra.mxu0 0
        %3763 = vmatprep.subr.bf16.mxu0 0
        %3764 = vmatpush1.bf16.msra.mxu0 0
        %3765 = vmatprep.subr.bf16.mxu0 0
        %3766 = vmatpush1.bf16.msra.mxu0 0
        %3767 = vmatprep.subr.bf16.mxu0 0
        %3768 = vmatpush1.bf16.msra.mxu0 0
        %3769 = vmatprep.subr.bf16.mxu0 0
        %3770 = vmatpush1.bf16.msra.mxu0 0
        %3771 = vmatprep.subr.bf16.mxu0 0
        %3772 = vmatpush1.bf16.msra.mxu0 0
        %3773 = vmatprep.subr.bf16.mxu0 0
        %3774 = vmatpush1.bf16.msra.mxu0 0
        %3775 = vmatprep.mubr.bf16.mxu0 0
        %3776 = vmatmul.mubr.bf16.gmra.mrb[0].mxu0 %v3732
        %v3777 = vpop.f32.mrb[0].mxu0
        %v3778 = vadd.f32 %v3683, %v3777
        %v3779 = vpop.f32.mrb[0].mxu0
        %v3780 = vpop.f32.mrb[0].mxu0
        %v3781 = vadd.f32 %v3686, %v3780
        %v3782 = vpop.f32.mrb[0].mxu0
        %3783 = vmatprep.mubr.bf16.mxu0 0
        %3784 = vmatmul.mubr.bf16.gmra.mrb[0].mxu0 %v3735
        %v3785 = vpop.f32.mrb[0].mxu0
        %v3786 = vadd.f32 %v3691, %v3785
        %v3787 = vpop.f32.mrb[0].mxu0
        %v3788 = vpop.f32.mrb[0].mxu0
        %v3789 = vadd.f32 %v3694, %v3788
        %v3790 = vpop.f32.mrb[0].mxu0
        %3791 = vmatprep.mubr.bf16.mxu0 0
        %3792 = vmatmul.mubr.bf16.gmra.mrb[0].mxu0 %v3738
        %v3793 = vpop.f32.mrb[0].mxu0
        %v3794 = vadd.f32 %v3699, %v3793
        %v3795 = vpop.f32.mrb[0].mxu0
        %v3796 = vpop.f32.mrb[0].mxu0
        %v3797 = vadd.f32 %v3702, %v3796
        %v3798 = vpop.f32.mrb[0].mxu0
        %3799 = vmatprep.mubr.bf16.mxu0 0
        %3800 = vmatmul.mubr.bf16.gmra.mrb[0].mxu0 %v3741
        %v3801 = vpop.f32.mrb[0].mxu0
        %v3802 = vadd.f32 %v3707, %v3801
        %v3803 = vpop.f32.mrb[0].mxu0
        %v3804 = vpop.f32.mrb[0].mxu0
        %v3805 = vadd.f32 %v3710, %v3804
        %v3806 = vpop.f32.mrb[0].mxu0
        %3807 = vdwg.mxu0
        %s3808 = scalar_lea.vmem %s9, 144
        %v3809 = vld [vmem:[%s3808] sm:$0xf]
        %v3810 = vld [vmem:[%s3808 + $0x4] sm:$0xf]
        %v3811 = vld [vmem:[%s3808 + $0x8] sm:$0xf]
        %v3812 = vld [vmem:[%s3808 + $0xc] sm:$0xf]
        %v3813 = vld [vmem:[%s3808 + $0x10] sm:$0xf]
        %v3814 = vld [vmem:[%s3808 + $0x14] sm:$0xf]
        %v3821 = vunpack.c.l.b16 %v3809
        %v3822 = vunpack.c.l.b16 %v3810
        %v3823 = vunpack.c.l.b16 %v3811
        %v3824 = vunpack.c.l.b16 %v3812
        %v3825 = vunpack.c.l.b16 %v3813
        %v3826 = vunpack.c.l.b16 %v3814
        %v3827 = vpack.c.b16 %v3822, %v3821
        %v3828 = vpack.c.b16 %v3824, %v3823
        %v3829 = vpack.c.b16 %v3826, %v3825
        %v3834 = vsel %vm3575, %v3604, 0
        %3836 = vmatprep.subr.bf16.mxu0 0
        %3837 = vmatpush1.bf16.msra.mxu0 %v3827
        %3838 = vmatprep.subr.bf16.mxu0 0
        %3839 = vmatpush1.bf16.msra.mxu0 %v3828
        %3840 = vmatprep.subr.bf16.mxu0 0
        %3841 = vmatpush1.bf16.msra.mxu0 %v3829
        %3842 = vmatprep.subr.bf16.mxu0 0
        %3843 = vmatpush1.bf16.msra.mxu0 0
        %3844 = vmatprep.subr.bf16.mxu0 0
        %3845 = vmatpush1.bf16.msra.mxu0 0
        %3846 = vmatprep.subr.bf16.mxu0 0
        %3847 = vmatpush1.bf16.msra.mxu0 0
        %3848 = vmatprep.subr.bf16.mxu0 0
        %3849 = vmatpush1.bf16.msra.mxu0 0
        %3850 = vmatprep.subr.bf16.mxu0 0
        %3851 = vmatpush1.bf16.msra.mxu0 0
        %3852 = vmatprep.subr.bf16.mxu0 0
        %3853 = vmatpush1.bf16.msra.mxu0 0
        %3854 = vmatprep.subr.bf16.mxu0 0
        %3855 = vmatpush1.bf16.msra.mxu0 0
        %3856 = vmatprep.subr.bf16.mxu0 0
        %3857 = vmatpush1.bf16.msra.mxu0 0
        %3858 = vmatprep.subr.bf16.mxu0 0
        %3859 = vmatpush1.bf16.msra.mxu0 0
        %3860 = vmatprep.subr.bf16.mxu0 0
        %3861 = vmatpush1.bf16.msra.mxu0 0
        %3862 = vmatprep.subr.bf16.mxu0 0
        %3863 = vmatpush1.bf16.msra.mxu0 0
        %3864 = vmatprep.subr.bf16.mxu0 0
        %3865 = vmatpush1.bf16.msra.mxu0 0
        %3866 = vmatprep.subr.bf16.mxu0 0
        %3867 = vmatpush1.bf16.msra.mxu0 0
        %3868 = vmatprep.mubr.bf16.mxu0 0
        %3869 = vmatmul.mubr.bf16.gmra.mrb[0].mxu0 %v3735
        %v3870 = vpop.f32.mrb[0].mxu0
        %v3871 = vadd.f32 0.0, %v3870
        %v3872 = vpop.f32.mrb[0].mxu0
        %v3873 = vpop.f32.mrb[0].mxu0
        %v3874 = vadd.f32 0.0, %v3873
        %v3875 = vpop.f32.mrb[0].mxu0
        %3876 = vmatprep.mubr.bf16.mxu0 0
        %3877 = vmatmul.mubr.bf16.gmra.mrb[0].mxu0 %v3738
        %v3878 = vpop.f32.mrb[0].mxu0
        %v3879 = vadd.f32 0.0, %v3878
        %v3880 = vpop.f32.mrb[0].mxu0
        %v3881 = vpop.f32.mrb[0].mxu0
        %v3882 = vadd.f32 0.0, %v3881
        %v3883 = vpop.f32.mrb[0].mxu0
        %3884 = vmatprep.mubr.bf16.mxu0 0
        %3885 = vmatmul.mubr.bf16.gmra.mrb[0].mxu0 %v3741
        %v3886 = vpop.f32.mrb[0].mxu0
        %v3887 = vadd.f32 0.0, %v3886
        %v3888 = vpop.f32.mrb[0].mxu0
        %v3889 = vpop.f32.mrb[0].mxu0
        %v3890 = vadd.f32 0.0, %v3889
        %v3891 = vpop.f32.mrb[0].mxu0
        %3892 = vmatprep.mubr.bf16.mxu0 0
        %3893 = vmatmul.mubr.bf16.gmra.mrb[0].mxu0 %v3834
        %v3894 = vpop.f32.mrb[0].mxu0
        %v3895 = vadd.f32 0.0, %v3894
        %v3896 = vpop.f32.mrb[0].mxu0
        %v3897 = vpop.f32.mrb[0].mxu0
        %v3898 = vadd.f32 0.0, %v3897
        %v3899 = vpop.f32.mrb[0].mxu0
        %3900 = vdwg.mxu0
        %v3901 = vadd.f32 %v3778, %v3871
        %v3902 = vadd.f32 %v3781, %v3874
        %v3903 = vadd.f32 %v3786, %v3879
        %v3904 = vadd.f32 %v3789, %v3882
        %v3905 = vadd.f32 %v3794, %v3887
        %v3906 = vadd.f32 %v3797, %v3890
        %v3907 = vadd.f32 %v3802, %v3895
        %v3908 = vadd.f32 %v3805, %v3898
        %s3909 = scalar_lea.vmem %s9, 24
        %v3910 = vld [vmem:[%s3909] sm:$0xf]
        %v3911 = vld [vmem:[%s3909 + $0x4] sm:$0xf]
        %v3912 = vld [vmem:[%s3909 + $0x8] sm:$0xf]
        %v3913 = vld [vmem:[%s3909 + $0xc] sm:$0xf]
        %v3914 = vld [vmem:[%s3909 + $0x10] sm:$0xf]
        %v3915 = vld [vmem:[%s3909 + $0x14] sm:$0xf]
        %s3916 = scalar_lea.vmem %s9, 96
        %v3917 = vld [vmem:[%s3916] sm:$0xf]
        %v3918 = vld [vmem:[%s3916 + $0x4] sm:$0xf]
        %v3919 = vld [vmem:[%s3916 + $0x8] sm:$0xf]
        %v3920 = vld [vmem:[%s3916 + $0xc] sm:$0xf]
        %v3921 = vld [vmem:[%s3916 + $0x10] sm:$0xf]
        %v3922 = vld [vmem:[%s3916 + $0x14] sm:$0xf]
        %v3929 = vunpack.c.l.b16 %v3917
        %v3930 = vunpack.c.l.b16 %v3918
        %v3931 = vunpack.c.l.b16 %v3919
        %v3932 = vunpack.c.l.b16 %v3920
        %v3933 = vunpack.c.l.b16 %v3921
        %v3934 = vunpack.c.l.b16 %v3922
        %v3935 = vpack.c.b16 %v3930, %v3929
        %v3936 = vpack.c.b16 %v3932, %v3931
        %v3937 = vpack.c.b16 %v3934, %v3933
        %3941 = vmatprep.subr.bf16.mxu0 0
        %3942 = vmatpush1.bf16.msra.mxu0 %v3935
        %3943 = vmatprep.subr.bf16.mxu0 0
        %3944 = vmatpush1.bf16.msra.mxu0 %v3936
        %3945 = vmatprep.subr.bf16.mxu0 0
        %3946 = vmatpush1.bf16.msra.mxu0 %v3937
        %3947 = vmatprep.subr.bf16.mxu0 0
        %3948 = vmatpush1.bf16.msra.mxu0 0
        %3949 = vmatprep.subr.bf16.mxu0 0
        %3950 = vmatpush1.bf16.msra.mxu0 0
        %3951 = vmatprep.subr.bf16.mxu0 0
        %3952 = vmatpush1.bf16.msra.mxu0 0
        %3953 = vmatprep.subr.bf16.mxu0 0
        %3954 = vmatpush1.bf16.msra.mxu0 0
        %3955 = vmatprep.subr.bf16.mxu0 0
        %3956 = vmatpush1.bf16.msra.mxu0 0
        %3957 = vmatprep.subr.bf16.mxu0 0
        %3958 = vmatpush1.bf16.msra.mxu0 0
        %3959 = vmatprep.subr.bf16.mxu0 0
        %3960 = vmatpush1.bf16.msra.mxu0 0
        %3961 = vmatprep.subr.bf16.mxu0 0
        %3962 = vmatpush1.bf16.msra.mxu0 0
        %3963 = vmatprep.subr.bf16.mxu0 0
        %3964 = vmatpush1.bf16.msra.mxu0 0
        %3965 = vmatprep.subr.bf16.mxu0 0
        %3966 = vmatpush1.bf16.msra.mxu0 0
        %3967 = vmatprep.subr.bf16.mxu0 0
        %3968 = vmatpush1.bf16.msra.mxu0 0
        %3969 = vmatprep.subr.bf16.mxu0 0
        %3970 = vmatpush1.bf16.msra.mxu0 0
        %3971 = vmatprep.subr.bf16.mxu0 0
        %3972 = vmatpush1.bf16.msra.mxu0 0
        %3973 = vmatprep.mubr.bf16.mxu0 0
        %3974 = vmatmul.mubr.bf16.gmra.mrb[0].mxu0 %v3637
        %v3975 = vpop.f32.mrb[0].mxu0
        %v3976 = vadd.f32 0.0, %v3975
        %v3977 = vpop.f32.mrb[0].mxu0
        %v3978 = vpop.f32.mrb[0].mxu0
        %v3979 = vadd.f32 0.0, %v3978
        %v3980 = vpop.f32.mrb[0].mxu0
        %3981 = vmatprep.mubr.bf16.mxu0 0
        %3982 = vmatmul.mubr.bf16.gmra.mrb[0].mxu0 %v3640
        %v3983 = vpop.f32.mrb[0].mxu0
        %v3984 = vadd.f32 0.0, %v3983
        %v3985 = vpop.f32.mrb[0].mxu0
        %v3986 = vpop.f32.mrb[0].mxu0
        %v3987 = vadd.f32 0.0, %v3986
        %v3988 = vpop.f32.mrb[0].mxu0
        %3989 = vmatprep.mubr.bf16.mxu0 0
        %3990 = vmatmul.mubr.bf16.gmra.mrb[0].mxu0 %v3643
        %v3991 = vpop.f32.mrb[0].mxu0
        %v3992 = vadd.f32 0.0, %v3991
        %v3993 = vpop.f32.mrb[0].mxu0
        %v3994 = vpop.f32.mrb[0].mxu0
        %v3995 = vadd.f32 0.0, %v3994
        %v3996 = vpop.f32.mrb[0].mxu0
        %3997 = vmatprep.mubr.bf16.mxu0 0
        %3998 = vmatmul.mubr.bf16.gmra.mrb[0].mxu0 %v3646
        %v3999 = vpop.f32.mrb[0].mxu0
        %v4000 = vadd.f32 0.0, %v3999
        %v4001 = vpop.f32.mrb[0].mxu0
        %v4002 = vpop.f32.mrb[0].mxu0
        %v4003 = vadd.f32 0.0, %v4002
        %v4004 = vpop.f32.mrb[0].mxu0
        %4005 = vdwg.mxu0
        %v4012 = vunpack.c.l.b16 %v3910
        %v4013 = vunpack.c.l.b16 %v3911
        %v4014 = vunpack.c.l.b16 %v3912
        %v4015 = vunpack.c.l.b16 %v3913
        %v4016 = vunpack.c.l.b16 %v3914
        %v4017 = vunpack.c.l.b16 %v3915
        %v4018 = vpack.c.b16 %v4013, %v4012
        %v4019 = vpack.c.b16 %v4015, %v4014
        %v4020 = vpack.c.b16 %v4017, %v4016
        %4024 = vmatprep.subr.bf16.mxu0 0
        %4025 = vmatpush1.bf16.msra.mxu0 %v4018
        %4026 = vmatprep.subr.bf16.mxu0 0
        %4027 = vmatpush1.bf16.msra.mxu0 %v4019
        %4028 = vmatprep.subr.bf16.mxu0 0
        %4029 = vmatpush1.bf16.msra.mxu0 %v4020
        %4030 = vmatprep.subr.bf16.mxu0 0
        %4031 = vmatpush1.bf16.msra.mxu0 0
        %4032 = vmatprep.subr.bf16.mxu0 0
        %4033 = vmatpush1.bf16.msra.mxu0 0
        %4034 = vmatprep.subr.bf16.mxu0 0
        %4035 = vmatpush1.bf16.msra.mxu0 0
        %4036 = vmatprep.subr.bf16.mxu0 0
        %4037 = vmatpush1.bf16.msra.mxu0 0
        %4038 = vmatprep.subr.bf16.mxu0 0
        %4039 = vmatpush1.bf16.msra.mxu0 0
        %4040 = vmatprep.subr.bf16.mxu0 0
        %4041 = vmatpush1.bf16.msra.mxu0 0
        %4042 = vmatprep.subr.bf16.mxu0 0
        %4043 = vmatpush1.bf16.msra.mxu0 0
        %4044 = vmatprep.subr.bf16.mxu0 0
        %4045 = vmatpush1.bf16.msra.mxu0 0
        %4046 = vmatprep.subr.bf16.mxu0 0
        %4047 = vmatpush1.bf16.msra.mxu0 0
        %4048 = vmatprep.subr.bf16.mxu0 0
        %4049 = vmatpush1.bf16.msra.mxu0 0
        %4050 = vmatprep.subr.bf16.mxu0 0
        %4051 = vmatpush1.bf16.msra.mxu0 0
        %4052 = vmatprep.subr.bf16.mxu0 0
        %4053 = vmatpush1.bf16.msra.mxu0 0
        %4054 = vmatprep.subr.bf16.mxu0 0
        %4055 = vmatpush1.bf16.msra.mxu0 0
        %4056 = vmatprep.mubr.bf16.mxu0 0
        %4057 = vmatmul.mubr.bf16.gmra.mrb[0].mxu0 %v3732
        %v4058 = vpop.f32.mrb[0].mxu0
        %v4059 = vadd.f32 %v3976, %v4058
        %v4060 = vpop.f32.mrb[0].mxu0
        %v4061 = vpop.f32.mrb[0].mxu0
        %v4062 = vadd.f32 %v3979, %v4061
        %v4063 = vpop.f32.mrb[0].mxu0
        %4064 = vmatprep.mubr.bf16.mxu0 0
        %4065 = vmatmul.mubr.bf16.gmra.mrb[0].mxu0 %v3735
        %v4066 = vpop.f32.mrb[0].mxu0
        %v4067 = vadd.f32 %v3984, %v4066
        %v4068 = vpop.f32.mrb[0].mxu0
        %v4069 = vpop.f32.mrb[0].mxu0
        %v4070 = vadd.f32 %v3987, %v4069
        %v4071 = vpop.f32.mrb[0].mxu0
        %4072 = vmatprep.mubr.bf16.mxu0 0
        %4073 = vmatmul.mubr.bf16.gmra.mrb[0].mxu0 %v3738
        %v4074 = vpop.f32.mrb[0].mxu0
        %v4075 = vadd.f32 %v3992, %v4074
        %v4076 = vpop.f32.mrb[0].mxu0
        %v4077 = vpop.f32.mrb[0].mxu0
        %v4078 = vadd.f32 %v3995, %v4077
        %v4079 = vpop.f32.mrb[0].mxu0
        %4080 = vmatprep.mubr.bf16.mxu0 0
        %4081 = vmatmul.mubr.bf16.gmra.mrb[0].mxu0 %v3741
        %v4082 = vpop.f32.mrb[0].mxu0
        %v4083 = vadd.f32 %v4000, %v4082
        %v4084 = vpop.f32.mrb[0].mxu0
        %v4085 = vpop.f32.mrb[0].mxu0
        %v4086 = vadd.f32 %v4003, %v4085
        %v4087 = vpop.f32.mrb[0].mxu0
        %4088 = vdwg.mxu0
        %s4089 = scalar_lea.vmem %s9, 168
        %v4090 = vld [vmem:[%s4089] sm:$0xf]
        %v4091 = vld [vmem:[%s4089 + $0x4] sm:$0xf]
        %v4092 = vld [vmem:[%s4089 + $0x8] sm:$0xf]
        %v4093 = vld [vmem:[%s4089 + $0xc] sm:$0xf]
        %v4094 = vld [vmem:[%s4089 + $0x10] sm:$0xf]
        %v4095 = vld [vmem:[%s4089 + $0x14] sm:$0xf]
        %v4102 = vunpack.c.l.b16 %v4090
        %v4103 = vunpack.c.l.b16 %v4091
        %v4104 = vunpack.c.l.b16 %v4092
        %v4105 = vunpack.c.l.b16 %v4093
        %v4106 = vunpack.c.l.b16 %v4094
        %v4107 = vunpack.c.l.b16 %v4095
        %v4108 = vpack.c.b16 %v4103, %v4102
        %v4109 = vpack.c.b16 %v4105, %v4104
        %v4110 = vpack.c.b16 %v4107, %v4106
        %4114 = vmatprep.subr.bf16.mxu0 0
        %4115 = vmatpush1.bf16.msra.mxu0 %v4108
        %4116 = vmatprep.subr.bf16.mxu0 0
        %4117 = vmatpush1.bf16.msra.mxu0 %v4109
        %4118 = vmatprep.subr.bf16.mxu0 0
        %4119 = vmatpush1.bf16.msra.mxu0 %v4110
        %4120 = vmatprep.subr.bf16.mxu0 0
        %4121 = vmatpush1.bf16.msra.mxu0 0
        %4122 = vmatprep.subr.bf16.mxu0 0
        %4123 = vmatpush1.bf16.msra.mxu0 0
        %4124 = vmatprep.subr.bf16.mxu0 0
        %4125 = vmatpush1.bf16.msra.mxu0 0
        %4126 = vmatprep.subr.bf16.mxu0 0
        %4127 = vmatpush1.bf16.msra.mxu0 0
        %4128 = vmatprep.subr.bf16.mxu0 0
        %4129 = vmatpush1.bf16.msra.mxu0 0
        %4130 = vmatprep.subr.bf16.mxu0 0
        %4131 = vmatpush1.bf16.msra.mxu0 0
        %4132 = vmatprep.subr.bf16.mxu0 0
        %4133 = vmatpush1.bf16.msra.mxu0 0
        %4134 = vmatprep.subr.bf16.mxu0 0
        %4135 = vmatpush1.bf16.msra.mxu0 0
        %4136 = vmatprep.subr.bf16.mxu0 0
        %4137 = vmatpush1.bf16.msra.mxu0 0
        %4138 = vmatprep.subr.bf16.mxu0 0
        %4139 = vmatpush1.bf16.msra.mxu0 0
        %4140 = vmatprep.subr.bf16.mxu0 0
        %4141 = vmatpush1.bf16.msra.mxu0 0
        %4142 = vmatprep.subr.bf16.mxu0 0
        %4143 = vmatpush1.bf16.msra.mxu0 0
        %4144 = vmatprep.subr.bf16.mxu0 0
        %4145 = vmatpush1.bf16.msra.mxu0 0
        %4146 = vmatprep.mubr.bf16.mxu0 0
        %4147 = vmatmul.mubr.bf16.gmra.mrb[0].mxu0 %v3735
        %v4148 = vpop.f32.mrb[0].mxu0
        %v4149 = vadd.f32 0.0, %v4148
        %v4150 = vpop.f32.mrb[0].mxu0
        %v4151 = vpop.f32.mrb[0].mxu0
        %v4152 = vadd.f32 0.0, %v4151
        %v4153 = vpop.f32.mrb[0].mxu0
        %4154 = vmatprep.mubr.bf16.mxu0 0
        %4155 = vmatmul.mubr.bf16.gmra.mrb[0].mxu0 %v3738
        %v4156 = vpop.f32.mrb[0].mxu0
        %v4157 = vadd.f32 0.0, %v4156
        %v4158 = vpop.f32.mrb[0].mxu0
        %v4159 = vpop.f32.mrb[0].mxu0
        %v4160 = vadd.f32 0.0, %v4159
        %v4161 = vpop.f32.mrb[0].mxu0
        %4162 = vmatprep.mubr.bf16.mxu0 0
        %4163 = vmatmul.mubr.bf16.gmra.mrb[0].mxu0 %v3741
        %v4164 = vpop.f32.mrb[0].mxu0
        %v4165 = vadd.f32 0.0, %v4164
        %v4166 = vpop.f32.mrb[0].mxu0
        %v4167 = vpop.f32.mrb[0].mxu0
        %v4168 = vadd.f32 0.0, %v4167
        %v4169 = vpop.f32.mrb[0].mxu0
        %4170 = vmatprep.mubr.bf16.mxu0 0
        %4171 = vmatmul.mubr.bf16.gmra.mrb[0].mxu0 %v3834
        %v4172 = vpop.f32.mrb[0].mxu0
        %v4173 = vadd.f32 0.0, %v4172
        %v4174 = vpop.f32.mrb[0].mxu0
        %v4175 = vpop.f32.mrb[0].mxu0
        %v4176 = vadd.f32 0.0, %v4175
        %v4177 = vpop.f32.mrb[0].mxu0
        %4178 = vdwg.mxu0
        %v4179 = vadd.f32 %v4059, %v4149
        %v4180 = vadd.f32 %v4062, %v4152
        %v4181 = vadd.f32 %v4067, %v4157
        %v4182 = vadd.f32 %v4070, %v4160
        %v4183 = vadd.f32 %v4075, %v4165
        %v4184 = vadd.f32 %v4078, %v4168
        %v4185 = vadd.f32 %v4083, %v4173
        %v4186 = vadd.f32 %v4086, %v4176
        %4187 = vmatprep.subr.mxu0 0.0
        %4188 = vmatpush1.msra.mxu0 %v3901
        %4189 = vmatprep.subr.mxu0 0.0
        %4190 = vmatpush1.msra.mxu0 %v3902
        %4191 = vmatprep.subr.mxu0 0.0
        %4192 = vmatpush1.msra.mxu0 %v3903
        %4193 = vmatprep.subr.mxu0 0.0
        %4194 = vmatpush1.msra.mxu0 %v3904
        %4195 = vmatprep.subr.mxu0 0.0
        %4196 = vmatpush1.msra.mxu0 %v3905
        %4197 = vmatprep.subr.mxu0 0.0
        %4198 = vmatpush1.msra.mxu0 %v3906
        %4199 = vmatprep.subr.mxu0 0.0
        %4200 = vmatpush1.msra.mxu0 %v3907
        %4201 = vmatprep.subr.mxu0 0.0
        %4202 = vmatpush1.msra.mxu0 %v3908
        %4203 = vmatprep.subr.mxu0 0.0
        %4204 = vmatpush1.msra.mxu0 0.0
        %4205 = vmatprep.subr.mxu0 0.0
        %4206 = vmatpush1.msra.mxu0 0.0
        %4207 = vmatprep.subr.mxu0 0.0
        %4208 = vmatpush1.msra.mxu0 0.0
        %4209 = vmatprep.subr.mxu0 0.0
        %4210 = vmatpush1.msra.mxu0 0.0
        %4211 = vmatprep.subr.mxu0 0.0
        %4212 = vmatpush1.msra.mxu0 0.0
        %4213 = vmatprep.subr.mxu0 0.0
        %4214 = vmatpush1.msra.mxu0 0.0
        %4215 = vmatprep.subr.mxu0 0.0
        %4216 = vmatpush1.msra.mxu0 0.0
        %4217 = vmatprep.subr.mxu0 0.0
        %4218 = vmatpush1.msra.mxu0 0.0
        %4219 = vmatprep.subr.mxu0 0.0
        %4220 = vmatpush1.msra.mxu0 0.0
        %4221 = vmatprep.subr.mxu0 0.0
        %4222 = vmatpush1.msra.mxu0 0.0
        %4223 = vmatprep.subr.mxu0 0.0
        %4224 = vmatpush1.msra.mxu0 0.0
        %4225 = vmatprep.subr.mxu0 0.0
        %4226 = vmatpush1.msra.mxu0 0.0
        %4227 = vmatprep.subr.mxu0 0.0
        %4228 = vmatpush1.msra.mxu0 0.0
        %4229 = vmatprep.subr.mxu0 0.0
        %4230 = vmatpush1.msra.mxu0 0.0
        %4231 = vmatprep.subr.mxu0 0.0
        %4232 = vmatpush1.msra.mxu0 0.0
        %4233 = vmatprep.subr.mxu0 0.0
        %4234 = vmatpush1.msra.mxu0 0.0
        %4235 = vmatprep.subr.mxu0 0.0
        %4236 = vmatpush1.msra.mxu0 0.0
        %4237 = vmatprep.subr.mxu0 0.0
        %4238 = vmatpush1.msra.mxu0 0.0
        %4239 = vmatprep.subr.mxu0 0.0
        %4240 = vmatpush1.msra.mxu0 0.0
        %4241 = vmatprep.subr.mxu0 0.0
        %4242 = vmatpush1.msra.mxu0 0.0
        %4243 = vmatprep.subr.mxu0 0.0
        %4244 = vmatpush1.msra.mxu0 0.0
        %4245 = vmatprep.subr.mxu0 0.0
        %4246 = vmatpush1.msra.mxu0 0.0
        %4247 = vmatprep.subr.mxu0 0.0
        %4248 = vmatpush1.msra.mxu0 0.0
        %4249 = vmatprep.subr.mxu0 0.0
        %4250 = vmatpush1.msra.mxu0 0.0
        %4251 = vmatprep.mubr.f32.mxu0 0.0
        %4252 = vmatmul.mubr.f32.gmra.mrb[0].mxu0 %v1647
        %v4253 = vpop.f32.mrb[0].mxu0
        %v4254 = vadd.f32 %v4179, %v4253
        %v4255 = vpop.f32.mrb[0].mxu0
        %4256 = vmatprep.mubr.f32.mxu0 0.0
        %4257 = vmatmul.mubr.f32.gmra.mrb[0].mxu0 %v1650
        %v4258 = vpop.f32.mrb[0].mxu0
        %v4259 = vadd.f32 %v4180, %v4258
        %v4260 = vpop.f32.mrb[0].mxu0
        %4261 = vmatprep.mubr.f32.mxu0 0.0
        %4262 = vmatmul.mubr.f32.gmra.mrb[0].mxu0 %v1653
        %v4263 = vpop.f32.mrb[0].mxu0
        %v4264 = vadd.f32 %v4181, %v4263
        %v4265 = vpop.f32.mrb[0].mxu0
        %4266 = vmatprep.mubr.f32.mxu0 0.0
        %4267 = vmatmul.mubr.f32.gmra.mrb[0].mxu0 %v1656
        %v4268 = vpop.f32.mrb[0].mxu0
        %v4269 = vadd.f32 %v4182, %v4268
        %v4270 = vpop.f32.mrb[0].mxu0
        %4271 = vmatprep.mubr.f32.mxu0 0.0
        %4272 = vmatmul.mubr.f32.gmra.mrb[0].mxu0 %v1659
        %v4273 = vpop.f32.mrb[0].mxu0
        %v4274 = vadd.f32 %v4183, %v4273
        %v4275 = vpop.f32.mrb[0].mxu0
        %4276 = vmatprep.mubr.f32.mxu0 0.0
        %4277 = vmatmul.mubr.f32.gmra.mrb[0].mxu0 %v1662
        %v4278 = vpop.f32.mrb[0].mxu0
        %v4279 = vadd.f32 %v4184, %v4278
        %v4280 = vpop.f32.mrb[0].mxu0
        %4281 = vmatprep.mubr.f32.mxu0 0.0
        %4282 = vmatmul.mubr.f32.gmra.mrb[0].mxu0 %v1665
        %v4283 = vpop.f32.mrb[0].mxu0
        %v4284 = vadd.f32 %v4185, %v4283
        %v4285 = vpop.f32.mrb[0].mxu0
        %4286 = vmatprep.mubr.f32.mxu0 0.0
        %4287 = vmatmul.mubr.f32.gmra.mrb[0].mxu0 %v1668
        %v4288 = vpop.f32.mrb[0].mxu0
        %v4289 = vadd.f32 %v4186, %v4288
        %v4290 = vpop.f32.mrb[0].mxu0
        %4291 = vdwg.mxu0
        %s4292 = scalar_lea.vmem %s9, 48
        %v4293 = vld [vmem:[%s4292] sm:$0xf]
        %v4294 = vld [vmem:[%s4292 + $0x4] sm:$0xf]
        %v4295 = vld [vmem:[%s4292 + $0x8] sm:$0xf]
        %v4296 = vld [vmem:[%s4292 + $0xc] sm:$0xf]
        %v4297 = vld [vmem:[%s4292 + $0x10] sm:$0xf]
        %v4298 = vld [vmem:[%s4292 + $0x14] sm:$0xf]
        %s4299 = scalar_lea.vmem %s9, 120
        %v4300 = vld [vmem:[%s4299] sm:$0xf]
        %v4301 = vld [vmem:[%s4299 + $0x4] sm:$0xf]
        %v4302 = vld [vmem:[%s4299 + $0x8] sm:$0xf]
        %v4303 = vld [vmem:[%s4299 + $0xc] sm:$0xf]
        %v4304 = vld [vmem:[%s4299 + $0x10] sm:$0xf]
        %v4305 = vld [vmem:[%s4299 + $0x14] sm:$0xf]
        %v4312 = vunpack.c.l.b16 %v4300
        %v4313 = vunpack.c.l.b16 %v4301
        %v4314 = vunpack.c.l.b16 %v4302
        %v4315 = vunpack.c.l.b16 %v4303
        %v4316 = vunpack.c.l.b16 %v4304
        %v4317 = vunpack.c.l.b16 %v4305
        %v4318 = vpack.c.b16 %v4313, %v4312
        %v4319 = vpack.c.b16 %v4315, %v4314
        %v4320 = vpack.c.b16 %v4317, %v4316
        %4324 = vmatprep.subr.bf16.mxu0 0
        %4325 = vmatpush1.bf16.msra.mxu0 %v4318
        %4326 = vmatprep.subr.bf16.mxu0 0
        %4327 = vmatpush1.bf16.msra.mxu0 %v4319
        %4328 = vmatprep.subr.bf16.mxu0 0
        %4329 = vmatpush1.bf16.msra.mxu0 %v4320
        %4330 = vmatprep.subr.bf16.mxu0 0
        %4331 = vmatpush1.bf16.msra.mxu0 0
        %4332 = vmatprep.subr.bf16.mxu0 0
        %4333 = vmatpush1.bf16.msra.mxu0 0
        %4334 = vmatprep.subr.bf16.mxu0 0
        %4335 = vmatpush1.bf16.msra.mxu0 0
        %4336 = vmatprep.subr.bf16.mxu0 0
        %4337 = vmatpush1.bf16.msra.mxu0 0
        %4338 = vmatprep.subr.bf16.mxu0 0
        %4339 = vmatpush1.bf16.msra.mxu0 0
        %4340 = vmatprep.subr.bf16.mxu0 0
        %4341 = vmatpush1.bf16.msra.mxu0 0
        %4342 = vmatprep.subr.bf16.mxu0 0
        %4343 = vmatpush1.bf16.msra.mxu0 0
        %4344 = vmatprep.subr.bf16.mxu0 0
        %4345 = vmatpush1.bf16.msra.mxu0 0
        %4346 = vmatprep.subr.bf16.mxu0 0
        %4347 = vmatpush1.bf16.msra.mxu0 0
        %4348 = vmatprep.subr.bf16.mxu0 0
        %4349 = vmatpush1.bf16.msra.mxu0 0
        %4350 = vmatprep.subr.bf16.mxu0 0
        %4351 = vmatpush1.bf16.msra.mxu0 0
        %4352 = vmatprep.subr.bf16.mxu0 0
        %4353 = vmatpush1.bf16.msra.mxu0 0
        %4354 = vmatprep.subr.bf16.mxu0 0
        %4355 = vmatpush1.bf16.msra.mxu0 0
        %4356 = vmatprep.mubr.bf16.mxu0 0
        %4357 = vmatmul.mubr.bf16.gmra.mrb[0].mxu0 %v3637
        %v4358 = vpop.f32.mrb[0].mxu0
        %v4359 = vadd.f32 0.0, %v4358
        %v4360 = vpop.f32.mrb[0].mxu0
        %v4361 = vpop.f32.mrb[0].mxu0
        %v4362 = vadd.f32 0.0, %v4361
        %v4363 = vpop.f32.mrb[0].mxu0
        %4364 = vmatprep.mubr.bf16.mxu0 0
        %4365 = vmatmul.mubr.bf16.gmra.mrb[0].mxu0 %v3640
        %v4366 = vpop.f32.mrb[0].mxu0
        %v4367 = vadd.f32 0.0, %v4366
        %v4368 = vpop.f32.mrb[0].mxu0
        %v4369 = vpop.f32.mrb[0].mxu0
        %v4370 = vadd.f32 0.0, %v4369
        %v4371 = vpop.f32.mrb[0].mxu0
        %4372 = vmatprep.mubr.bf16.mxu0 0
        %4373 = vmatmul.mubr.bf16.gmra.mrb[0].mxu0 %v3643
        %v4374 = vpop.f32.mrb[0].mxu0
        %v4375 = vadd.f32 0.0, %v4374
        %v4376 = vpop.f32.mrb[0].mxu0
        %v4377 = vpop.f32.mrb[0].mxu0
        %v4378 = vadd.f32 0.0, %v4377
        %v4379 = vpop.f32.mrb[0].mxu0
        %4380 = vmatprep.mubr.bf16.mxu0 0
        %4381 = vmatmul.mubr.bf16.gmra.mrb[0].mxu0 %v3646
        %v4382 = vpop.f32.mrb[0].mxu0
        %v4383 = vadd.f32 0.0, %v4382
        %v4384 = vpop.f32.mrb[0].mxu0
        %v4385 = vpop.f32.mrb[0].mxu0
        %v4386 = vadd.f32 0.0, %v4385
        %v4387 = vpop.f32.mrb[0].mxu0
        %4388 = vdwg.mxu0
        %v4395 = vunpack.c.l.b16 %v4293
        %v4396 = vunpack.c.l.b16 %v4294
        %v4397 = vunpack.c.l.b16 %v4295
        %v4398 = vunpack.c.l.b16 %v4296
        %v4399 = vunpack.c.l.b16 %v4297
        %v4400 = vunpack.c.l.b16 %v4298
        %v4401 = vpack.c.b16 %v4396, %v4395
        %v4402 = vpack.c.b16 %v4398, %v4397
        %v4403 = vpack.c.b16 %v4400, %v4399
        %4407 = vmatprep.subr.bf16.mxu0 0
        %4408 = vmatpush1.bf16.msra.mxu0 %v4401
        %4409 = vmatprep.subr.bf16.mxu0 0
        %4410 = vmatpush1.bf16.msra.mxu0 %v4402
        %4411 = vmatprep.subr.bf16.mxu0 0
        %4412 = vmatpush1.bf16.msra.mxu0 %v4403
        %4413 = vmatprep.subr.bf16.mxu0 0
        %4414 = vmatpush1.bf16.msra.mxu0 0
        %4415 = vmatprep.subr.bf16.mxu0 0
        %4416 = vmatpush1.bf16.msra.mxu0 0
        %4417 = vmatprep.subr.bf16.mxu0 0
        %4418 = vmatpush1.bf16.msra.mxu0 0
        %4419 = vmatprep.subr.bf16.mxu0 0
        %4420 = vmatpush1.bf16.msra.mxu0 0
        %4421 = vmatprep.subr.bf16.mxu0 0
        %4422 = vmatpush1.bf16.msra.mxu0 0
        %4423 = vmatprep.subr.bf16.mxu0 0
        %4424 = vmatpush1.bf16.msra.mxu0 0
        %4425 = vmatprep.subr.bf16.mxu0 0
        %4426 = vmatpush1.bf16.msra.mxu0 0
        %4427 = vmatprep.subr.bf16.mxu0 0
        %4428 = vmatpush1.bf16.msra.mxu0 0
        %4429 = vmatprep.subr.bf16.mxu0 0
        %4430 = vmatpush1.bf16.msra.mxu0 0
        %4431 = vmatprep.subr.bf16.mxu0 0
        %4432 = vmatpush1.bf16.msra.mxu0 0
        %4433 = vmatprep.subr.bf16.mxu0 0
        %4434 = vmatpush1.bf16.msra.mxu0 0
        %4435 = vmatprep.subr.bf16.mxu0 0
        %4436 = vmatpush1.bf16.msra.mxu0 0
        %4437 = vmatprep.subr.bf16.mxu0 0
        %4438 = vmatpush1.bf16.msra.mxu0 0
        %4439 = vmatprep.mubr.bf16.mxu0 0
        %4440 = vmatmul.mubr.bf16.gmra.mrb[0].mxu0 %v3732
        %v4441 = vpop.f32.mrb[0].mxu0
        %v4442 = vadd.f32 %v4359, %v4441
        %v4443 = vpop.f32.mrb[0].mxu0
        %v4444 = vpop.f32.mrb[0].mxu0
        %v4445 = vadd.f32 %v4362, %v4444
        %v4446 = vpop.f32.mrb[0].mxu0
        %4447 = vmatprep.mubr.bf16.mxu0 0
        %4448 = vmatmul.mubr.bf16.gmra.mrb[0].mxu0 %v3735
        %v4449 = vpop.f32.mrb[0].mxu0
        %v4450 = vadd.f32 %v4367, %v4449
        %v4451 = vpop.f32.mrb[0].mxu0
        %v4452 = vpop.f32.mrb[0].mxu0
        %v4453 = vadd.f32 %v4370, %v4452
        %v4454 = vpop.f32.mrb[0].mxu0
        %4455 = vmatprep.mubr.bf16.mxu0 0
        %4456 = vmatmul.mubr.bf16.gmra.mrb[0].mxu0 %v3738
        %v4457 = vpop.f32.mrb[0].mxu0
        %v4458 = vadd.f32 %v4375, %v4457
        %v4459 = vpop.f32.mrb[0].mxu0
        %v4460 = vpop.f32.mrb[0].mxu0
        %v4461 = vadd.f32 %v4378, %v4460
        %v4462 = vpop.f32.mrb[0].mxu0
        %4463 = vmatprep.mubr.bf16.mxu0 0
        %4464 = vmatmul.mubr.bf16.gmra.mrb[0].mxu0 %v3741
        %v4465 = vpop.f32.mrb[0].mxu0
        %v4466 = vadd.f32 %v4383, %v4465
        %v4467 = vpop.f32.mrb[0].mxu0
        %v4468 = vpop.f32.mrb[0].mxu0
        %v4469 = vadd.f32 %v4386, %v4468
        %v4470 = vpop.f32.mrb[0].mxu0
        %4471 = vdwg.mxu0
        %s4472 = scalar_lea.vmem %s9, 192
        %v4473 = vld [vmem:[%s4472] sm:$0xf]
        %v4474 = vld [vmem:[%s4472 + $0x4] sm:$0xf]
        %v4475 = vld [vmem:[%s4472 + $0x8] sm:$0xf]
        %v4476 = vld [vmem:[%s4472 + $0xc] sm:$0xf]
        %v4477 = vld [vmem:[%s4472 + $0x10] sm:$0xf]
        %v4478 = vld [vmem:[%s4472 + $0x14] sm:$0xf]
        %v4485 = vunpack.c.l.b16 %v4473
        %v4486 = vunpack.c.l.b16 %v4474
        %v4487 = vunpack.c.l.b16 %v4475
        %v4488 = vunpack.c.l.b16 %v4476
        %v4489 = vunpack.c.l.b16 %v4477
        %v4490 = vunpack.c.l.b16 %v4478
        %v4491 = vpack.c.b16 %v4486, %v4485
        %v4492 = vpack.c.b16 %v4488, %v4487
        %v4493 = vpack.c.b16 %v4490, %v4489
        %4497 = vmatprep.subr.bf16.mxu0 0
        %4498 = vmatpush1.bf16.msra.mxu0 %v4491
        %4499 = vmatprep.subr.bf16.mxu0 0
        %4500 = vmatpush1.bf16.msra.mxu0 %v4492
        %4501 = vmatprep.subr.bf16.mxu0 0
        %4502 = vmatpush1.bf16.msra.mxu0 %v4493
        %4503 = vmatprep.subr.bf16.mxu0 0
        %4504 = vmatpush1.bf16.msra.mxu0 0
        %4505 = vmatprep.subr.bf16.mxu0 0
        %4506 = vmatpush1.bf16.msra.mxu0 0
        %4507 = vmatprep.subr.bf16.mxu0 0
        %4508 = vmatpush1.bf16.msra.mxu0 0
        %4509 = vmatprep.subr.bf16.mxu0 0
        %4510 = vmatpush1.bf16.msra.mxu0 0
        %4511 = vmatprep.subr.bf16.mxu0 0
        %4512 = vmatpush1.bf16.msra.mxu0 0
        %4513 = vmatprep.subr.bf16.mxu0 0
        %4514 = vmatpush1.bf16.msra.mxu0 0
        %4515 = vmatprep.subr.bf16.mxu0 0
        %4516 = vmatpush1.bf16.msra.mxu0 0
        %4517 = vmatprep.subr.bf16.mxu0 0
        %4518 = vmatpush1.bf16.msra.mxu0 0
        %4519 = vmatprep.subr.bf16.mxu0 0
        %4520 = vmatpush1.bf16.msra.mxu0 0
        %4521 = vmatprep.subr.bf16.mxu0 0
        %4522 = vmatpush1.bf16.msra.mxu0 0
        %4523 = vmatprep.subr.bf16.mxu0 0
        %4524 = vmatpush1.bf16.msra.mxu0 0
        %4525 = vmatprep.subr.bf16.mxu0 0
        %4526 = vmatpush1.bf16.msra.mxu0 0
        %4527 = vmatprep.subr.bf16.mxu0 0
        %4528 = vmatpush1.bf16.msra.mxu0 0
        %4529 = vmatprep.mubr.bf16.mxu0 0
        %4530 = vmatmul.mubr.bf16.gmra.mrb[0].mxu0 %v3735
        %v4531 = vpop.f32.mrb[0].mxu0
        %v4532 = vadd.f32 0.0, %v4531
        %v4533 = vpop.f32.mrb[0].mxu0
        %v4534 = vpop.f32.mrb[0].mxu0
        %v4535 = vadd.f32 0.0, %v4534
        %v4536 = vpop.f32.mrb[0].mxu0
        %4537 = vmatprep.mubr.bf16.mxu0 0
        %4538 = vmatmul.mubr.bf16.gmra.mrb[0].mxu0 %v3738
        %v4539 = vpop.f32.mrb[0].mxu0
        %v4540 = vadd.f32 0.0, %v4539
        %v4541 = vpop.f32.mrb[0].mxu0
        %v4542 = vpop.f32.mrb[0].mxu0
        %v4543 = vadd.f32 0.0, %v4542
        %v4544 = vpop.f32.mrb[0].mxu0
        %4545 = vmatprep.mubr.bf16.mxu0 0
        %4546 = vmatmul.mubr.bf16.gmra.mrb[0].mxu0 %v3741
        %v4547 = vpop.f32.mrb[0].mxu0
        %v4548 = vadd.f32 0.0, %v4547
        %v4549 = vpop.f32.mrb[0].mxu0
        %v4550 = vpop.f32.mrb[0].mxu0
        %v4551 = vadd.f32 0.0, %v4550
        %v4552 = vpop.f32.mrb[0].mxu0
        %4553 = vmatprep.mubr.bf16.mxu0 0
        %4554 = vmatmul.mubr.bf16.gmra.mrb[0].mxu0 %v3834
        %v4555 = vpop.f32.mrb[0].mxu0
        %v4556 = vadd.f32 0.0, %v4555
        %v4557 = vpop.f32.mrb[0].mxu0
        %v4558 = vpop.f32.mrb[0].mxu0
        %v4559 = vadd.f32 0.0, %v4558
        %v4560 = vpop.f32.mrb[0].mxu0
        %4561 = vdwg.mxu0
        %v4562 = vadd.f32 %v4442, %v4532
        %v4563 = vadd.f32 %v4445, %v4535
        %v4564 = vadd.f32 %v4450, %v4540
        %v4565 = vadd.f32 %v4453, %v4543
        %v4566 = vadd.f32 %v4458, %v4548
        %v4567 = vadd.f32 %v4461, %v4551
        %v4568 = vadd.f32 %v4466, %v4556
        %v4569 = vadd.f32 %v4469, %v4559
        %4570 = vmatprep.subr.mxu0 0.0
        %4571 = vmatpush1.msra.mxu0 %v4562
        %4572 = vmatprep.subr.mxu0 0.0
        %4573 = vmatpush1.msra.mxu0 %v4563
        %4574 = vmatprep.subr.mxu0 0.0
        %4575 = vmatpush1.msra.mxu0 %v4564
        %4576 = vmatprep.subr.mxu0 0.0
        %4577 = vmatpush1.msra.mxu0 %v4565
        %4578 = vmatprep.subr.mxu0 0.0
        %4579 = vmatpush1.msra.mxu0 %v4566
        %4580 = vmatprep.subr.mxu0 0.0
        %4581 = vmatpush1.msra.mxu0 %v4567
        %4582 = vmatprep.subr.mxu0 0.0
        %4583 = vmatpush1.msra.mxu0 %v4568
        %4584 = vmatprep.subr.mxu0 0.0
        %4585 = vmatpush1.msra.mxu0 %v4569
        %4586 = vmatprep.subr.mxu0 0.0
        %4587 = vmatpush1.msra.mxu0 0.0
        %4588 = vmatprep.subr.mxu0 0.0
        %4589 = vmatpush1.msra.mxu0 0.0
        %4590 = vmatprep.subr.mxu0 0.0
        %4591 = vmatpush1.msra.mxu0 0.0
        %4592 = vmatprep.subr.mxu0 0.0
        %4593 = vmatpush1.msra.mxu0 0.0
        %4594 = vmatprep.subr.mxu0 0.0
        %4595 = vmatpush1.msra.mxu0 0.0
        %4596 = vmatprep.subr.mxu0 0.0
        %4597 = vmatpush1.msra.mxu0 0.0
        %4598 = vmatprep.subr.mxu0 0.0
        %4599 = vmatpush1.msra.mxu0 0.0
        %4600 = vmatprep.subr.mxu0 0.0
        %4601 = vmatpush1.msra.mxu0 0.0
        %4602 = vmatprep.subr.mxu0 0.0
        %4603 = vmatpush1.msra.mxu0 0.0
        %4604 = vmatprep.subr.mxu0 0.0
        %4605 = vmatpush1.msra.mxu0 0.0
        %4606 = vmatprep.subr.mxu0 0.0
        %4607 = vmatpush1.msra.mxu0 0.0
        %4608 = vmatprep.subr.mxu0 0.0
        %4609 = vmatpush1.msra.mxu0 0.0
        %4610 = vmatprep.subr.mxu0 0.0
        %4611 = vmatpush1.msra.mxu0 0.0
        %4612 = vmatprep.subr.mxu0 0.0
        %4613 = vmatpush1.msra.mxu0 0.0
        %4614 = vmatprep.subr.mxu0 0.0
        %4615 = vmatpush1.msra.mxu0 0.0
        %4616 = vmatprep.subr.mxu0 0.0
        %4617 = vmatpush1.msra.mxu0 0.0
        %4618 = vmatprep.subr.mxu0 0.0
        %4619 = vmatpush1.msra.mxu0 0.0
        %4620 = vmatprep.subr.mxu0 0.0
        %4621 = vmatpush1.msra.mxu0 0.0
        %4622 = vmatprep.subr.mxu0 0.0
        %4623 = vmatpush1.msra.mxu0 0.0
        %4624 = vmatprep.subr.mxu0 0.0
        %4625 = vmatpush1.msra.mxu0 0.0
        %4626 = vmatprep.subr.mxu0 0.0
        %4627 = vmatpush1.msra.mxu0 0.0
        %4628 = vmatprep.subr.mxu0 0.0
        %4629 = vmatpush1.msra.mxu0 0.0
        %4630 = vmatprep.subr.mxu0 0.0
        %4631 = vmatpush1.msra.mxu0 0.0
        %4632 = vmatprep.subr.mxu0 0.0
        %4633 = vmatpush1.msra.mxu0 0.0
        %4634 = vmatprep.mubr.f32.mxu0 0.0
        %4635 = vmatmul.mubr.f32.gmra.mrb[0].mxu0 %v2126
        %v4636 = vpop.f32.mrb[0].mxu0
        %v4637 = vadd.f32 0.0, %v4636
        %v4638 = vpop.f32.mrb[0].mxu0
        %4639 = vmatprep.mubr.f32.mxu0 0.0
        %4640 = vmatmul.mubr.f32.gmra.mrb[0].mxu0 %v2129
        %v4641 = vpop.f32.mrb[0].mxu0
        %v4642 = vadd.f32 0.0, %v4641
        %v4643 = vpop.f32.mrb[0].mxu0
        %4644 = vmatprep.mubr.f32.mxu0 0.0
        %4645 = vmatmul.mubr.f32.gmra.mrb[0].mxu0 %v2132
        %v4646 = vpop.f32.mrb[0].mxu0
        %v4647 = vadd.f32 0.0, %v4646
        %v4648 = vpop.f32.mrb[0].mxu0
        %4649 = vmatprep.mubr.f32.mxu0 0.0
        %4650 = vmatmul.mubr.f32.gmra.mrb[0].mxu0 %v2135
        %v4651 = vpop.f32.mrb[0].mxu0
        %v4652 = vadd.f32 0.0, %v4651
        %v4653 = vpop.f32.mrb[0].mxu0
        %4654 = vmatprep.mubr.f32.mxu0 0.0
        %4655 = vmatmul.mubr.f32.gmra.mrb[0].mxu0 %v2138
        %v4656 = vpop.f32.mrb[0].mxu0
        %v4657 = vadd.f32 0.0, %v4656
        %v4658 = vpop.f32.mrb[0].mxu0
        %4659 = vmatprep.mubr.f32.mxu0 0.0
        %4660 = vmatmul.mubr.f32.gmra.mrb[0].mxu0 %v2141
        %v4661 = vpop.f32.mrb[0].mxu0
        %v4662 = vadd.f32 0.0, %v4661
        %v4663 = vpop.f32.mrb[0].mxu0
        %4664 = vmatprep.mubr.f32.mxu0 0.0
        %4665 = vmatmul.mubr.f32.gmra.mrb[0].mxu0 %v2144
        %v4666 = vpop.f32.mrb[0].mxu0
        %v4667 = vadd.f32 0.0, %v4666
        %v4668 = vpop.f32.mrb[0].mxu0
        %4669 = vmatprep.mubr.f32.mxu0 0.0
        %4670 = vmatmul.mubr.f32.gmra.mrb[0].mxu0 %v2147
        %v4671 = vpop.f32.mrb[0].mxu0
        %v4672 = vadd.f32 0.0, %v4671
        %v4673 = vpop.f32.mrb[0].mxu0
        %4674 = vdwg.mxu0
        %v4675 = vadd.f32 %v4254, %v4637
        %v4676 = vadd.f32 %v4259, %v4642
        %v4677 = vadd.f32 %v4264, %v4647
        %v4678 = vadd.f32 %v4269, %v4652
        %v4679 = vadd.f32 %v4274, %v4657
        %v4680 = vadd.f32 %v4279, %v4662
        %v4681 = vadd.f32 %v4284, %v4667
        %v4682 = vadd.f32 %v4289, %v4672
        %v4683 = vld [vmem:[%s10] sm:$0x1]
        %v4685 = vlaneseq
        %v4686 = vshrl.u32 %v4685, 7
        %v4687 = vsub.s32 0, %v4686
        %v4688 = vrot.slane %v4683, %v4687
        %v4690 = vadd.f32 %v4675, %v4688
        %v4691 = vadd.f32 %v4676, %v4688
        %v4692 = vadd.f32 %v4677, %v4688
        %v4693 = vadd.f32 %v4678, %v4688
        %v4694 = vadd.f32 %v4679, %v4688
        %v4695 = vadd.f32 %v4680, %v4688
        %v4696 = vadd.f32 %v4681, %v4688
        %v4697 = vadd.f32 %v4682, %v4688
        %v4698 = vmax.f32 %v4690, 0.0
        %v4699 = vmax.f32 %v4691, 0.0
        %v4700 = vmax.f32 %v4692, 0.0
        %v4701 = vmax.f32 %v4693, 0.0
        %v4702 = vmax.f32 %v4694, 0.0
        %v4703 = vmax.f32 %v4695, 0.0
        %v4704 = vmax.f32 %v4696, 0.0
        %v4705 = vmax.f32 %v4697, 0.0
        %v4706 = vpack.c.bf16 %v4699, %v4698
        %v4707 = vpack.c.bf16 %v4701, %v4700
        %v4708 = vpack.c.bf16 %v4703, %v4702
        %v4709 = vpack.c.bf16 %v4705, %v4704
        %v4710 = vld [vmem:[%s11] sm:$0xff]
        %v4711 = vld [vmem:[%s11 + $0x8] sm:$0xf]
        %v4712 = vld [vmem:[%s11 + $0xc] sm:$0xff]
        %v4713 = vld [vmem:[%s11 + $0x14] sm:$0xf]
        %v4714 = vld [vmem:[%s11 + $0x18] sm:$0xff]
        %v4715 = vld [vmem:[%s11 + $0x20] sm:$0xf]
        %v4716 = vld [vmem:[%s11 + $0x24] sm:$0xff]
        %v4717 = vld [vmem:[%s11 + $0x2c] sm:$0xf]
        %v4718 = vld [vmem:[%s11 + $0x30] sm:$0xff]
        %v4719 = vld [vmem:[%s11 + $0x38] sm:$0xf]
        %v4720 = vld [vmem:[%s11 + $0x3c] sm:$0xff]
        %v4721 = vld [vmem:[%s11 + $0x44] sm:$0xf]
        %v4722 = vld [vmem:[%s11 + $0x48] sm:$0xff]
        %v4723 = vld [vmem:[%s11 + $0x50] sm:$0xf]
        %v4724 = vld [vmem:[%s11 + $0x54] sm:$0xff]
        %v4725 = vld [vmem:[%s11 + $0x5c] sm:$0xf]
        %v4726 = vpack.c.bf16 %v3568, %v3567
        %v4727 = vpack.c.bf16 %v3570, %v3569
        %v4728 = vpack.c.bf16 %v3572, %v3571
        %v4729 = vpack.c.bf16 %v3574, %v3573
        %v4730 = vld [vmem:[%s12] sm:$0xff]
        %v4731 = vld [vmem:[%s12 + $0x8] sm:$0xf]
        %v4732 = vld [vmem:[%s12 + $0xc] sm:$0xff]
        %v4733 = vld [vmem:[%s12 + $0x14] sm:$0xf]
        %v4734 = vld [vmem:[%s12 + $0x18] sm:$0xff]
        %v4735 = vld [vmem:[%s12 + $0x20] sm:$0xf]
        %v4736 = vld [vmem:[%s12 + $0x24] sm:$0xff]
        %v4737 = vld [vmem:[%s12 + $0x2c] sm:$0xf]
        %v4746 = vunpack.c.l.b16 %v4730
        %v4747 = vunpack.c.h.b16 %v4730
        %v4748 = vunpack.c.l.b16 %v4731
        %v4749 = vunpack.c.l.b16 %v4732
        %v4750 = vunpack.c.h.b16 %v4732
        %v4751 = vunpack.c.l.b16 %v4733
        %v4752 = vunpack.c.l.b16 %v4734
        %v4753 = vunpack.c.h.b16 %v4734
        %v4754 = vunpack.c.l.b16 %v4735
        %v4755 = vunpack.c.l.b16 %v4736
        %v4756 = vunpack.c.h.b16 %v4736
        %v4757 = vunpack.c.l.b16 %v4737
        %v4758 = vpack.c.b16 %v4749, %v4746
        %v4759 = vpack.c.b16 %v4750, %v4747
        %v4760 = vpack.c.b16 %v4751, %v4748
        %v4761 = vpack.c.b16 %v4755, %v4752
        %v4762 = vpack.c.b16 %v4756, %v4753
        %v4763 = vpack.c.b16 %v4757, %v4754
        %vm4770 = vcmask 261120
        %v4772 = vsel %vm4770, %v4726, 0
        %v4775 = vsel %vm4770, %v4727, 0
        %v4778 = vsel %vm4770, %v4728, 0
        %v4781 = vsel %vm4770, %v4729, 0
        %4783 = vmatprep.subr.bf16.mxu0 %v4759
        %4784 = vmatpush1.bf16.msra.mxu0 %v4758
        %4785 = vmatprep.subr.bf16.mxu0 %v4762
        %4786 = vmatpush1.bf16.msra.mxu0 %v4761
        %4787 = vmatprep.subr.bf16.mxu0 0
        %4788 = vmatpush1.bf16.msra.mxu0 0
        %4789 = vmatprep.subr.bf16.mxu0 0
        %4790 = vmatpush1.bf16.msra.mxu0 0
        %4791 = vmatprep.subr.bf16.mxu0 0
        %4792 = vmatpush1.bf16.msra.mxu0 0
        %4793 = vmatprep.subr.bf16.mxu0 0
        %4794 = vmatpush1.bf16.msra.mxu0 0
        %4795 = vmatprep.subr.bf16.mxu0 0
        %4796 = vmatpush1.bf16.msra.mxu0 0
        %4797 = vmatprep.subr.bf16.mxu0 0
        %4798 = vmatpush1.bf16.msra.mxu0 0
        %4799 = vmatprep.subr.bf16.mxu0 0
        %4800 = vmatpush1.bf16.msra.mxu0 0
        %4801 = vmatprep.subr.bf16.mxu0 0
        %4802 = vmatpush1.bf16.msra.mxu0 0
        %4803 = vmatprep.subr.bf16.mxu0 0
        %4804 = vmatpush1.bf16.msra.mxu0 0
        %4805 = vmatprep.subr.bf16.mxu0 0
        %4806 = vmatpush1.bf16.msra.mxu0 0
        %4807 = vmatprep.subr.bf16.mxu0 0
        %4808 = vmatpush1.bf16.msra.mxu0 0
        %4809 = vmatprep.subr.bf16.mxu0 0
        %4810 = vmatpush1.bf16.msra.mxu0 0
        %4811 = vmatprep.subr.bf16.mxu0 0
        %4812 = vmatpush1.bf16.msra.mxu0 0
        %4813 = vmatprep.subr.bf16.mxu0 0
        %4814 = vmatpush1.bf16.msra.mxu0 0
        %4815 = vmatprep.mubr.bf16.mxu0 0
        %4816 = vmatmul.mubr.bf16.gmra.mrb[0].mxu0 %v4772
        %v4817 = vpop.f32.mrb[0].mxu0
        %v4818 = vadd.f32 0.0, %v4817
        %v4819 = vpop.f32.mrb[0].mxu0
        %v4820 = vadd.f32 0.0, %v4819
        %v4821 = vpop.f32.mrb[0].mxu0
        %v4822 = vadd.f32 0.0, %v4821
        %v4823 = vpop.f32.mrb[0].mxu0
        %v4824 = vadd.f32 0.0, %v4823
        %4825 = vmatprep.mubr.bf16.mxu0 0
        %4826 = vmatmul.mubr.bf16.gmra.mrb[0].mxu0 %v4775
        %v4827 = vpop.f32.mrb[0].mxu0
        %v4828 = vadd.f32 0.0, %v4827
        %v4829 = vpop.f32.mrb[0].mxu0
        %v4830 = vadd.f32 0.0, %v4829
        %v4831 = vpop.f32.mrb[0].mxu0
        %v4832 = vadd.f32 0.0, %v4831
        %v4833 = vpop.f32.mrb[0].mxu0
        %v4834 = vadd.f32 0.0, %v4833
        %4835 = vmatprep.mubr.bf16.mxu0 0
        %4836 = vmatmul.mubr.bf16.gmra.mrb[0].mxu0 %v4778
        %v4837 = vpop.f32.mrb[0].mxu0
        %v4838 = vadd.f32 0.0, %v4837
        %v4839 = vpop.f32.mrb[0].mxu0
        %v4840 = vadd.f32 0.0, %v4839
        %v4841 = vpop.f32.mrb[0].mxu0
        %v4842 = vadd.f32 0.0, %v4841
        %v4843 = vpop.f32.mrb[0].mxu0
        %v4844 = vadd.f32 0.0, %v4843
        %4845 = vmatprep.mubr.bf16.mxu0 0
        %4846 = vmatmul.mubr.bf16.gmra.mrb[0].mxu0 %v4781
        %v4847 = vpop.f32.mrb[0].mxu0
        %v4848 = vadd.f32 0.0, %v4847
        %v4849 = vpop.f32.mrb[0].mxu0
        %v4850 = vadd.f32 0.0, %v4849
        %v4851 = vpop.f32.mrb[0].mxu0
        %v4852 = vadd.f32 0.0, %v4851
        %v4853 = vpop.f32.mrb[0].mxu0
        %v4854 = vadd.f32 0.0, %v4853
        %4855 = vdwg.mxu0
        %4856 = vmatprep.subr.bf16.mxu0 0
        %4857 = vmatpush1.bf16.msra.mxu0 %v4760
        %4858 = vmatprep.subr.bf16.mxu0 0
        %4859 = vmatpush1.bf16.msra.mxu0 %v4763
        %4860 = vmatprep.subr.bf16.mxu0 0
        %4861 = vmatpush1.bf16.msra.mxu0 0
        %4862 = vmatprep.subr.bf16.mxu0 0
        %4863 = vmatpush1.bf16.msra.mxu0 0
        %4864 = vmatprep.subr.bf16.mxu0 0
        %4865 = vmatpush1.bf16.msra.mxu0 0
        %4866 = vmatprep.subr.bf16.mxu0 0
        %4867 = vmatpush1.bf16.msra.mxu0 0
        %4868 = vmatprep.subr.bf16.mxu0 0
        %4869 = vmatpush1.bf16.msra.mxu0 0
        %4870 = vmatprep.subr.bf16.mxu0 0
        %4871 = vmatpush1.bf16.msra.mxu0 0
        %4872 = vmatprep.subr.bf16.mxu0 0
        %4873 = vmatpush1.bf16.msra.mxu0 0
        %4874 = vmatprep.subr.bf16.mxu0 0
        %4875 = vmatpush1.bf16.msra.mxu0 0
        %4876 = vmatprep.subr.bf16.mxu0 0
        %4877 = vmatpush1.bf16.msra.mxu0 0
        %4878 = vmatprep.subr.bf16.mxu0 0
        %4879 = vmatpush1.bf16.msra.mxu0 0
        %4880 = vmatprep.subr.bf16.mxu0 0
        %4881 = vmatpush1.bf16.msra.mxu0 0
        %4882 = vmatprep.subr.bf16.mxu0 0
        %4883 = vmatpush1.bf16.msra.mxu0 0
        %4884 = vmatprep.subr.bf16.mxu0 0
        %4885 = vmatpush1.bf16.msra.mxu0 0
        %4886 = vmatprep.subr.bf16.mxu0 0
        %4887 = vmatpush1.bf16.msra.mxu0 0
        %4888 = vmatprep.mubr.bf16.mxu0 0
        %4889 = vmatmul.mubr.bf16.gmra.mrb[0].mxu0 %v4772
        %v4890 = vpop.f32.mrb[0].mxu0
        %v4891 = vadd.f32 0.0, %v4890
        %v4892 = vpop.f32.mrb[0].mxu0
        %v4893 = vpop.f32.mrb[0].mxu0
        %v4894 = vadd.f32 0.0, %v4893
        %v4895 = vpop.f32.mrb[0].mxu0
        %4896 = vmatprep.mubr.bf16.mxu0 0
        %4897 = vmatmul.mubr.bf16.gmra.mrb[0].mxu0 %v4775
        %v4898 = vpop.f32.mrb[0].mxu0
        %v4899 = vadd.f32 0.0, %v4898
        %v4900 = vpop.f32.mrb[0].mxu0
        %v4901 = vpop.f32.mrb[0].mxu0
        %v4902 = vadd.f32 0.0, %v4901
        %v4903 = vpop.f32.mrb[0].mxu0
        %4904 = vmatprep.mubr.bf16.mxu0 0
        %4905 = vmatmul.mubr.bf16.gmra.mrb[0].mxu0 %v4778
        %v4906 = vpop.f32.mrb[0].mxu0
        %v4907 = vadd.f32 0.0, %v4906
        %v4908 = vpop.f32.mrb[0].mxu0
        %v4909 = vpop.f32.mrb[0].mxu0
        %v4910 = vadd.f32 0.0, %v4909
        %v4911 = vpop.f32.mrb[0].mxu0
        %4912 = vmatprep.mubr.bf16.mxu0 0
        %4913 = vmatmul.mubr.bf16.gmra.mrb[0].mxu0 %v4781
        %v4914 = vpop.f32.mrb[0].mxu0
        %v4915 = vadd.f32 0.0, %v4914
        %v4916 = vpop.f32.mrb[0].mxu0
        %v4917 = vpop.f32.mrb[0].mxu0
        %v4918 = vadd.f32 0.0, %v4917
        %v4919 = vpop.f32.mrb[0].mxu0
        %4920 = vdwg.mxu0
        %v4937 = vunpack.c.l.b16 %v4710
        %v4938 = vunpack.c.h.b16 %v4710
        %v4939 = vunpack.c.l.b16 %v4711
        %v4940 = vunpack.c.l.b16 %v4712
        %v4941 = vunpack.c.h.b16 %v4712
        %v4942 = vunpack.c.l.b16 %v4713
        %v4943 = vunpack.c.l.b16 %v4714
        %v4944 = vunpack.c.h.b16 %v4714
        %v4945 = vunpack.c.l.b16 %v4715
        %v4946 = vunpack.c.l.b16 %v4716
        %v4947 = vunpack.c.h.b16 %v4716
        %v4948 = vunpack.c.l.b16 %v4717
        %v4949 = vunpack.c.l.b16 %v4718
        %v4950 = vunpack.c.h.b16 %v4718
        %v4951 = vunpack.c.l.b16 %v4719
        %v4952 = vunpack.c.l.b16 %v4720
        %v4953 = vunpack.c.h.b16 %v4720
        %v4954 = vunpack.c.l.b16 %v4721
        %v4955 = vunpack.c.l.b16 %v4722
        %v4956 = vunpack.c.h.b16 %v4722
        %v4957 = vunpack.c.l.b16 %v4723
        %v4958 = vunpack.c.l.b16 %v4724
        %v4959 = vunpack.c.h.b16 %v4724
        %v4960 = vunpack.c.l.b16 %v4725
        %v4961 = vpack.c.b16 %v4940, %v4937
        %v4962 = vpack.c.b16 %v4941, %v4938
        %v4963 = vpack.c.b16 %v4942, %v4939
        %v4964 = vpack.c.b16 %v4946, %v4943
        %v4965 = vpack.c.b16 %v4947, %v4944
        %v4966 = vpack.c.b16 %v4948, %v4945
        %v4967 = vpack.c.b16 %v4952, %v4949
        %v4968 = vpack.c.b16 %v4953, %v4950
        %v4969 = vpack.c.b16 %v4954, %v4951
        %v4970 = vpack.c.b16 %v4958, %v4955
        %v4971 = vpack.c.b16 %v4959, %v4956
        %v4972 = vpack.c.b16 %v4960, %v4957
        %v4986 = vsel %vm1645, %v4706, 0
        %v4989 = vsel %vm1645, %v4707, 0
        %v4992 = vsel %vm1645, %v4708, 0
        %v4995 = vsel %vm1645, %v4709, 0
        %4997 = vmatprep.subr.bf16.mxu0 %v4962
        %4998 = vmatpush1.bf16.msra.mxu0 %v4961
        %4999 = vmatprep.subr.bf16.mxu0 %v4965
        %5000 = vmatpush1.bf16.msra.mxu0 %v4964
        %5001 = vmatprep.subr.bf16.mxu0 %v4968
        %5002 = vmatpush1.bf16.msra.mxu0 %v4967
        %5003 = vmatprep.subr.bf16.mxu0 %v4971
        %5004 = vmatpush1.bf16.msra.mxu0 %v4970
        %5005 = vmatprep.subr.bf16.mxu0 0
        %5006 = vmatpush1.bf16.msra.mxu0 0
        %5007 = vmatprep.subr.bf16.mxu0 0
        %5008 = vmatpush1.bf16.msra.mxu0 0
        %5009 = vmatprep.subr.bf16.mxu0 0
        %5010 = vmatpush1.bf16.msra.mxu0 0
        %5011 = vmatprep.subr.bf16.mxu0 0
        %5012 = vmatpush1.bf16.msra.mxu0 0
        %5013 = vmatprep.subr.bf16.mxu0 0
        %5014 = vmatpush1.bf16.msra.mxu0 0
        %5015 = vmatprep.subr.bf16.mxu0 0
        %5016 = vmatpush1.bf16.msra.mxu0 0
        %5017 = vmatprep.subr.bf16.mxu0 0
        %5018 = vmatpush1.bf16.msra.mxu0 0
        %5019 = vmatprep.subr.bf16.mxu0 0
        %5020 = vmatpush1.bf16.msra.mxu0 0
        %5021 = vmatprep.subr.bf16.mxu0 0
        %5022 = vmatpush1.bf16.msra.mxu0 0
        %5023 = vmatprep.subr.bf16.mxu0 0
        %5024 = vmatpush1.bf16.msra.mxu0 0
        %5025 = vmatprep.subr.bf16.mxu0 0
        %5026 = vmatpush1.bf16.msra.mxu0 0
        %5027 = vmatprep.subr.bf16.mxu0 0
        %5028 = vmatpush1.bf16.msra.mxu0 0
        %5029 = vmatprep.mubr.bf16.mxu0 0
        %5030 = vmatmul.mubr.bf16.gmra.mrb[0].mxu0 %v4986
        %v5031 = vpop.f32.mrb[0].mxu0
        %v5032 = vadd.f32 %v4818, %v5031
        %v5033 = vpop.f32.mrb[0].mxu0
        %v5034 = vadd.f32 %v4820, %v5033
        %v5035 = vpop.f32.mrb[0].mxu0
        %v5036 = vadd.f32 %v4822, %v5035
        %v5037 = vpop.f32.mrb[0].mxu0
        %v5038 = vadd.f32 %v4824, %v5037
        %5039 = vmatprep.mubr.bf16.mxu0 0
        %5040 = vmatmul.mubr.bf16.gmra.mrb[0].mxu0 %v4989
        %v5041 = vpop.f32.mrb[0].mxu0
        %v5042 = vadd.f32 %v4828, %v5041
        %v5043 = vpop.f32.mrb[0].mxu0
        %v5044 = vadd.f32 %v4830, %v5043
        %v5045 = vpop.f32.mrb[0].mxu0
        %v5046 = vadd.f32 %v4832, %v5045
        %v5047 = vpop.f32.mrb[0].mxu0
        %v5048 = vadd.f32 %v4834, %v5047
        %5049 = vmatprep.mubr.bf16.mxu0 0
        %5050 = vmatmul.mubr.bf16.gmra.mrb[0].mxu0 %v4992
        %v5051 = vpop.f32.mrb[0].mxu0
        %v5052 = vadd.f32 %v4838, %v5051
        %v5053 = vpop.f32.mrb[0].mxu0
        %v5054 = vadd.f32 %v4840, %v5053
        %v5055 = vpop.f32.mrb[0].mxu0
        %v5056 = vadd.f32 %v4842, %v5055
        %v5057 = vpop.f32.mrb[0].mxu0
        %v5058 = vadd.f32 %v4844, %v5057
        %5059 = vmatprep.mubr.bf16.mxu0 0
        %5060 = vmatmul.mubr.bf16.gmra.mrb[0].mxu0 %v4995
        %v5061 = vpop.f32.mrb[0].mxu0
        %v5062 = vadd.f32 %v4848, %v5061
        %v5063 = vpop.f32.mrb[0].mxu0
        %v5064 = vadd.f32 %v4850, %v5063
        %v5065 = vpop.f32.mrb[0].mxu0
        %v5066 = vadd.f32 %v4852, %v5065
        %v5067 = vpop.f32.mrb[0].mxu0
        %v5068 = vadd.f32 %v4854, %v5067
        %5069 = vdwg.mxu0
        %5070 = vmatprep.subr.bf16.mxu0 0
        %5071 = vmatpush1.bf16.msra.mxu0 %v4963
        %5072 = vmatprep.subr.bf16.mxu0 0
        %5073 = vmatpush1.bf16.msra.mxu0 %v4966
        %5074 = vmatprep.subr.bf16.mxu0 0
        %5075 = vmatpush1.bf16.msra.mxu0 %v4969
        %5076 = vmatprep.subr.bf16.mxu0 0
        %5077 = vmatpush1.bf16.msra.mxu0 %v4972
        %5078 = vmatprep.subr.bf16.mxu0 0
        %5079 = vmatpush1.bf16.msra.mxu0 0
        %5080 = vmatprep.subr.bf16.mxu0 0
        %5081 = vmatpush1.bf16.msra.mxu0 0
        %5082 = vmatprep.subr.bf16.mxu0 0
        %5083 = vmatpush1.bf16.msra.mxu0 0
        %5084 = vmatprep.subr.bf16.mxu0 0
        %5085 = vmatpush1.bf16.msra.mxu0 0
        %5086 = vmatprep.subr.bf16.mxu0 0
        %5087 = vmatpush1.bf16.msra.mxu0 0
        %5088 = vmatprep.subr.bf16.mxu0 0
        %5089 = vmatpush1.bf16.msra.mxu0 0
        %5090 = vmatprep.subr.bf16.mxu0 0
        %5091 = vmatpush1.bf16.msra.mxu0 0
        %5092 = vmatprep.subr.bf16.mxu0 0
        %5093 = vmatpush1.bf16.msra.mxu0 0
        %5094 = vmatprep.subr.bf16.mxu0 0
        %5095 = vmatpush1.bf16.msra.mxu0 0
        %5096 = vmatprep.subr.bf16.mxu0 0
        %5097 = vmatpush1.bf16.msra.mxu0 0
        %5098 = vmatprep.subr.bf16.mxu0 0
        %5099 = vmatpush1.bf16.msra.mxu0 0
        %5100 = vmatprep.subr.bf16.mxu0 0
        %5101 = vmatpush1.bf16.msra.mxu0 0
        %5102 = vmatprep.mubr.bf16.mxu0 0
        %5103 = vmatmul.mubr.bf16.gmra.mrb[0].mxu0 %v4986
        %v5104 = vpop.f32.mrb[0].mxu0
        %v5105 = vadd.f32 %v4891, %v5104
        %v5106 = vpop.f32.mrb[0].mxu0
        %v5107 = vpop.f32.mrb[0].mxu0
        %v5108 = vadd.f32 %v4894, %v5107
        %v5109 = vpop.f32.mrb[0].mxu0
        %5110 = vmatprep.mubr.bf16.mxu0 0
        %5111 = vmatmul.mubr.bf16.gmra.mrb[0].mxu0 %v4989
        %v5112 = vpop.f32.mrb[0].mxu0
        %v5113 = vadd.f32 %v4899, %v5112
        %v5114 = vpop.f32.mrb[0].mxu0
        %v5115 = vpop.f32.mrb[0].mxu0
        %v5116 = vadd.f32 %v4902, %v5115
        %v5117 = vpop.f32.mrb[0].mxu0
        %5118 = vmatprep.mubr.bf16.mxu0 0
        %5119 = vmatmul.mubr.bf16.gmra.mrb[0].mxu0 %v4992
        %v5120 = vpop.f32.mrb[0].mxu0
        %v5121 = vadd.f32 %v4907, %v5120
        %v5122 = vpop.f32.mrb[0].mxu0
        %v5123 = vpop.f32.mrb[0].mxu0
        %v5124 = vadd.f32 %v4910, %v5123
        %v5125 = vpop.f32.mrb[0].mxu0
        %5126 = vmatprep.mubr.bf16.mxu0 0
        %5127 = vmatmul.mubr.bf16.gmra.mrb[0].mxu0 %v4995
        %v5128 = vpop.f32.mrb[0].mxu0
        %v5129 = vadd.f32 %v4915, %v5128
        %v5130 = vpop.f32.mrb[0].mxu0
        %v5131 = vpop.f32.mrb[0].mxu0
        %v5132 = vadd.f32 %v4918, %v5131
        %v5133 = vpop.f32.mrb[0].mxu0
        %5134 = vdwg.mxu0
        %v5135 = vpack.c.bf16 %v866, %v865
        %v5136 = vpack.c.bf16 %v868, %v867
        %v5137 = vpack.c.bf16 %v870, %v869
        %v5138 = vpack.c.bf16 %v872, %v871
        %v5139 = vld [vmem:[%s13] sm:$0xff]
        %v5140 = vld [vmem:[%s13 + $0x8] sm:$0xf]
        %v5141 = vld [vmem:[%s13 + $0xc] sm:$0xff]
        %v5142 = vld [vmem:[%s13 + $0x14] sm:$0xf]
        %v5143 = vld [vmem:[%s13 + $0x18] sm:$0xff]
        %v5144 = vld [vmem:[%s13 + $0x20] sm:$0xf]
        %v5145 = vld [vmem:[%s13 + $0x24] sm:$0xff]
        %v5146 = vld [vmem:[%s13 + $0x2c] sm:$0xf]
        %v5147 = vld [vmem:[%s13 + $0x30] sm:$0xff]
        %v5148 = vld [vmem:[%s13 + $0x38] sm:$0xf]
        %v5149 = vld [vmem:[%s13 + $0x3c] sm:$0xff]
        %v5150 = vld [vmem:[%s13 + $0x44] sm:$0xf]
        %v5151 = vld [vmem:[%s13 + $0x48] sm:$0xff]
        %v5152 = vld [vmem:[%s13 + $0x50] sm:$0xf]
        %v5153 = vld [vmem:[%s13 + $0x54] sm:$0xff]
        %v5154 = vld [vmem:[%s13 + $0x5c] sm:$0xf]
        %v5155 = vld [vmem:[%s13 + $0x60] sm:$0xff]
        %v5156 = vld [vmem:[%s13 + $0x68] sm:$0xf]
        %v5157 = vld [vmem:[%s13 + $0x6c] sm:$0xff]
        %v5158 = vld [vmem:[%s13 + $0x74] sm:$0xf]
        %v5159 = vld [vmem:[%s13 + $0x78] sm:$0xff]
        %v5160 = vld [vmem:[%s13 + $0x80] sm:$0xf]
        %v5161 = vld [vmem:[%s13 + $0x84] sm:$0xff]
        %v5162 = vld [vmem:[%s13 + $0x8c] sm:$0xf]
        %v5187 = vunpack.c.l.b16 %v5139
        %v5188 = vunpack.c.h.b16 %v5139
        %v5189 = vunpack.c.l.b16 %v5140
        %v5190 = vunpack.c.l.b16 %v5141
        %v5191 = vunpack.c.h.b16 %v5141
        %v5192 = vunpack.c.l.b16 %v5142
        %v5193 = vunpack.c.l.b16 %v5143
        %v5194 = vunpack.c.h.b16 %v5143
        %v5195 = vunpack.c.l.b16 %v5144
        %v5196 = vunpack.c.l.b16 %v5145
        %v5197 = vunpack.c.h.b16 %v5145
        %v5198 = vunpack.c.l.b16 %v5146
        %v5199 = vunpack.c.l.b16 %v5147
        %v5200 = vunpack.c.h.b16 %v5147
        %v5201 = vunpack.c.l.b16 %v5148
        %v5202 = vunpack.c.l.b16 %v5149
        %v5203 = vunpack.c.h.b16 %v5149
        %v5204 = vunpack.c.l.b16 %v5150
        %v5205 = vunpack.c.l.b16 %v5151
        %v5206 = vunpack.c.h.b16 %v5151
        %v5207 = vunpack.c.l.b16 %v5152
        %v5208 = vunpack.c.l.b16 %v5153
        %v5209 = vunpack.c.h.b16 %v5153
        %v5210 = vunpack.c.l.b16 %v5154
        %v5211 = vunpack.c.l.b16 %v5155
        %v5212 = vunpack.c.h.b16 %v5155
        %v5213 = vunpack.c.l.b16 %v5156
        %v5214 = vunpack.c.l.b16 %v5157
        %v5215 = vunpack.c.h.b16 %v5157
        %v5216 = vunpack.c.l.b16 %v5158
        %v5217 = vunpack.c.l.b16 %v5159
        %v5218 = vunpack.c.h.b16 %v5159
        %v5219 = vunpack.c.l.b16 %v5160
        %v5220 = vunpack.c.l.b16 %v5161
        %v5221 = vunpack.c.h.b16 %v5161
        %v5222 = vunpack.c.l.b16 %v5162
        %v5223 = vpack.c.b16 %v5190, %v5187
        %v5224 = vpack.c.b16 %v5191, %v5188
        %v5225 = vpack.c.b16 %v5192, %v5189
        %v5226 = vpack.c.b16 %v5196, %v5193
        %v5227 = vpack.c.b16 %v5197, %v5194
        %v5228 = vpack.c.b16 %v5198, %v5195
        %v5229 = vpack.c.b16 %v5202, %v5199
        %v5230 = vpack.c.b16 %v5203, %v5200
        %v5231 = vpack.c.b16 %v5204, %v5201
        %v5232 = vpack.c.b16 %v5208, %v5205
        %v5233 = vpack.c.b16 %v5209, %v5206
        %v5234 = vpack.c.b16 %v5210, %v5207
        %v5235 = vpack.c.b16 %v5214, %v5211
        %v5236 = vpack.c.b16 %v5215, %v5212
        %v5237 = vpack.c.b16 %v5216, %v5213
        %v5238 = vpack.c.b16 %v5220, %v5217
        %v5239 = vpack.c.b16 %v5221, %v5218
        %v5240 = vpack.c.b16 %v5222, %v5219
        %v5260 = vsel %vm889, %v5135, 0
        %v5263 = vsel %vm889, %v5136, 0
        %v5266 = vsel %vm889, %v5137, 0
        %v5269 = vsel %vm889, %v5138, 0
        %5271 = vmatprep.subr.bf16.mxu0 %v5224
        %5272 = vmatpush1.bf16.msra.mxu0 %v5223
        %5273 = vmatprep.subr.bf16.mxu0 %v5227
        %5274 = vmatpush1.bf16.msra.mxu0 %v5226
        %5275 = vmatprep.subr.bf16.mxu0 %v5230
        %5276 = vmatpush1.bf16.msra.mxu0 %v5229
        %5277 = vmatprep.subr.bf16.mxu0 %v5233
        %5278 = vmatpush1.bf16.msra.mxu0 %v5232
        %5279 = vmatprep.subr.bf16.mxu0 %v5236
        %5280 = vmatpush1.bf16.msra.mxu0 %v5235
        %5281 = vmatprep.subr.bf16.mxu0 %v5239
        %5282 = vmatpush1.bf16.msra.mxu0 %v5238
        %5283 = vmatprep.subr.bf16.mxu0 0
        %5284 = vmatpush1.bf16.msra.mxu0 0
        %5285 = vmatprep.subr.bf16.mxu0 0
        %5286 = vmatpush1.bf16.msra.mxu0 0
        %5287 = vmatprep.subr.bf16.mxu0 0
        %5288 = vmatpush1.bf16.msra.mxu0 0
        %5289 = vmatprep.subr.bf16.mxu0 0
        %5290 = vmatpush1.bf16.msra.mxu0 0
        %5291 = vmatprep.subr.bf16.mxu0 0
        %5292 = vmatpush1.bf16.msra.mxu0 0
        %5293 = vmatprep.subr.bf16.mxu0 0
        %5294 = vmatpush1.bf16.msra.mxu0 0
        %5295 = vmatprep.subr.bf16.mxu0 0
        %5296 = vmatpush1.bf16.msra.mxu0 0
        %5297 = vmatprep.subr.bf16.mxu0 0
        %5298 = vmatpush1.bf16.msra.mxu0 0
        %5299 = vmatprep.subr.bf16.mxu0 0
        %5300 = vmatpush1.bf16.msra.mxu0 0
        %5301 = vmatprep.subr.bf16.mxu0 0
        %5302 = vmatpush1.bf16.msra.mxu0 0
        %5303 = vmatprep.mubr.bf16.mxu0 0
        %5304 = vmatmul.mubr.bf16.gmra.mrb[0].mxu0 %v5260
        %v5305 = vpop.f32.mrb[0].mxu0
        %v5306 = vadd.f32 0.0, %v5305
        %v5307 = vpop.f32.mrb[0].mxu0
        %v5308 = vadd.f32 0.0, %v5307
        %v5309 = vpop.f32.mrb[0].mxu0
        %v5310 = vadd.f32 0.0, %v5309
        %v5311 = vpop.f32.mrb[0].mxu0
        %v5312 = vadd.f32 0.0, %v5311
        %5313 = vmatprep.mubr.bf16.mxu0 0
        %5314 = vmatmul.mubr.bf16.gmra.mrb[0].mxu0 %v5263
        %v5315 = vpop.f32.mrb[0].mxu0
        %v5316 = vadd.f32 0.0, %v5315
        %v5317 = vpop.f32.mrb[0].mxu0
        %v5318 = vadd.f32 0.0, %v5317
        %v5319 = vpop.f32.mrb[0].mxu0
        %v5320 = vadd.f32 0.0, %v5319
        %v5321 = vpop.f32.mrb[0].mxu0
        %v5322 = vadd.f32 0.0, %v5321
        %5323 = vmatprep.mubr.bf16.mxu0 0
        %5324 = vmatmul.mubr.bf16.gmra.mrb[0].mxu0 %v5266
        %v5325 = vpop.f32.mrb[0].mxu0
        %v5326 = vadd.f32 0.0, %v5325
        %v5327 = vpop.f32.mrb[0].mxu0
        %v5328 = vadd.f32 0.0, %v5327
        %v5329 = vpop.f32.mrb[0].mxu0
        %v5330 = vadd.f32 0.0, %v5329
        %v5331 = vpop.f32.mrb[0].mxu0
        %v5332 = vadd.f32 0.0, %v5331
        %5333 = vmatprep.mubr.bf16.mxu0 0
        %5334 = vmatmul.mubr.bf16.gmra.mrb[0].mxu0 %v5269
        %v5335 = vpop.f32.mrb[0].mxu0
        %v5336 = vadd.f32 0.0, %v5335
        %v5337 = vpop.f32.mrb[0].mxu0
        %v5338 = vadd.f32 0.0, %v5337
        %v5339 = vpop.f32.mrb[0].mxu0
        %v5340 = vadd.f32 0.0, %v5339
        %v5341 = vpop.f32.mrb[0].mxu0
        %v5342 = vadd.f32 0.0, %v5341
        %5343 = vdwg.mxu0
        %5344 = vmatprep.subr.bf16.mxu0 0
        %5345 = vmatpush1.bf16.msra.mxu0 %v5225
        %5346 = vmatprep.subr.bf16.mxu0 0
        %5347 = vmatpush1.bf16.msra.mxu0 %v5228
        %5348 = vmatprep.subr.bf16.mxu0 0
        %5349 = vmatpush1.bf16.msra.mxu0 %v5231
        %5350 = vmatprep.subr.bf16.mxu0 0
        %5351 = vmatpush1.bf16.msra.mxu0 %v5234
        %5352 = vmatprep.subr.bf16.mxu0 0
        %5353 = vmatpush1.bf16.msra.mxu0 %v5237
        %5354 = vmatprep.subr.bf16.mxu0 0
        %5355 = vmatpush1.bf16.msra.mxu0 %v5240
        %5356 = vmatprep.subr.bf16.mxu0 0
        %5357 = vmatpush1.bf16.msra.mxu0 0
        %5358 = vmatprep.subr.bf16.mxu0 0
        %5359 = vmatpush1.bf16.msra.mxu0 0
        %5360 = vmatprep.subr.bf16.mxu0 0
        %5361 = vmatpush1.bf16.msra.mxu0 0
        %5362 = vmatprep.subr.bf16.mxu0 0
        %5363 = vmatpush1.bf16.msra.mxu0 0
        %5364 = vmatprep.subr.bf16.mxu0 0
        %5365 = vmatpush1.bf16.msra.mxu0 0
        %5366 = vmatprep.subr.bf16.mxu0 0
        %5367 = vmatpush1.bf16.msra.mxu0 0
        %5368 = vmatprep.subr.bf16.mxu0 0
        %5369 = vmatpush1.bf16.msra.mxu0 0
        %5370 = vmatprep.subr.bf16.mxu0 0
        %5371 = vmatpush1.bf16.msra.mxu0 0
        %5372 = vmatprep.subr.bf16.mxu0 0
        %5373 = vmatpush1.bf16.msra.mxu0 0
        %5374 = vmatprep.subr.bf16.mxu0 0
        %5375 = vmatpush1.bf16.msra.mxu0 0
        %5376 = vmatprep.mubr.bf16.mxu0 0
        %5377 = vmatmul.mubr.bf16.gmra.mrb[0].mxu0 %v5260
        %v5378 = vpop.f32.mrb[0].mxu0
        %v5379 = vadd.f32 0.0, %v5378
        %v5380 = vpop.f32.mrb[0].mxu0
        %v5381 = vpop.f32.mrb[0].mxu0
        %v5382 = vadd.f32 0.0, %v5381
        %v5383 = vpop.f32.mrb[0].mxu0
        %5384 = vmatprep.mubr.bf16.mxu0 0
        %5385 = vmatmul.mubr.bf16.gmra.mrb[0].mxu0 %v5263
        %v5386 = vpop.f32.mrb[0].mxu0
        %v5387 = vadd.f32 0.0, %v5386
        %v5388 = vpop.f32.mrb[0].mxu0
        %v5389 = vpop.f32.mrb[0].mxu0
        %v5390 = vadd.f32 0.0, %v5389
        %v5391 = vpop.f32.mrb[0].mxu0
        %5392 = vmatprep.mubr.bf16.mxu0 0
        %5393 = vmatmul.mubr.bf16.gmra.mrb[0].mxu0 %v5266
        %v5394 = vpop.f32.mrb[0].mxu0
        %v5395 = vadd.f32 0.0, %v5394
        %v5396 = vpop.f32.mrb[0].mxu0
        %v5397 = vpop.f32.mrb[0].mxu0
        %v5398 = vadd.f32 0.0, %v5397
        %v5399 = vpop.f32.mrb[0].mxu0
        %5400 = vmatprep.mubr.bf16.mxu0 0
        %5401 = vmatmul.mubr.bf16.gmra.mrb[0].mxu0 %v5269
        %v5402 = vpop.f32.mrb[0].mxu0
        %v5403 = vadd.f32 0.0, %v5402
        %v5404 = vpop.f32.mrb[0].mxu0
        %v5405 = vpop.f32.mrb[0].mxu0
        %v5406 = vadd.f32 0.0, %v5405
        %v5407 = vpop.f32.mrb[0].mxu0
        %5408 = vdwg.mxu0
        %v5409 = vadd.f32 %v5032, %v5306
        %v5410 = vadd.f32 %v5034, %v5308
        %v5411 = vadd.f32 %v5105, %v5379
        %v5412 = vadd.f32 %v5036, %v5310
        %v5413 = vadd.f32 %v5038, %v5312
        %v5414 = vadd.f32 %v5108, %v5382
        %v5415 = vadd.f32 %v5042, %v5316
        %v5416 = vadd.f32 %v5044, %v5318
        %v5417 = vadd.f32 %v5113, %v5387
        %v5418 = vadd.f32 %v5046, %v5320
        %v5419 = vadd.f32 %v5048, %v5322
        %v5420 = vadd.f32 %v5116, %v5390
        %v5421 = vadd.f32 %v5052, %v5326
        %v5422 = vadd.f32 %v5054, %v5328
        %v5423 = vadd.f32 %v5121, %v5395
        %v5424 = vadd.f32 %v5056, %v5330
        %v5425 = vadd.f32 %v5058, %v5332
        %v5426 = vadd.f32 %v5124, %v5398
        %v5427 = vadd.f32 %v5062, %v5336
        %v5428 = vadd.f32 %v5064, %v5338
        %v5429 = vadd.f32 %v5129, %v5403
        %v5430 = vadd.f32 %v5066, %v5340
        %v5431 = vadd.f32 %v5068, %v5342
        %v5432 = vadd.f32 %v5132, %v5406
        %v5433 = vld [vmem:[%s14] sm:$0x7]
        %v5435 = vlaneseq
        %v5436 = vshrl.u32 %v5435, 7
        %v5437 = vsub.s32 0, %v5436
        %v5438 = vrot.slane %v5433, %v5437
        %v5439 = vlaneseq
        %v5440 = vshrl.u32 %v5439, 7
        %v5441 = vsub.s32 1, %v5440
        %v5442 = vrot.slane %v5433, %v5441
        %v5443 = vlaneseq
        %v5444 = vshrl.u32 %v5443, 7
        %v5445 = vsub.s32 2, %v5444
        %v5446 = vrot.slane %v5433, %v5445
        %v5450 = vadd.f32 %v5409, %v5438
        %v5451 = vadd.f32 %v5410, %v5442
        %v5452 = vadd.f32 %v5411, %v5446
        %v5453 = vadd.f32 %v5412, %v5438
        %v5454 = vadd.f32 %v5413, %v5442
        %v5455 = vadd.f32 %v5414, %v5446
        %v5456 = vadd.f32 %v5415, %v5438
        %v5457 = vadd.f32 %v5416, %v5442
        %v5458 = vadd.f32 %v5417, %v5446
        %v5459 = vadd.f32 %v5418, %v5438
        %v5460 = vadd.f32 %v5419, %v5442
        %v5461 = vadd.f32 %v5420, %v5446
        %v5462 = vadd.f32 %v5421, %v5438
        %v5463 = vadd.f32 %v5422, %v5442
        %v5464 = vadd.f32 %v5423, %v5446
        %v5465 = vadd.f32 %v5424, %v5438
        %v5466 = vadd.f32 %v5425, %v5442
        %v5467 = vadd.f32 %v5426, %v5446
        %v5468 = vadd.f32 %v5427, %v5438
        %v5469 = vadd.f32 %v5428, %v5442
        %v5470 = vadd.f32 %v5429, %v5446
        %v5471 = vadd.f32 %v5430, %v5438
        %v5472 = vadd.f32 %v5431, %v5442
        %v5473 = vadd.f32 %v5432, %v5446
        %v5474 = vld [vmem:[%s496] sm:$0xff]
        %v5475 = vld [vmem:[%s496 + $0x8] sm:$0xff]
        %v5476 = vld [vmem:[%s496 + $0x10] sm:$0xff]
        %v5477 = vld [vmem:[%s496 + $0x18] sm:$0xff]
        %v5478 = vld [vmem:[%s496 + $0x20] sm:$0xff]
        %v5479 = vld [vmem:[%s496 + $0x28] sm:$0xff]
        %v5480 = vld [vmem:[%s496 + $0x30] sm:$0xff]
        %v5481 = vld [vmem:[%s496 + $0x38] sm:$0xff]
        %v5482 = vld [vmem:[%s496 + $0x40] sm:$0xff]
        %v5483 = vld [vmem:[%s496 + $0x48] sm:$0xff]
        %v5484 = vld [vmem:[%s496 + $0x50] sm:$0xff]
        %v5485 = vld [vmem:[%s496 + $0x58] sm:$0xff]
        %v5486 = vld [vmem:[%s496 + $0x60] sm:$0xff]
        %v5487 = vld [vmem:[%s496 + $0x68] sm:$0xff]
        %v5488 = vld [vmem:[%s496 + $0x70] sm:$0xff]
        %v5489 = vld [vmem:[%s496 + $0x78] sm:$0xff]
        %v5490 = vld [vmem:[%s496 + $0x80] sm:$0xff]
        %v5491 = vld [vmem:[%s496 + $0x88] sm:$0xff]
        %v5492 = vld [vmem:[%s496 + $0x90] sm:$0xff]
        %v5493 = vld [vmem:[%s496 + $0x98] sm:$0xff]
        %v5494 = vld [vmem:[%s496 + $0xa0] sm:$0xff]
        %v5495 = vld [vmem:[%s496 + $0xa8] sm:$0xff]
        %v5496 = vld [vmem:[%s496 + $0xb0] sm:$0xff]
        %v5497 = vld [vmem:[%s496 + $0xb8] sm:$0xff]
        %v5498 = vmul.f32 %v5450, 0.24
        %v5499 = vmul.f32 %v5451, 0.24
        %v5500 = vmul.f32 %v5452, 0.24
        %v5501 = vmul.f32 %v5453, 0.24
        %v5502 = vmul.f32 %v5454, 0.24
        %v5503 = vmul.f32 %v5455, 0.24
        %v5504 = vmul.f32 %v5456, 0.24
        %v5505 = vmul.f32 %v5457, 0.24
        %v5506 = vmul.f32 %v5458, 0.24
        %v5507 = vmul.f32 %v5459, 0.24
        %v5508 = vmul.f32 %v5460, 0.24
        %v5509 = vmul.f32 %v5461, 0.24
        %v5510 = vmul.f32 %v5462, 0.24
        %v5511 = vmul.f32 %v5463, 0.24
        %v5512 = vmul.f32 %v5464, 0.24
        %v5513 = vmul.f32 %v5465, 0.24
        %v5514 = vmul.f32 %v5466, 0.24
        %v5515 = vmul.f32 %v5467, 0.24
        %v5516 = vmul.f32 %v5468, 0.24
        %v5517 = vmul.f32 %v5469, 0.24
        %v5518 = vmul.f32 %v5470, 0.24
        %v5519 = vmul.f32 %v5471, 0.24
        %v5520 = vmul.f32 %v5472, 0.24
        %v5521 = vmul.f32 %v5473, 0.24
        %v5522 = vadd.f32 %v5474, %v5498
        %v5523 = vadd.f32 %v5475, %v5499
        %v5524 = vadd.f32 %v5476, %v5500
        %v5525 = vadd.f32 %v5477, %v5501
        %v5526 = vadd.f32 %v5478, %v5502
        %v5527 = vadd.f32 %v5479, %v5503
        %v5528 = vadd.f32 %v5480, %v5504
        %v5529 = vadd.f32 %v5481, %v5505
        %v5530 = vadd.f32 %v5482, %v5506
        %v5531 = vadd.f32 %v5483, %v5507
        %v5532 = vadd.f32 %v5484, %v5508
        %v5533 = vadd.f32 %v5485, %v5509
        %v5534 = vadd.f32 %v5486, %v5510
        %v5535 = vadd.f32 %v5487, %v5511
        %v5536 = vadd.f32 %v5488, %v5512
        %v5537 = vadd.f32 %v5489, %v5513
        %v5538 = vadd.f32 %v5490, %v5514
        %v5539 = vadd.f32 %v5491, %v5515
        %v5540 = vadd.f32 %v5492, %v5516
        %v5541 = vadd.f32 %v5493, %v5517
        %v5542 = vadd.f32 %v5494, %v5518
        %v5543 = vadd.f32 %v5495, %v5519
        %v5544 = vadd.f32 %v5496, %v5520
        %v5545 = vadd.f32 %v5497, %v5521
        %v5546 = vmax.f32 %v5522, 0.0
        %v5547 = vmax.f32 %v5523, 0.0
        %v5548 = vmax.f32 %v5524, 0.0
        %v5549 = vmax.f32 %v5525, 0.0
        %v5550 = vmax.f32 %v5526, 0.0
        %v5551 = vmax.f32 %v5527, 0.0
        %v5552 = vmax.f32 %v5528, 0.0
        %v5553 = vmax.f32 %v5529, 0.0
        %v5554 = vmax.f32 %v5530, 0.0
        %v5555 = vmax.f32 %v5531, 0.0
        %v5556 = vmax.f32 %v5532, 0.0
        %v5557 = vmax.f32 %v5533, 0.0
        %v5558 = vmax.f32 %v5534, 0.0
        %v5559 = vmax.f32 %v5535, 0.0
        %v5560 = vmax.f32 %v5536, 0.0
        %v5561 = vmax.f32 %v5537, 0.0
        %v5562 = vmax.f32 %v5538, 0.0
        %v5563 = vmax.f32 %v5539, 0.0
        %v5564 = vmax.f32 %v5540, 0.0
        %v5565 = vmax.f32 %v5541, 0.0
        %v5566 = vmax.f32 %v5542, 0.0
        %v5567 = vmax.f32 %v5543, 0.0
        %v5568 = vmax.f32 %v5544, 0.0
        %v5569 = vmax.f32 %v5545, 0.0
        %5570 = vst [vmem:[%s490] sm:$0xff] %v5546
        %5571 = vst [vmem:[%s490 + $0x8] sm:$0xff] %v5547
        %5572 = vst [vmem:[%s490 + $0x10] sm:$0xff] %v5548
        %5573 = vst [vmem:[%s490 + $0x18] sm:$0xff] %v5549
        %5574 = vst [vmem:[%s490 + $0x20] sm:$0xff] %v5550
        %5575 = vst [vmem:[%s490 + $0x28] sm:$0xff] %v5551
        %5576 = vst [vmem:[%s490 + $0x30] sm:$0xff] %v5552
        %5577 = vst [vmem:[%s490 + $0x38] sm:$0xff] %v5553
        %5578 = vst [vmem:[%s490 + $0x40] sm:$0xff] %v5554
        %5579 = vst [vmem:[%s490 + $0x48] sm:$0xff] %v5555
        %5580 = vst [vmem:[%s490 + $0x50] sm:$0xff] %v5556
        %5581 = vst [vmem:[%s490 + $0x58] sm:$0xff] %v5557
        %5582 = vst [vmem:[%s490 + $0x60] sm:$0xff] %v5558
        %5583 = vst [vmem:[%s490 + $0x68] sm:$0xff] %v5559
        %5584 = vst [vmem:[%s490 + $0x70] sm:$0xff] %v5560
        %5585 = vst [vmem:[%s490 + $0x78] sm:$0xff] %v5561
        %5586 = vst [vmem:[%s490 + $0x80] sm:$0xff] %v5562
        %5587 = vst [vmem:[%s490 + $0x88] sm:$0xff] %v5563
        %5588 = vst [vmem:[%s490 + $0x90] sm:$0xff] %v5564
        %5589 = vst [vmem:[%s490 + $0x98] sm:$0xff] %v5565
        %5590 = vst [vmem:[%s490 + $0xa0] sm:$0xff] %v5566
        %5591 = vst [vmem:[%s490 + $0xa8] sm:$0xff] %v5567
        %5592 = vst [vmem:[%s490 + $0xb0] sm:$0xff] %v5568
        %5593 = vst [vmem:[%s490 + $0xb8] sm:$0xff] %v5569
        %s5594 = sand.u32 %s357, 1
        %s5595 = scalar_lea.sflag [#allocation5], %s5594
        %s5596 = sand.u32 %s357, 1
        %s5597 = smul.addr %s5596, 192
        %s5598 = scalar_lea.vmem [#allocation4], %s5597
        // Predicated region
        $region81: #{tpu_custom_call.1} parent=79 // pred_check
          %p5599 = pneg %p367
        $region82: #{tpu_custom_call.1} parent=79 // pred_check_branch
          %5601 = sbr.rel (%p5599) target = $region84
        $region83: #{tpu_custom_call.1} parent=79 // pred_region
          %s5602 = smul.u32 8, %s29
          %s5604 = ssub.s32 3072, 3072
          %5605 = vsyncadd %s5595, %s5604
          %s5606 = smul.addr %s5602, 3
          %s5607 = smul.addr %s5606, 128
          %s5608 = scalar_lea.hbm %s15, %s5607
          %s5609 = sshll.u32 %s5598, 4
          %s5610 = int_to_ptr.vmem [resolvable:$true] %s5609
          %5615 = dma.vmem_to_hbm [thread:$0]  %s5610, 3072, %s5608, %s5595, 384, 384, 24
        $region84: #{tpu_custom_call.1} parent=79 // pred_fallthru
          _
      $region80: #{tpu_custom_call.1} parent=5 // pred_fallthru
        _
      %p5616 = scmp.le.s32.totalorder 2, %s24
      // Predicated region
      $region85: #{tpu_custom_call.1} parent=5 // pred_check
        %p5617 = pneg %p5616
      $region86: #{tpu_custom_call.1} parent=5 // pred_check_branch
        %5619 = sbr.rel (%p5617) target = $region88
      $region87: #{tpu_custom_call.1} parent=5 // pred_region
        %s5620 = ssub.s32 %s24, 2
        // Predicated region
        $region89: #{tpu_custom_call.1} parent=87 // pred_check
          %p5621 = pneg %p373
        $region90: #{tpu_custom_call.1} parent=87 // pred_check_branch
          %5623 = sbr.rel (%p5621) target = $region92
        $region91: #{tpu_custom_call.1} parent=87 // pred_region
          %s5624 = sand.u32 %s358, 1
          %s5625 = scalar_lea.sflag [#allocation5], %s5624
          %s5626 = sand.u32 %s358, 1
          %s5627 = smul.addr %s5626, 192
          %s5628 = scalar_lea.vmem [#allocation4], %s5627
          %5629 = dma.done %s5625, 3072
        $region92: #{tpu_custom_call.1} parent=87 // pred_fallthru
          _
      $region88: #{tpu_custom_call.1} parent=5 // pred_fallthru
        _
    $region6: #{tpu_custom_call.1} parent=1 // loop_footer
      %s28 = sadd.s32 1, %s24
    $region7: #{tpu_custom_call.1} parent=1 // loop_footer_branch
      %23 = sbr.rel target = $region3
    $region8: #{tpu_custom_call.1} parent=1 // loop_exit
      _
    %5630 = vsyncpa [#allocation5], 1
    %s5631 = scalar_lea.sflag [#allocation5], 1
    %5632 = vsyncpa %s5631, 1

</llo_original>
